<compile_context>
chip_gen: v5e
topology: v5e:2x2
jax: 0.10.0
libtpu: 0.0.40
codegen_flags: <defaults>
</compile_context>

<pallas_src>
import functools

import numpy as np
import jax
import jax.numpy as jnp
from jax.experimental import pallas as pl
from jax.experimental.pallas import tpu as pltpu


def _round_up(x, m):
    return (x + m - 1) // m * m


def _stft_loss_kernel(frames_ref, basis_ref, num_out, den_out, log_out,
                      num_acc, den_acc, log_acc, *, tm, k_pad, f_pad, eps):
    """One frame-tile of the STFT-loss partial sums.

    frames_ref : (2, tm, k_pad) f32   [0]=predicted frames, [1]=target frames
    basis_ref  : (k_pad, 2*f_pad) f32 lanes [:f_pad]=win*cos, [f_pad:]=-win*sin
    *_out      : (1, tm, f_pad) f32   per-core output blocks (written at last step)
    *_acc      : (tm, f_pad) f32      VMEM scratch accumulators (single-buffered)
    """
    i = pl.program_id(1)

    @pl.when(i == 0)
    def _():
        num_acc[...] = jnp.zeros_like(num_acc)
        den_acc[...] = jnp.zeros_like(den_acc)
        log_acc[...] = jnp.zeros_like(log_acc)

    # One fused MXU matmul for BOTH signals: merging the leading (2, tm) dims
    # is a free, tile-order-preserving reshape.
    fr = frames_ref[...].reshape(2 * tm, k_pad)
    r = jnp.dot(fr, basis_ref[...], preferred_element_type=jnp.float32)
    rp = r[:tm]        # predicted: [real | imag]
    rt = r[tm:]        # target:    [real | imag]

    sq_p = rp[:, :f_pad] * rp[:, :f_pad] + rp[:, f_pad:] * rp[:, f_pad:]
    sq_t = rt[:, :f_pad] * rt[:, :f_pad] + rt[:, f_pad:] * rt[:, f_pad:]

    # (|T|-|P|)^2 = |T|^2 + |P|^2 - 2*sqrt(|T|^2*|P|^2): one EUP sqrt, not two.
    cross = jnp.sqrt(sq_p * sq_t)
    num_acc[...] += jnp.maximum(sq_t + sq_p - 2.0 * cross, 0.0)
    den_acc[...] += sq_t

    # |log|P| - log|T|| = 0.5*|log(|P|^2 / |T|^2)|: one EUP log, not two.
    # eps only guards exact zeros (padding rows / padded freq lanes) where both
    # operands clamp identically -> ratio 1 -> contribution exactly 0.
    sq_p_c = jnp.maximum(sq_p, eps)
    sq_t_c = jnp.maximum(sq_t, eps)
    log_acc[...] += 0.5 * jnp.abs(jnp.log(sq_p_c / sq_t_c))

    @pl.when(i == pl.num_programs(1) - 1)
    def _():
        num_out[0] = num_acc[...]
        den_out[0] = den_acc[...]
        log_out[0] = log_acc[...]


def _frame_pair(predicts, targets, n_fft, hop, k_pad):
    """(B, T) x2 -> (2, B*num_frames, k_pad), torch.stft(center=False) framing."""
    b, t = predicts.shape
    num_frames = (t - n_fft) // hop + 1
    x = jnp.stack([predicts, targets], axis=0)                   # (2, B, T)
    idx = jnp.arange(num_frames)[:, None] * hop + jnp.arange(n_fft)[None, :]
    frames = x[:, :, idx].reshape(2, b * num_frames, n_fft)      # (2, M, n_fft)
    if k_pad > n_fft:   # lane-align K for the n_fft < 128 resolutions
        frames = jnp.pad(frames, ((0, 0), (0, 0), (0, k_pad - n_fft)))
    # TODO(synk): frame in-kernel from the raw (B, T) signal via manual DMA to
    # avoid materializing the ~n_fft/hop-times-larger framed array in HBM.
    return frames, num_frames


def _make_bases(n_fft, win_length, k_pad):
    """Fused windowed one-sided DFT basis [win*cos | -win*sin], lane/K-padded."""
    n_freq = n_fft // 2 + 1
    f_pad = _round_up(n_freq, 128)
    n_win = np.arange(win_length, dtype=np.float64)
    # torch.hann_window default is periodic.
    window = 0.5 - 0.5 * np.cos(2.0 * np.pi * n_win / win_length)
    win_full = np.zeros(n_fft, dtype=np.float64)
    left = (n_fft - win_length) // 2                 # torch.stft center-pads the window
    win_full[left:left + win_length] = window
    n = np.arange(n_fft, dtype=np.float64)
    k = np.arange(n_freq, dtype=np.float64)
    ang = 2.0 * np.pi * np.outer(n, k) / n_fft       # (n_fft, n_freq)
    basis = np.zeros((k_pad, 2 * f_pad), np.float32)
    basis[:n_fft, :n_freq] = (np.cos(ang) * win_full[:, None]).astype(np.float32)
    basis[:n_fft, f_pad:f_pad + n_freq] = (-np.sin(ang) * win_full[:, None]).astype(np.float32)
    return jnp.asarray(basis), n_freq, f_pad


def _vmem_capacity_bytes():
    try:
        return int(pltpu.get_tpu_info().vmem_capacity_bytes)
    except Exception:
        return 64 * 1024 * 1024       # conservative fallback (v7x per-TC VMEM)


def stft_loss(predicts, targets, n_fft, hop_length, win_length, tm_max=256):
    """Single-resolution STFT loss: (spectral_convergence, log_magnitude_l1)."""
    predicts = predicts.astype(jnp.float32)
    targets = targets.astype(jnp.float32)

    k_pad = _round_up(n_fft, 128)
    basis, n_freq, f_pad = _make_bases(n_fft, win_length, k_pad)
    frames, _ = _frame_pair(predicts, targets, n_fft, hop_length, k_pad)
    m = frames.shape[1]

    tm = min(tm_max, _round_up(m, 8))
    # Leading size-2 'parallel' grid axis: uses both TensorCores on v7x and is
    # just a serial 2-iteration outer loop on 1-TC chips.
    m_pad = _round_up(m, 2 * tm)
    n_inner = m_pad // (2 * tm)
    frames = jnp.pad(frames, ((0, 0), (0, m_pad - m), (0, 0)))

    kernel = functools.partial(_stft_loss_kernel, tm=tm, k_pad=k_pad,
                               f_pad=f_pad, eps=1e-24)

    # VMEM budget: double-buffered frame tiles + single-buffered basis +
    # scratch accumulators + output blocks + matmul result tile (+25% slack),
    # capped at 80% of physical VMEM (generation-aware).
    vmem_est = 4 * (2 * (2 * tm * k_pad)
                    + k_pad * 2 * f_pad
                    + 3 * tm * f_pad
                    + 2 * 3 * tm * f_pad
                    + 2 * tm * 2 * f_pad)
    vmem_est = int(1.25 * vmem_est)
    vmem_limit = min(max(vmem_est, 32 * 1024 * 1024),
                     int(0.8 * _vmem_capacity_bytes()))
    compiler_params = pltpu.CompilerParams(
        dimension_semantics=("parallel", "arbitrary"),
        vmem_limit_bytes=vmem_limit)

    out_block = pl.BlockSpec((1, tm, f_pad), lambda c, i: (c, 0, 0))
    num, den, log_sum = pl.pallas_call(
        kernel,
        out_shape=(jax.ShapeDtypeStruct((2, tm, f_pad), jnp.float32),) * 3,
        grid_spec=pltpu.PrefetchScalarGridSpec(
            num_scalar_prefetch=0,
            grid=(2, n_inner),
            in_specs=[
                pl.BlockSpec((2, tm, k_pad),
                             lambda c, i: (0, c * n_inner + i, 0)),
                # Grid-invariant DFT basis: single-buffer it (pure VMEM saving).
                pl.BlockSpec((k_pad, 2 * f_pad), lambda c, i: (0, 0),
                             pipeline_mode=pl.Buffered(1)),
            ],
            out_specs=[out_block, out_block, out_block],
            scratch_shapes=[pltpu.VMEM((tm, f_pad), jnp.float32)] * 3,
        ),
        compiler_params=compiler_params,
    )(frames, basis)

    sc_loss = jnp.sqrt(jnp.sum(num)) / jnp.sqrt(jnp.sum(den))    # ||T-P||_F / ||T||_F
    mag_loss = jnp.sum(log_sum) / (m * n_freq)                   # mean |log|P| - log|T||
    return sc_loss, mag_loss


def multi_resolution_stft_loss(fake_signals, true_signals,
                               fft_sizes, win_sizes, hop_sizes):
    res_losses = []
    for n_fft, win_length, hop_length in zip(fft_sizes, win_sizes, hop_sizes):
        sc, mag = stft_loss(fake_signals, true_signals,
                            n_fft, hop_length, win_length)
        res_losses.append(sc + mag)
    return sum(res_losses) / len(res_losses)


if __name__ == "__main__":
    key = jax.random.PRNGKey(0)
    k1, k2 = jax.random.split(key)
    B, T = 2, 1024
    fake_signals = jax.random.normal(k1, (B, T), jnp.float32)
    true_signals = jax.random.normal(k2, (B, T), jnp.float32)

    # Small resolutions consistent with the module's constructor arguments.
    fft_sizes = [256, 128, 64]
    win_sizes = [256, 128, 64]
    hop_sizes = [64, 32, 16]

    loss_fn = jax.jit(functools.partial(
        multi_resolution_stft_loss,
        fft_sizes=fft_sizes, win_sizes=win_sizes, hop_sizes=hop_sizes))
    loss = loss_fn(fake_signals, true_signals)
    jax.block_until_ready(loss)
    print("KERNEL_OK")
</pallas_src>

<mosaic_0001>
module attributes {stable_mosaic.version = 11 : i64} {
  func.func @_stft_loss_kernel(%arg0: i32, %arg1: i32, %arg2: memref<2x32x256xf32, #tpu.memory_space<vmem>>, %arg3: memref<256x512xf32, #tpu.memory_space<vmem>>, %arg4: memref<1x32x256xf32, #tpu.memory_space<vmem>>, %arg5: memref<1x32x256xf32, #tpu.memory_space<vmem>>, %arg6: memref<1x32x256xf32, #tpu.memory_space<vmem>>, %arg7: memref<32x256xf32, #tpu.memory_space<vmem>>, %arg8: memref<32x256xf32, #tpu.memory_space<vmem>>, %arg9: memref<32x256xf32, #tpu.memory_space<vmem>>) attributes {dimension_semantics = [#tpu.dimension_semantics<parallel>, #tpu.dimension_semantics<arbitrary>], iteration_bounds = array<i64: 2, 1>, scalar_prefetch = 0 : i64, scratch_operands = 3 : i64, tpu.core_type = #tpu.core_type<tc>, window_params = [{transform_indices = @transform_0, window_bounds = array<i64: 2, 32, 256>}, {pipeline_mode = #tpu.pipeline_mode<synchronous>, transform_indices = @transform_1, window_bounds = array<i64: 256, 512>}, {transform_indices = @transform_2, window_bounds = array<i64: 1, 32, 256>}, {transform_indices = @transform_3, window_bounds = array<i64: 1, 32, 256>}, {transform_indices = @transform_4, window_bounds = array<i64: 1, 32, 256>}]} {
    %c0_i32 = arith.constant 0 : i32
    %0 = arith.cmpi eq, %arg1, %c0_i32 : i32
    %1 = arith.extui %0 : i1 to i32
    %c0_i32_0 = arith.constant 0 : i32
    %2 = arith.cmpi ne, %1, %c0_i32_0 : i32
    scf.if %2 {
      %cst_24 = arith.constant 0.000000e+00 : f32
      %52 = vector.broadcast %cst_24 : f32 to vector<32x256xf32>
      %c0_25 = arith.constant 0 : index
      %c0_26 = arith.constant 0 : index
      %53 = vector.load %arg7[%c0_25, %c0_26] : memref<32x256xf32, #tpu.memory_space<vmem>>, vector<32x256xf32>
      tpu.vector_store %arg7[%c0_25, %c0_26], %52 {strides = array<i32>} : memref<32x256xf32, #tpu.memory_space<vmem>>, vector<32x256xf32>,
      %cst_27 = arith.constant 0.000000e+00 : f32
      %54 = vector.broadcast %cst_27 : f32 to vector<32x256xf32>
      %c0_28 = arith.constant 0 : index
      %c0_29 = arith.constant 0 : index
      %55 = vector.load %arg8[%c0_28, %c0_29] : memref<32x256xf32, #tpu.memory_space<vmem>>, vector<32x256xf32>
      tpu.vector_store %arg8[%c0_28, %c0_29], %54 {strides = array<i32>} : memref<32x256xf32, #tpu.memory_space<vmem>>, vector<32x256xf32>,
      %cst_30 = arith.constant 0.000000e+00 : f32
      %56 = vector.broadcast %cst_30 : f32 to vector<32x256xf32>
      %c0_31 = arith.constant 0 : index
      %c0_32 = arith.constant 0 : index
      %57 = vector.load %arg9[%c0_31, %c0_32] : memref<32x256xf32, #tpu.memory_space<vmem>>, vector<32x256xf32>
      tpu.vector_store %arg9[%c0_31, %c0_32], %56 {strides = array<i32>} : memref<32x256xf32, #tpu.memory_space<vmem>>, vector<32x256xf32>,
    } else {
    }
    %c0 = arith.constant 0 : index
    %c0_1 = arith.constant 0 : index
    %c0_2 = arith.constant 0 : index
    %3 = vector.load %arg2[%c0, %c0_1, %c0_2] : memref<2x32x256xf32, #tpu.memory_space<vmem>>, vector<2x32x256xf32>
    %4 = vector.shape_cast %3 : vector<2x32x256xf32> to vector<64x256xf32>
    %c0_3 = arith.constant 0 : index
    %c0_4 = arith.constant 0 : index
    %5 = vector.load %arg3[%c0_3, %c0_4] : memref<256x512xf32, #tpu.memory_space<vmem>>, vector<256x512xf32>
    %cst = arith.constant dense<0.000000e+00> : vector<64x512xf32>
    %6 = tpu.matmul %4, %5, %cst {dimension_numbers = #tpu.dot_dimension_numbers<[1], [0], [0], [1], [0, 0, 1, 1], [], []>} : vector<64x256xf32>, vector<256x512xf32>, vector<64x512xf32> -> vector<64x512xf32>
    %7 = vector.extract_strided_slice %6 {offsets = [0, 0], sizes = [32, 512], strides = [1, 1]} : vector<64x512xf32> to vector<32x512xf32>
    %8 = vector.extract_strided_slice %6 {offsets = [32, 0], sizes = [32, 512], strides = [1, 1]} : vector<64x512xf32> to vector<32x512xf32>
    %9 = vector.extract_strided_slice %7 {offsets = [0, 0], sizes = [32, 256], strides = [1, 1]} : vector<32x512xf32> to vector<32x256xf32>
    %10 = vector.extract_strided_slice %7 {offsets = [0, 0], sizes = [32, 256], strides = [1, 1]} : vector<32x512xf32> to vector<32x256xf32>
    %11 = arith.mulf %9, %10 : vector<32x256xf32>
    %12 = vector.extract_strided_slice %7 {offsets = [0, 256], sizes = [32, 256], strides = [1, 1]} : vector<32x512xf32> to vector<32x256xf32>
    %13 = vector.extract_strided_slice %7 {offsets = [0, 256], sizes = [32, 256], strides = [1, 1]} : vector<32x512xf32> to vector<32x256xf32>
    %14 = arith.mulf %12, %13 : vector<32x256xf32>
    %15 = arith.addf %11, %14 : vector<32x256xf32>
    %16 = vector.extract_strided_slice %8 {offsets = [0, 0], sizes = [32, 256], strides = [1, 1]} : vector<32x512xf32> to vector<32x256xf32>
    %17 = vector.extract_strided_slice %8 {offsets = [0, 0], sizes = [32, 256], strides = [1, 1]} : vector<32x512xf32> to vector<32x256xf32>
    %18 = arith.mulf %16, %17 : vector<32x256xf32>
    %19 = vector.extract_strided_slice %8 {offsets = [0, 256], sizes = [32, 256], strides = [1, 1]} : vector<32x512xf32> to vector<32x256xf32>
    %20 = vector.extract_strided_slice %8 {offsets = [0, 256], sizes = [32, 256], strides = [1, 1]} : vector<32x512xf32> to vector<32x256xf32>
    %21 = arith.mulf %19, %20 : vector<32x256xf32>
    %22 = arith.addf %18, %21 : vector<32x256xf32>
    %23 = arith.mulf %15, %22 : vector<32x256xf32>
    %24 = math.sqrt %23 : vector<32x256xf32>
    %c0_5 = arith.constant 0 : index
    %c0_6 = arith.constant 0 : index
    %25 = vector.load %arg7[%c0_5, %c0_6] : memref<32x256xf32, #tpu.memory_space<vmem>>, vector<32x256xf32>
    %26 = arith.addf %22, %15 : vector<32x256xf32>
    %cst_7 = arith.constant 2.000000e+00 : f32
    %27 = vector.broadcast %cst_7 : f32 to vector<32x256xf32>
    %28 = arith.mulf %27, %24 : vector<32x256xf32>
    %29 = arith.subf %26, %28 : vector<32x256xf32>
    %cst_8 = arith.constant 0.000000e+00 : f32
    %30 = vector.broadcast %cst_8 : f32 to vector<32x256xf32>
    %31 = arith.maximumf %29, %30 : vector<32x256xf32>
    %32 = arith.addf %25, %31 : vector<32x256xf32>
    %c0_9 = arith.constant 0 : index
    %c0_10 = arith.constant 0 : index
    %33 = vector.load %arg7[%c0_9, %c0_10] : memref<32x256xf32, #tpu.memory_space<vmem>>, vector<32x256xf32>
    tpu.vector_store %arg7[%c0_9, %c0_10], %32 {strides = array<i32>} : memref<32x256xf32, #tpu.memory_space<vmem>>, vector<32x256xf32>,
    %c0_11 = arith.constant 0 : index
    %c0_12 = arith.constant 0 : index
    %34 = vector.load %arg8[%c0_11, %c0_12] : memref<32x256xf32, #tpu.memory_space<vmem>>, vector<32x256xf32>
    %35 = arith.addf %34, %22 : vector<32x256xf32>
    %c0_13 = arith.constant 0 : index
    %c0_14 = arith.constant 0 : index
    %36 = vector.load %arg8[%c0_13, %c0_14] : memref<32x256xf32, #tpu.memory_space<vmem>>, vector<32x256xf32>
    tpu.vector_store %arg8[%c0_13, %c0_14], %35 {strides = array<i32>} : memref<32x256xf32, #tpu.memory_space<vmem>>, vector<32x256xf32>,
    %cst_15 = arith.constant 1.000000e-24 : f32
    %37 = vector.broadcast %cst_15 : f32 to vector<32x256xf32>
    %38 = arith.maximumf %15, %37 : vector<32x256xf32>
    %cst_16 = arith.constant 1.000000e-24 : f32
    %39 = vector.broadcast %cst_16 : f32 to vector<32x256xf32>
    %40 = arith.maximumf %22, %39 : vector<32x256xf32>
    %c0_17 = arith.constant 0 : index
    %c0_18 = arith.constant 0 : index
    %41 = vector.load %arg9[%c0_17, %c0_18] : memref<32x256xf32, #tpu.memory_space<vmem>>, vector<32x256xf32>
    %42 = arith.divf %38, %40 : vector<32x256xf32>
    %43 = math.log %42 : vector<32x256xf32>
    %44 = math.absf %43 : vector<32x256xf32>
    %cst_19 = arith.constant 5.000000e-01 : f32
    %45 = vector.broadcast %cst_19 : f32 to vector<32x256xf32>
    %46 = arith.mulf %45, %44 : vector<32x256xf32>
    %47 = arith.addf %41, %46 : vector<32x256xf32>
    %c0_20 = arith.constant 0 : index
    %c0_21 = arith.constant 0 : index
    %48 = vector.load %arg9[%c0_20, %c0_21] : memref<32x256xf32, #tpu.memory_space<vmem>>, vector<32x256xf32>
    tpu.vector_store %arg9[%c0_20, %c0_21], %47 {strides = array<i32>} : memref<32x256xf32, #tpu.memory_space<vmem>>, vector<32x256xf32>,
    %c0_i32_22 = arith.constant 0 : i32
    %49 = arith.cmpi eq, %arg1, %c0_i32_22 : i32
    %50 = arith.extui %49 : i1 to i32
    %c0_i32_23 = arith.constant 0 : i32
    %51 = arith.cmpi ne, %50, %c0_i32_23 : i32
    scf.if %51 {
      %c0_24 = arith.constant 0 : index
      %c0_25 = arith.constant 0 : index
      %52 = vector.load %arg7[%c0_24, %c0_25] : memref<32x256xf32, #tpu.memory_space<vmem>>, vector<32x256xf32>
      %c0_26 = arith.constant 0 : index
      %c0_27 = arith.constant 0 : index
      %c0_28 = arith.constant 0 : index
      %53 = vector.load %arg4[%c0_26, %c0_27, %c0_28] : memref<1x32x256xf32, #tpu.memory_space<vmem>>, vector<1x32x256xf32>
      %54 = vector.shape_cast %53 : vector<1x32x256xf32> to vector<32x256xf32>
      %55 = vector.shape_cast %52 : vector<32x256xf32> to vector<1x32x256xf32>
      tpu.vector_store %arg4[%c0_26, %c0_27, %c0_28], %55 {strides = array<i32>} : memref<1x32x256xf32, #tpu.memory_space<vmem>>, vector<1x32x256xf32>,
      %c0_29 = arith.constant 0 : index
      %c0_30 = arith.constant 0 : index
      %56 = vector.load %arg8[%c0_29, %c0_30] : memref<32x256xf32, #tpu.memory_space<vmem>>, vector<32x256xf32>
      %c0_31 = arith.constant 0 : index
      %c0_32 = arith.constant 0 : index
      %c0_33 = arith.constant 0 : index
      %57 = vector.load %arg5[%c0_31, %c0_32, %c0_33] : memref<1x32x256xf32, #tpu.memory_space<vmem>>, vector<1x32x256xf32>
      %58 = vector.shape_cast %57 : vector<1x32x256xf32> to vector<32x256xf32>
      %59 = vector.shape_cast %56 : vector<32x256xf32> to vector<1x32x256xf32>
      tpu.vector_store %arg5[%c0_31, %c0_32, %c0_33], %59 {strides = array<i32>} : memref<1x32x256xf32, #tpu.memory_space<vmem>>, vector<1x32x256xf32>,
      %c0_34 = arith.constant 0 : index
      %c0_35 = arith.constant 0 : index
      %60 = vector.load %arg9[%c0_34, %c0_35] : memref<32x256xf32, #tpu.memory_space<vmem>>, vector<32x256xf32>
      %c0_36 = arith.constant 0 : index
      %c0_37 = arith.constant 0 : index
      %c0_38 = arith.constant 0 : index
      %61 = vector.load %arg6[%c0_36, %c0_37, %c0_38] : memref<1x32x256xf32, #tpu.memory_space<vmem>>, vector<1x32x256xf32>
      %62 = vector.shape_cast %61 : vector<1x32x256xf32> to vector<32x256xf32>
      %63 = vector.shape_cast %60 : vector<32x256xf32> to vector<1x32x256xf32>
      tpu.vector_store %arg6[%c0_36, %c0_37, %c0_38], %63 {strides = array<i32>} : memref<1x32x256xf32, #tpu.memory_space<vmem>>, vector<1x32x256xf32>,
    } else {
    }
    return
  }
  func.func @transform_0(%arg0: i32, %arg1: i32) -> (i32, i32, i32) {
    %c1_i32 = arith.constant 1 : i32
    %0 = arith.muli %arg0, %c1_i32 : i32
    %1 = arith.addi %0, %arg1 : i32
    %c0_i32 = arith.constant 0 : i32
    %c0_i32_0 = arith.constant 0 : i32
    %c0_i32_1 = arith.constant 0 : i32
    return %c0_i32, %1, %c0_i32_0 : i32, i32, i32
  }
  func.func @transform_1(%arg0: i32, %arg1: i32) -> (i32, i32) {
    %c0_i32 = arith.constant 0 : i32
    %c0_i32_0 = arith.constant 0 : i32
    %c0_i32_1 = arith.constant 0 : i32
    return %c0_i32, %c0_i32_0 : i32, i32
  }
  func.func @transform_2(%arg0: i32, %arg1: i32) -> (i32, i32, i32) {
    %c0_i32 = arith.constant 0 : i32
    %c0_i32_0 = arith.constant 0 : i32
    %c0_i32_1 = arith.constant 0 : i32
    return %arg0, %c0_i32, %c0_i32_0 : i32, i32, i32
  }
  func.func @transform_3(%arg0: i32, %arg1: i32) -> (i32, i32, i32) {
    %c0_i32 = arith.constant 0 : i32
    %c0_i32_0 = arith.constant 0 : i32
    %c0_i32_1 = arith.constant 0 : i32
    return %arg0, %c0_i32, %c0_i32_0 : i32, i32, i32
  }
  func.func @transform_4(%arg0: i32, %arg1: i32) -> (i32, i32, i32) {
    %c0_i32 = arith.constant 0 : i32
    %c0_i32_0 = arith.constant 0 : i32
    %c0_i32_1 = arith.constant 0 : i32
    return %arg0, %c0_i32, %c0_i32_0 : i32, i32, i32
  }
}

module attributes {stable_mosaic.version = 11 : i64} {
  func.func @_stft_loss_kernel(%arg0: i32, %arg1: i32, %arg2: memref<2x64x128xf32, #tpu.memory_space<vmem>>, %arg3: memref<128x256xf32, #tpu.memory_space<vmem>>, %arg4: memref<1x64x128xf32, #tpu.memory_space<vmem>>, %arg5: memref<1x64x128xf32, #tpu.memory_space<vmem>>, %arg6: memref<1x64x128xf32, #tpu.memory_space<vmem>>, %arg7: memref<64x128xf32, #tpu.memory_space<vmem>>, %arg8: memref<64x128xf32, #tpu.memory_space<vmem>>, %arg9: memref<64x128xf32, #tpu.memory_space<vmem>>) attributes {dimension_semantics = [#tpu.dimension_semantics<parallel>, #tpu.dimension_semantics<arbitrary>], iteration_bounds = array<i64: 2, 1>, scalar_prefetch = 0 : i64, scratch_operands = 3 : i64, tpu.core_type = #tpu.core_type<tc>, window_params = [{transform_indices = @transform_0, window_bounds = array<i64: 2, 64, 128>}, {pipeline_mode = #tpu.pipeline_mode<synchronous>, transform_indices = @transform_1, window_bounds = array<i64: 128, 256>}, {transform_indices = @transform_2, window_bounds = array<i64: 1, 64, 128>}, {transform_indices = @transform_3, window_bounds = array<i64: 1, 64, 128>}, {transform_indices = @transform_4, window_bounds = array<i64: 1, 64, 128>}]} {
    %c0_i32 = arith.constant 0 : i32
    %0 = arith.cmpi eq, %arg1, %c0_i32 : i32
    %1 = arith.extui %0 : i1 to i32
    %c0_i32_0 = arith.constant 0 : i32
    %2 = arith.cmpi ne, %1, %c0_i32_0 : i32
    scf.if %2 {
      %cst_24 = arith.constant 0.000000e+00 : f32
      %52 = vector.broadcast %cst_24 : f32 to vector<64x128xf32>
      %c0_25 = arith.constant 0 : index
      %c0_26 = arith.constant 0 : index
      %53 = vector.load %arg7[%c0_25, %c0_26] : memref<64x128xf32, #tpu.memory_space<vmem>>, vector<64x128xf32>
      tpu.vector_store %arg7[%c0_25, %c0_26], %52 {strides = array<i32>} : memref<64x128xf32, #tpu.memory_space<vmem>>, vector<64x128xf32>,
      %cst_27 = arith.constant 0.000000e+00 : f32
      %54 = vector.broadcast %cst_27 : f32 to vector<64x128xf32>
      %c0_28 = arith.constant 0 : index
      %c0_29 = arith.constant 0 : index
      %55 = vector.load %arg8[%c0_28, %c0_29] : memref<64x128xf32, #tpu.memory_space<vmem>>, vector<64x128xf32>
      tpu.vector_store %arg8[%c0_28, %c0_29], %54 {strides = array<i32>} : memref<64x128xf32, #tpu.memory_space<vmem>>, vector<64x128xf32>,
      %cst_30 = arith.constant 0.000000e+00 : f32
      %56 = vector.broadcast %cst_30 : f32 to vector<64x128xf32>
      %c0_31 = arith.constant 0 : index
      %c0_32 = arith.constant 0 : index
      %57 = vector.load %arg9[%c0_31, %c0_32] : memref<64x128xf32, #tpu.memory_space<vmem>>, vector<64x128xf32>
      tpu.vector_store %arg9[%c0_31, %c0_32], %56 {strides = array<i32>} : memref<64x128xf32, #tpu.memory_space<vmem>>, vector<64x128xf32>,
    } else {
    }
    %c0 = arith.constant 0 : index
    %c0_1 = arith.constant 0 : index
    %c0_2 = arith.constant 0 : index
    %3 = vector.load %arg2[%c0, %c0_1, %c0_2] : memref<2x64x128xf32, #tpu.memory_space<vmem>>, vector<2x64x128xf32>
    %4 = vector.shape_cast %3 : vector<2x64x128xf32> to vector<128x128xf32>
    %c0_3 = arith.constant 0 : index
    %c0_4 = arith.constant 0 : index
    %5 = vector.load %arg3[%c0_3, %c0_4] : memref<128x256xf32, #tpu.memory_space<vmem>>, vector<128x256xf32>
    %cst = arith.constant dense<0.000000e+00> : vector<128x256xf32>
    %6 = tpu.matmul %4, %5, %cst {dimension_numbers = #tpu.dot_dimension_numbers<[1], [0], [0], [1], [0, 0, 1, 1], [], []>} : vector<128x128xf32>, vector<128x256xf32>, vector<128x256xf32> -> vector<128x256xf32>
    %7 = vector.extract_strided_slice %6 {offsets = [0, 0], sizes = [64, 256], strides = [1, 1]} : vector<128x256xf32> to vector<64x256xf32>
    %8 = vector.extract_strided_slice %6 {offsets = [64, 0], sizes = [64, 256], strides = [1, 1]} : vector<128x256xf32> to vector<64x256xf32>
    %9 = vector.extract_strided_slice %7 {offsets = [0, 0], sizes = [64, 128], strides = [1, 1]} : vector<64x256xf32> to vector<64x128xf32>
    %10 = vector.extract_strided_slice %7 {offsets = [0, 0], sizes = [64, 128], strides = [1, 1]} : vector<64x256xf32> to vector<64x128xf32>
    %11 = arith.mulf %9, %10 : vector<64x128xf32>
    %12 = vector.extract_strided_slice %7 {offsets = [0, 128], sizes = [64, 128], strides = [1, 1]} : vector<64x256xf32> to vector<64x128xf32>
    %13 = vector.extract_strided_slice %7 {offsets = [0, 128], sizes = [64, 128], strides = [1, 1]} : vector<64x256xf32> to vector<64x128xf32>
    %14 = arith.mulf %12, %13 : vector<64x128xf32>
    %15 = arith.addf %11, %14 : vector<64x128xf32>
    %16 = vector.extract_strided_slice %8 {offsets = [0, 0], sizes = [64, 128], strides = [1, 1]} : vector<64x256xf32> to vector<64x128xf32>
    %17 = vector.extract_strided_slice %8 {offsets = [0, 0], sizes = [64, 128], strides = [1, 1]} : vector<64x256xf32> to vector<64x128xf32>
    %18 = arith.mulf %16, %17 : vector<64x128xf32>
    %19 = vector.extract_strided_slice %8 {offsets = [0, 128], sizes = [64, 128], strides = [1, 1]} : vector<64x256xf32> to vector<64x128xf32>
    %20 = vector.extract_strided_slice %8 {offsets = [0, 128], sizes = [64, 128], strides = [1, 1]} : vector<64x256xf32> to vector<64x128xf32>
    %21 = arith.mulf %19, %20 : vector<64x128xf32>
    %22 = arith.addf %18, %21 : vector<64x128xf32>
    %23 = arith.mulf %15, %22 : vector<64x128xf32>
    %24 = math.sqrt %23 : vector<64x128xf32>
    %c0_5 = arith.constant 0 : index
    %c0_6 = arith.constant 0 : index
    %25 = vector.load %arg7[%c0_5, %c0_6] : memref<64x128xf32, #tpu.memory_space<vmem>>, vector<64x128xf32>
    %26 = arith.addf %22, %15 : vector<64x128xf32>
    %cst_7 = arith.constant 2.000000e+00 : f32
    %27 = vector.broadcast %cst_7 : f32 to vector<64x128xf32>
    %28 = arith.mulf %27, %24 : vector<64x128xf32>
    %29 = arith.subf %26, %28 : vector<64x128xf32>
    %cst_8 = arith.constant 0.000000e+00 : f32
    %30 = vector.broadcast %cst_8 : f32 to vector<64x128xf32>
    %31 = arith.maximumf %29, %30 : vector<64x128xf32>
    %32 = arith.addf %25, %31 : vector<64x128xf32>
    %c0_9 = arith.constant 0 : index
    %c0_10 = arith.constant 0 : index
    %33 = vector.load %arg7[%c0_9, %c0_10] : memref<64x128xf32, #tpu.memory_space<vmem>>, vector<64x128xf32>
    tpu.vector_store %arg7[%c0_9, %c0_10], %32 {strides = array<i32>} : memref<64x128xf32, #tpu.memory_space<vmem>>, vector<64x128xf32>,
    %c0_11 = arith.constant 0 : index
    %c0_12 = arith.constant 0 : index
    %34 = vector.load %arg8[%c0_11, %c0_12] : memref<64x128xf32, #tpu.memory_space<vmem>>, vector<64x128xf32>
    %35 = arith.addf %34, %22 : vector<64x128xf32>
    %c0_13 = arith.constant 0 : index
    %c0_14 = arith.constant 0 : index
    %36 = vector.load %arg8[%c0_13, %c0_14] : memref<64x128xf32, #tpu.memory_space<vmem>>, vector<64x128xf32>
    tpu.vector_store %arg8[%c0_13, %c0_14], %35 {strides = array<i32>} : memref<64x128xf32, #tpu.memory_space<vmem>>, vector<64x128xf32>,
    %cst_15 = arith.constant 1.000000e-24 : f32
    %37 = vector.broadcast %cst_15 : f32 to vector<64x128xf32>
    %38 = arith.maximumf %15, %37 : vector<64x128xf32>
    %cst_16 = arith.constant 1.000000e-24 : f32
    %39 = vector.broadcast %cst_16 : f32 to vector<64x128xf32>
    %40 = arith.maximumf %22, %39 : vector<64x128xf32>
    %c0_17 = arith.constant 0 : index
    %c0_18 = arith.constant 0 : index
    %41 = vector.load %arg9[%c0_17, %c0_18] : memref<64x128xf32, #tpu.memory_space<vmem>>, vector<64x128xf32>
    %42 = arith.divf %38, %40 : vector<64x128xf32>
    %43 = math.log %42 : vector<64x128xf32>
    %44 = math.absf %43 : vector<64x128xf32>
    %cst_19 = arith.constant 5.000000e-01 : f32
    %45 = vector.broadcast %cst_19 : f32 to vector<64x128xf32>
    %46 = arith.mulf %45, %44 : vector<64x128xf32>
    %47 = arith.addf %41, %46 : vector<64x128xf32>
    %c0_20 = arith.constant 0 : index
    %c0_21 = arith.constant 0 : index
    %48 = vector.load %arg9[%c0_20, %c0_21] : memref<64x128xf32, #tpu.memory_space<vmem>>, vector<64x128xf32>
    tpu.vector_store %arg9[%c0_20, %c0_21], %47 {strides = array<i32>} : memref<64x128xf32, #tpu.memory_space<vmem>>, vector<64x128xf32>,
    %c0_i32_22 = arith.constant 0 : i32
    %49 = arith.cmpi eq, %arg1, %c0_i32_22 : i32
    %50 = arith.extui %49 : i1 to i32
    %c0_i32_23 = arith.constant 0 : i32
    %51 = arith.cmpi ne, %50, %c0_i32_23 : i32
    scf.if %51 {
      %c0_24 = arith.constant 0 : index
      %c0_25 = arith.constant 0 : index
      %52 = vector.load %arg7[%c0_24, %c0_25] : memref<64x128xf32, #tpu.memory_space<vmem>>, vector<64x128xf32>
      %c0_26 = arith.constant 0 : index
      %c0_27 = arith.constant 0 : index
      %c0_28 = arith.constant 0 : index
      %53 = vector.load %arg4[%c0_26, %c0_27, %c0_28] : memref<1x64x128xf32, #tpu.memory_space<vmem>>, vector<1x64x128xf32>
      %54 = vector.shape_cast %53 : vector<1x64x128xf32> to vector<64x128xf32>
      %55 = vector.shape_cast %52 : vector<64x128xf32> to vector<1x64x128xf32>
      tpu.vector_store %arg4[%c0_26, %c0_27, %c0_28], %55 {strides = array<i32>} : memref<1x64x128xf32, #tpu.memory_space<vmem>>, vector<1x64x128xf32>,
      %c0_29 = arith.constant 0 : index
      %c0_30 = arith.constant 0 : index
      %56 = vector.load %arg8[%c0_29, %c0_30] : memref<64x128xf32, #tpu.memory_space<vmem>>, vector<64x128xf32>
      %c0_31 = arith.constant 0 : index
      %c0_32 = arith.constant 0 : index
      %c0_33 = arith.constant 0 : index
      %57 = vector.load %arg5[%c0_31, %c0_32, %c0_33] : memref<1x64x128xf32, #tpu.memory_space<vmem>>, vector<1x64x128xf32>
      %58 = vector.shape_cast %57 : vector<1x64x128xf32> to vector<64x128xf32>
      %59 = vector.shape_cast %56 : vector<64x128xf32> to vector<1x64x128xf32>
      tpu.vector_store %arg5[%c0_31, %c0_32, %c0_33], %59 {strides = array<i32>} : memref<1x64x128xf32, #tpu.memory_space<vmem>>, vector<1x64x128xf32>,
      %c0_34 = arith.constant 0 : index
      %c0_35 = arith.constant 0 : index
      %60 = vector.load %arg9[%c0_34, %c0_35] : memref<64x128xf32, #tpu.memory_space<vmem>>, vector<64x128xf32>
      %c0_36 = arith.constant 0 : index
      %c0_37 = arith.constant 0 : index
      %c0_38 = arith.constant 0 : index
      %61 = vector.load %arg6[%c0_36, %c0_37, %c0_38] : memref<1x64x128xf32, #tpu.memory_space<vmem>>, vector<1x64x128xf32>
      %62 = vector.shape_cast %61 : vector<1x64x128xf32> to vector<64x128xf32>
      %63 = vector.shape_cast %60 : vector<64x128xf32> to vector<1x64x128xf32>
      tpu.vector_store %arg6[%c0_36, %c0_37, %c0_38], %63 {strides = array<i32>} : memref<1x64x128xf32, #tpu.memory_space<vmem>>, vector<1x64x128xf32>,
    } else {
    }
    return
  }
  func.func @transform_0(%arg0: i32, %arg1: i32) -> (i32, i32, i32) {
    %c1_i32 = arith.constant 1 : i32
    %0 = arith.muli %arg0, %c1_i32 : i32
    %1 = arith.addi %0, %arg1 : i32
    %c0_i32 = arith.constant 0 : i32
    %c0_i32_0 = arith.constant 0 : i32
    %c0_i32_1 = arith.constant 0 : i32
    return %c0_i32, %1, %c0_i32_0 : i32, i32, i32
  }
  func.func @transform_1(%arg0: i32, %arg1: i32) -> (i32, i32) {
    %c0_i32 = arith.constant 0 : i32
    %c0_i32_0 = arith.constant 0 : i32
    %c0_i32_1 = arith.constant 0 : i32
    return %c0_i32, %c0_i32_0 : i32, i32
  }
  func.func @transform_2(%arg0: i32, %arg1: i32) -> (i32, i32, i32) {
    %c0_i32 = arith.constant 0 : i32
    %c0_i32_0 = arith.constant 0 : i32
    %c0_i32_1 = arith.constant 0 : i32
    return %arg0, %c0_i32, %c0_i32_0 : i32, i32, i32
  }
  func.func @transform_3(%arg0: i32, %arg1: i32) -> (i32, i32, i32) {
    %c0_i32 = arith.constant 0 : i32
    %c0_i32_0 = arith.constant 0 : i32
    %c0_i32_1 = arith.constant 0 : i32
    return %arg0, %c0_i32, %c0_i32_0 : i32, i32, i32
  }
  func.func @transform_4(%arg0: i32, %arg1: i32) -> (i32, i32, i32) {
    %c0_i32 = arith.constant 0 : i32
    %c0_i32_0 = arith.constant 0 : i32
    %c0_i32_1 = arith.constant 0 : i32
    return %arg0, %c0_i32, %c0_i32_0 : i32, i32, i32
  }
}

module attributes {stable_mosaic.version = 11 : i64} {
  func.func @_stft_loss_kernel(%arg0: i32, %arg1: i32, %arg2: memref<2x128x128xf32, #tpu.memory_space<vmem>>, %arg3: memref<128x256xf32, #tpu.memory_space<vmem>>, %arg4: memref<1x128x128xf32, #tpu.memory_space<vmem>>, %arg5: memref<1x128x128xf32, #tpu.memory_space<vmem>>, %arg6: memref<1x128x128xf32, #tpu.memory_space<vmem>>, %arg7: memref<128x128xf32, #tpu.memory_space<vmem>>, %arg8: memref<128x128xf32, #tpu.memory_space<vmem>>, %arg9: memref<128x128xf32, #tpu.memory_space<vmem>>) attributes {dimension_semantics = [#tpu.dimension_semantics<parallel>, #tpu.dimension_semantics<arbitrary>], iteration_bounds = array<i64: 2, 1>, scalar_prefetch = 0 : i64, scratch_operands = 3 : i64, tpu.core_type = #tpu.core_type<tc>, window_params = [{transform_indices = @transform_0, window_bounds = array<i64: 2, 128, 128>}, {pipeline_mode = #tpu.pipeline_mode<synchronous>, transform_indices = @transform_1, window_bounds = array<i64: 128, 256>}, {transform_indices = @transform_2, window_bounds = array<i64: 1, 128, 128>}, {transform_indices = @transform_3, window_bounds = array<i64: 1, 128, 128>}, {transform_indices = @transform_4, window_bounds = array<i64: 1, 128, 128>}]} {
    %c0_i32 = arith.constant 0 : i32
    %0 = arith.cmpi eq, %arg1, %c0_i32 : i32
    %1 = arith.extui %0 : i1 to i32
    %c0_i32_0 = arith.constant 0 : i32
    %2 = arith.cmpi ne, %1, %c0_i32_0 : i32
    scf.if %2 {
      %cst_24 = arith.constant 0.000000e+00 : f32
      %52 = vector.broadcast %cst_24 : f32 to vector<128x128xf32>
      %c0_25 = arith.constant 0 : index
      %c0_26 = arith.constant 0 : index
      %53 = vector.load %arg7[%c0_25, %c0_26] : memref<128x128xf32, #tpu.memory_space<vmem>>, vector<128x128xf32>
      tpu.vector_store %arg7[%c0_25, %c0_26], %52 {strides = array<i32>} : memref<128x128xf32, #tpu.memory_space<vmem>>, vector<128x128xf32>,
      %cst_27 = arith.constant 0.000000e+00 : f32
      %54 = vector.broadcast %cst_27 : f32 to vector<128x128xf32>
      %c0_28 = arith.constant 0 : index
      %c0_29 = arith.constant 0 : index
      %55 = vector.load %arg8[%c0_28, %c0_29] : memref<128x128xf32, #tpu.memory_space<vmem>>, vector<128x128xf32>
      tpu.vector_store %arg8[%c0_28, %c0_29], %54 {strides = array<i32>} : memref<128x128xf32, #tpu.memory_space<vmem>>, vector<128x128xf32>,
      %cst_30 = arith.constant 0.000000e+00 : f32
      %56 = vector.broadcast %cst_30 : f32 to vector<128x128xf32>
      %c0_31 = arith.constant 0 : index
      %c0_32 = arith.constant 0 : index
      %57 = vector.load %arg9[%c0_31, %c0_32] : memref<128x128xf32, #tpu.memory_space<vmem>>, vector<128x128xf32>
      tpu.vector_store %arg9[%c0_31, %c0_32], %56 {strides = array<i32>} : memref<128x128xf32, #tpu.memory_space<vmem>>, vector<128x128xf32>,
    } else {
    }
    %c0 = arith.constant 0 : index
    %c0_1 = arith.constant 0 : index
    %c0_2 = arith.constant 0 : index
    %3 = vector.load %arg2[%c0, %c0_1, %c0_2] : memref<2x128x128xf32, #tpu.memory_space<vmem>>, vector<2x128x128xf32>
    %4 = vector.shape_cast %3 : vector<2x128x128xf32> to vector<256x128xf32>
    %c0_3 = arith.constant 0 : index
    %c0_4 = arith.constant 0 : index
    %5 = vector.load %arg3[%c0_3, %c0_4] : memref<128x256xf32, #tpu.memory_space<vmem>>, vector<128x256xf32>
    %cst = arith.constant dense<0.000000e+00> : vector<256x256xf32>
    %6 = tpu.matmul %4, %5, %cst {dimension_numbers = #tpu.dot_dimension_numbers<[1], [0], [0], [1], [0, 0, 1, 1], [], []>} : vector<256x128xf32>, vector<128x256xf32>, vector<256x256xf32> -> vector<256x256xf32>
    %7 = vector.extract_strided_slice %6 {offsets = [0, 0], sizes = [128, 256], strides = [1, 1]} : vector<256x256xf32> to vector<128x256xf32>
    %8 = vector.extract_strided_slice %6 {offsets = [128, 0], sizes = [128, 256], strides = [1, 1]} : vector<256x256xf32> to vector<128x256xf32>
    %9 = vector.extract_strided_slice %7 {offsets = [0, 0], sizes = [128, 128], strides = [1, 1]} : vector<128x256xf32> to vector<128x128xf32>
    %10 = vector.extract_strided_slice %7 {offsets = [0, 0], sizes = [128, 128], strides = [1, 1]} : vector<128x256xf32> to vector<128x128xf32>
    %11 = arith.mulf %9, %10 : vector<128x128xf32>
    %12 = vector.extract_strided_slice %7 {offsets = [0, 128], sizes = [128, 128], strides = [1, 1]} : vector<128x256xf32> to vector<128x128xf32>
    %13 = vector.extract_strided_slice %7 {offsets = [0, 128], sizes = [128, 128], strides = [1, 1]} : vector<128x256xf32> to vector<128x128xf32>
    %14 = arith.mulf %12, %13 : vector<128x128xf32>
    %15 = arith.addf %11, %14 : vector<128x128xf32>
    %16 = vector.extract_strided_slice %8 {offsets = [0, 0], sizes = [128, 128], strides = [1, 1]} : vector<128x256xf32> to vector<128x128xf32>
    %17 = vector.extract_strided_slice %8 {offsets = [0, 0], sizes = [128, 128], strides = [1, 1]} : vector<128x256xf32> to vector<128x128xf32>
    %18 = arith.mulf %16, %17 : vector<128x128xf32>
    %19 = vector.extract_strided_slice %8 {offsets = [0, 128], sizes = [128, 128], strides = [1, 1]} : vector<128x256xf32> to vector<128x128xf32>
    %20 = vector.extract_strided_slice %8 {offsets = [0, 128], sizes = [128, 128], strides = [1, 1]} : vector<128x256xf32> to vector<128x128xf32>
    %21 = arith.mulf %19, %20 : vector<128x128xf32>
    %22 = arith.addf %18, %21 : vector<128x128xf32>
    %23 = arith.mulf %15, %22 : vector<128x128xf32>
    %24 = math.sqrt %23 : vector<128x128xf32>
    %c0_5 = arith.constant 0 : index
    %c0_6 = arith.constant 0 : index
    %25 = vector.load %arg7[%c0_5, %c0_6] : memref<128x128xf32, #tpu.memory_space<vmem>>, vector<128x128xf32>
    %26 = arith.addf %22, %15 : vector<128x128xf32>
    %cst_7 = arith.constant 2.000000e+00 : f32
    %27 = vector.broadcast %cst_7 : f32 to vector<128x128xf32>
    %28 = arith.mulf %27, %24 : vector<128x128xf32>
    %29 = arith.subf %26, %28 : vector<128x128xf32>
    %cst_8 = arith.constant 0.000000e+00 : f32
    %30 = vector.broadcast %cst_8 : f32 to vector<128x128xf32>
    %31 = arith.maximumf %29, %30 : vector<128x128xf32>
    %32 = arith.addf %25, %31 : vector<128x128xf32>
    %c0_9 = arith.constant 0 : index
    %c0_10 = arith.constant 0 : index
    %33 = vector.load %arg7[%c0_9, %c0_10] : memref<128x128xf32, #tpu.memory_space<vmem>>, vector<128x128xf32>
    tpu.vector_store %arg7[%c0_9, %c0_10], %32 {strides = array<i32>} : memref<128x128xf32, #tpu.memory_space<vmem>>, vector<128x128xf32>,
    %c0_11 = arith.constant 0 : index
    %c0_12 = arith.constant 0 : index
    %34 = vector.load %arg8[%c0_11, %c0_12] : memref<128x128xf32, #tpu.memory_space<vmem>>, vector<128x128xf32>
    %35 = arith.addf %34, %22 : vector<128x128xf32>
    %c0_13 = arith.constant 0 : index
    %c0_14 = arith.constant 0 : index
    %36 = vector.load %arg8[%c0_13, %c0_14] : memref<128x128xf32, #tpu.memory_space<vmem>>, vector<128x128xf32>
    tpu.vector_store %arg8[%c0_13, %c0_14], %35 {strides = array<i32>} : memref<128x128xf32, #tpu.memory_space<vmem>>, vector<128x128xf32>,
    %cst_15 = arith.constant 1.000000e-24 : f32
    %37 = vector.broadcast %cst_15 : f32 to vector<128x128xf32>
    %38 = arith.maximumf %15, %37 : vector<128x128xf32>
    %cst_16 = arith.constant 1.000000e-24 : f32
    %39 = vector.broadcast %cst_16 : f32 to vector<128x128xf32>
    %40 = arith.maximumf %22, %39 : vector<128x128xf32>
    %c0_17 = arith.constant 0 : index
    %c0_18 = arith.constant 0 : index
    %41 = vector.load %arg9[%c0_17, %c0_18] : memref<128x128xf32, #tpu.memory_space<vmem>>, vector<128x128xf32>
    %42 = arith.divf %38, %40 : vector<128x128xf32>
    %43 = math.log %42 : vector<128x128xf32>
    %44 = math.absf %43 : vector<128x128xf32>
    %cst_19 = arith.constant 5.000000e-01 : f32
    %45 = vector.broadcast %cst_19 : f32 to vector<128x128xf32>
    %46 = arith.mulf %45, %44 : vector<128x128xf32>
    %47 = arith.addf %41, %46 : vector<128x128xf32>
    %c0_20 = arith.constant 0 : index
    %c0_21 = arith.constant 0 : index
    %48 = vector.load %arg9[%c0_20, %c0_21] : memref<128x128xf32, #tpu.memory_space<vmem>>, vector<128x128xf32>
    tpu.vector_store %arg9[%c0_20, %c0_21], %47 {strides = array<i32>} : memref<128x128xf32, #tpu.memory_space<vmem>>, vector<128x128xf32>,
    %c0_i32_22 = arith.constant 0 : i32
    %49 = arith.cmpi eq, %arg1, %c0_i32_22 : i32
    %50 = arith.extui %49 : i1 to i32
    %c0_i32_23 = arith.constant 0 : i32
    %51 = arith.cmpi ne, %50, %c0_i32_23 : i32
    scf.if %51 {
      %c0_24 = arith.constant 0 : index
      %c0_25 = arith.constant 0 : index
      %52 = vector.load %arg7[%c0_24, %c0_25] : memref<128x128xf32, #tpu.memory_space<vmem>>, vector<128x128xf32>
      %c0_26 = arith.constant 0 : index
      %c0_27 = arith.constant 0 : index
      %c0_28 = arith.constant 0 : index
      %53 = vector.load %arg4[%c0_26, %c0_27, %c0_28] : memref<1x128x128xf32, #tpu.memory_space<vmem>>, vector<1x128x128xf32>
      %54 = vector.shape_cast %53 : vector<1x128x128xf32> to vector<128x128xf32>
      %55 = vector.shape_cast %52 : vector<128x128xf32> to vector<1x128x128xf32>
      tpu.vector_store %arg4[%c0_26, %c0_27, %c0_28], %55 {strides = array<i32>} : memref<1x128x128xf32, #tpu.memory_space<vmem>>, vector<1x128x128xf32>,
      %c0_29 = arith.constant 0 : index
      %c0_30 = arith.constant 0 : index
      %56 = vector.load %arg8[%c0_29, %c0_30] : memref<128x128xf32, #tpu.memory_space<vmem>>, vector<128x128xf32>
      %c0_31 = arith.constant 0 : index
      %c0_32 = arith.constant 0 : index
      %c0_33 = arith.constant 0 : index
      %57 = vector.load %arg5[%c0_31, %c0_32, %c0_33] : memref<1x128x128xf32, #tpu.memory_space<vmem>>, vector<1x128x128xf32>
      %58 = vector.shape_cast %57 : vector<1x128x128xf32> to vector<128x128xf32>
      %59 = vector.shape_cast %56 : vector<128x128xf32> to vector<1x128x128xf32>
      tpu.vector_store %arg5[%c0_31, %c0_32, %c0_33], %59 {strides = array<i32>} : memref<1x128x128xf32, #tpu.memory_space<vmem>>, vector<1x128x128xf32>,
      %c0_34 = arith.constant 0 : index
      %c0_35 = arith.constant 0 : index
      %60 = vector.load %arg9[%c0_34, %c0_35] : memref<128x128xf32, #tpu.memory_space<vmem>>, vector<128x128xf32>
      %c0_36 = arith.constant 0 : index
      %c0_37 = arith.constant 0 : index
      %c0_38 = arith.constant 0 : index
      %61 = vector.load %arg6[%c0_36, %c0_37, %c0_38] : memref<1x128x128xf32, #tpu.memory_space<vmem>>, vector<1x128x128xf32>
      %62 = vector.shape_cast %61 : vector<1x128x128xf32> to vector<128x128xf32>
      %63 = vector.shape_cast %60 : vector<128x128xf32> to vector<1x128x128xf32>
      tpu.vector_store %arg6[%c0_36, %c0_37, %c0_38], %63 {strides = array<i32>} : memref<1x128x128xf32, #tpu.memory_space<vmem>>, vector<1x128x128xf32>,
    } else {
    }
    return
  }
  func.func @transform_0(%arg0: i32, %arg1: i32) -> (i32, i32, i32) {
    %c1_i32 = arith.constant 1 : i32
    %0 = arith.muli %arg0, %c1_i32 : i32
    %1 = arith.addi %0, %arg1 : i32
    %c0_i32 = arith.constant 0 : i32
    %c0_i32_0 = arith.constant 0 : i32
    %c0_i32_1 = arith.constant 0 : i32
    return %c0_i32, %1, %c0_i32_0 : i32, i32, i32
  }
  func.func @transform_1(%arg0: i32, %arg1: i32) -> (i32, i32) {
    %c0_i32 = arith.constant 0 : i32
    %c0_i32_0 = arith.constant 0 : i32
    %c0_i32_1 = arith.constant 0 : i32
    return %c0_i32, %c0_i32_0 : i32, i32
  }
  func.func @transform_2(%arg0: i32, %arg1: i32) -> (i32, i32, i32) {
    %c0_i32 = arith.constant 0 : i32
    %c0_i32_0 = arith.constant 0 : i32
    %c0_i32_1 = arith.constant 0 : i32
    return %arg0, %c0_i32, %c0_i32_0 : i32, i32, i32
  }
  func.func @transform_3(%arg0: i32, %arg1: i32) -> (i32, i32, i32) {
    %c0_i32 = arith.constant 0 : i32
    %c0_i32_0 = arith.constant 0 : i32
    %c0_i32_1 = arith.constant 0 : i32
    return %arg0, %c0_i32, %c0_i32_0 : i32, i32, i32
  }
  func.func @transform_4(%arg0: i32, %arg1: i32) -> (i32, i32, i32) {
    %c0_i32 = arith.constant 0 : i32
    %c0_i32_0 = arith.constant 0 : i32
    %c0_i32_1 = arith.constant 0 : i32
    return %arg0, %c0_i32, %c0_i32_0 : i32, i32, i32
  }
}

</mosaic_0001>

<llo_original>
// kernel: multi_resolution_stft_loss.3
$region0: #{multi_resolution_stft_loss.3}
  #allocation0 [shape = 'u32[]', space=smem, size = 0x4, offset = 0x4, fixed_abs, tag = 'smem constant byte address 0x4 - core index']
  #allocation1 [shape = 'u32[72,128]{1,0:T(1,128)}', space=vmem, size = 0x9000, scoped, tag = 'internal scratch']
  #allocation2 [shape = 'f32[32,256]{1,0:T(8,128)}', space=vmem, size = 0x8000, scoped, tag = 'scratch operand']
  #allocation3 [shape = 'f32[32,256]{1,0:T(8,128)}', space=vmem, size = 0x8000, scoped, tag = 'scratch operand']
  #allocation4 [shape = 'f32[32,256]{1,0:T(8,128)}', space=vmem, size = 0x8000, scoped, tag = 'scratch operand']
  %s0 = inlined_call_operand.vmem [shape: f32[2,64,256], index: 0, kind: input, shape index: {}]
  %s1 = inlined_call_operand.vmem [shape: f32[256,512], index: 1, kind: input, shape index: {}]
  %s2 = inlined_call_operand.vmem [shape: f32[2,32,256], index: 2, kind: output, shape index: {0}]
  %s3 = inlined_call_operand.vmem [shape: f32[2,32,256], index: 3, kind: output, shape index: {1}]
  %s4 = inlined_call_operand.vmem [shape: f32[2,32,256], index: 4, kind: output, shape index: {2}]
  %5 = xla_tuple %s2, %s3, %s4
  %s6 = sld [smem:[#allocation0]]
  $region88: #{multi_resolution_stft_loss.3} parent=0
    _
  %s8 = ssub.s32 1, %s6
  %s9 = scalar_select 0, %s8, %s6
  $region1: #{multi_resolution_stft_loss.3} parent=0
    #allocation5 [shape = 'u8[131072]{0}', space=vmem, size = 0x20000, scoped, tag = 'input window, operand 0']
    loop: start=0, step=1, limit=4
    $region2: #{multi_resolution_stft_loss.3} parent=1 // loop_pre_header
      _
    $region3: #{multi_resolution_stft_loss.3} parent=1 // loop_header
      %s11 = sphi 0, %s15
      %p12 = scmp.ge.s32.totalorder %s11, 4
      %s18 = sphi 0, %s30
      %s19 = sphi 0, %s26
      %s20 = sphi 0, %s18
      %s21 = sphi 0, %s19
      %s22 = sphi 0, %s20
      %s23 = sphi 0, %s21
      %s35 = sphi 0, %s37
      %s38 = sphi 0, %s35
      %s39 = sphi 0, %s38
      %s55 = sphi 0, %s39
      %s59 = sphi 0, %s59
      %s61 = sphi 0, %s59
      %s62 = sphi 0, %s61
      %s76 = sphi 0, %s62
      %s82 = sphi 0, %s84
      %s85 = sphi 0, %s82
      %s86 = sphi 0, %s85
      %s102 = sphi 0, %s86
      %s108 = sphi 0, %s110
      %s111 = sphi 0, %s108
      %s112 = sphi 0, %s111
      %s128 = sphi 0, %s112
      %s134 = sphi 0, %s136
      %s137 = sphi 0, %s134
      %s138 = sphi 0, %s137
      %s154 = sphi 0, %s138
    $region4: #{multi_resolution_stft_loss.3} parent=1 // loop_header_branch
      %14 = sbr.rel (%p12) target = $region8
    $region5: #{multi_resolution_stft_loss.3} parent=1 // loop_body
      %s16 = ssub.s32 %s11, 1
      %s17 = ssub.s32 %s11, 2
      %s24 = sadd.s32 1, %s19
      %p25 = scmp.ge.s32.totalorder %s24, 1
      %s26 = scalar_select %p25, 0, %s24
      %s27 = sadd.s32 1, %s18
      %s28 = scalar_select %p25, %s27, %s18
      %p29 = scmp.ge.s32.totalorder %s28, 2
      %s30 = scalar_select %p29, 0, %s28
      %s31 = sadd.s32 %s18, %s19
      %s32 = sadd.s32 %s30, %s26
      %s33 = ssub.s32 %s31, %s32
      %p34 = scmp.eq.s32.totalorder %s33, 0
      %s36 = sadd.s32 %s35, 1
      %s37 = scalar_select %p34, %s35, %s36
      %p40 = pneg %p34
      %p41 = scmp.eq.s32.totalorder %s11, 1
      %p42 = por %p40, %p41
      %p43 = scmp.ne.s32.totalorder %s35, %s38
      %p44 = scmp.eq.s32.totalorder %s11, 0
      %p45 = por %p43, %p44
      %p46 = scmp.ne.s32.totalorder %s35, %s38
      %p47 = scmp.eq.s32.totalorder %s16, 1
      %p48 = por %p46, %p47
      %p49 = scmp.ne.s32.totalorder %s38, %s39
      %p50 = scmp.eq.s32.totalorder %s16, 0
      %p51 = por %p49, %p50
      %p52 = scmp.ne.s32.totalorder %s38, %s39
      %p53 = scmp.eq.s32.totalorder %s17, 1
      %p54 = por %p52, %p53
      %p56 = scmp.ne.s32.totalorder %s39, %s55
      %p57 = scmp.eq.s32.totalorder %s17, 0
      %p58 = por %p56, %p57
      %s60 = sadd.s32 %s59, 1
      %p63 = scmp.eq.s32.totalorder %s11, 1
      %p64 = scmp.ne.s32.totalorder %s59, %s61
      %p65 = scmp.eq.s32.totalorder %s11, 0
      %p66 = por %p64, %p65
      %p67 = scmp.ne.s32.totalorder %s59, %s61
      %p68 = scmp.eq.s32.totalorder %s16, 1
      %p69 = por %p67, %p68
      %p70 = scmp.ne.s32.totalorder %s61, %s62
      %p71 = scmp.eq.s32.totalorder %s16, 0
      %p72 = por %p70, %p71
      %p73 = scmp.ne.s32.totalorder %s61, %s62
      %p74 = scmp.eq.s32.totalorder %s17, 1
      %p75 = por %p73, %p74
      %p77 = scmp.ne.s32.totalorder %s62, %s76
      %p78 = scmp.eq.s32.totalorder %s17, 0
      %p79 = por %p77, %p78
      %s80 = ssub.s32 %s18, %s30
      %p81 = scmp.eq.s32.totalorder %s80, 0
      %s83 = sadd.s32 %s82, 1
      %s84 = scalar_select %p81, %s82, %s83
      %p87 = pneg %p81
      %p88 = scmp.eq.s32.totalorder %s11, 1
      %p89 = por %p87, %p88
      %p90 = scmp.ne.s32.totalorder %s82, %s85
      %p91 = scmp.eq.s32.totalorder %s11, 0
      %p92 = por %p90, %p91
      %p93 = scmp.ne.s32.totalorder %s82, %s85
      %p94 = scmp.eq.s32.totalorder %s16, 1
      %p95 = por %p93, %p94
      %p96 = scmp.ne.s32.totalorder %s85, %s86
      %p97 = scmp.eq.s32.totalorder %s16, 0
      %p98 = por %p96, %p97
      %p99 = scmp.ne.s32.totalorder %s85, %s86
      %p100 = scmp.eq.s32.totalorder %s17, 1
      %p101 = por %p99, %p100
      %p103 = scmp.ne.s32.totalorder %s86, %s102
      %p104 = scmp.eq.s32.totalorder %s17, 0
      %p105 = por %p103, %p104
      %s106 = ssub.s32 %s18, %s30
      %p107 = scmp.eq.s32.totalorder %s106, 0
      %s109 = sadd.s32 %s108, 1
      %s110 = scalar_select %p107, %s108, %s109
      %p113 = pneg %p107
      %p114 = scmp.eq.s32.totalorder %s11, 1
      %p115 = por %p113, %p114
      %p116 = scmp.ne.s32.totalorder %s108, %s111
      %p117 = scmp.eq.s32.totalorder %s11, 0
      %p118 = por %p116, %p117
      %p119 = scmp.ne.s32.totalorder %s108, %s111
      %p120 = scmp.eq.s32.totalorder %s16, 1
      %p121 = por %p119, %p120
      %p122 = scmp.ne.s32.totalorder %s111, %s112
      %p123 = scmp.eq.s32.totalorder %s16, 0
      %p124 = por %p122, %p123
      %p125 = scmp.ne.s32.totalorder %s111, %s112
      %p126 = scmp.eq.s32.totalorder %s17, 1
      %p127 = por %p125, %p126
      %p129 = scmp.ne.s32.totalorder %s112, %s128
      %p130 = scmp.eq.s32.totalorder %s17, 0
      %p131 = por %p129, %p130
      %s132 = ssub.s32 %s18, %s30
      %p133 = scmp.eq.s32.totalorder %s132, 0
      %s135 = sadd.s32 %s134, 1
      %s136 = scalar_select %p133, %s134, %s135
      %p139 = pneg %p133
      %p140 = scmp.eq.s32.totalorder %s11, 1
      %p141 = por %p139, %p140
      %p142 = scmp.ne.s32.totalorder %s134, %s137
      %p143 = scmp.eq.s32.totalorder %s11, 0
      %p144 = por %p142, %p143
      %p145 = scmp.ne.s32.totalorder %s134, %s137
      %p146 = scmp.eq.s32.totalorder %s16, 1
      %p147 = por %p145, %p146
      %p148 = scmp.ne.s32.totalorder %s137, %s138
      %p149 = scmp.eq.s32.totalorder %s16, 0
      %p150 = por %p148, %p149
      %p151 = scmp.ne.s32.totalorder %s137, %s138
      %p152 = scmp.eq.s32.totalorder %s17, 1
      %p153 = por %p151, %p152
      %p155 = scmp.ne.s32.totalorder %s138, %s154
      %p156 = scmp.eq.s32.totalorder %s17, 0
      %p157 = por %p155, %p156
      %p158 = scmp.le.s32.totalorder 1, %s11
      %p159 = scmp.lt.s32.totalorder %s11, 3
      %p160 = pnand %p158, %p159
      %p161 = pneg %p160
      // Predicated region
      $region9: #{multi_resolution_stft_loss.3} parent=5 // pred_check
        _
      $region10: #{multi_resolution_stft_loss.3} parent=5 // pred_check_branch
        %163 = sbr.rel (%p160) target = $region12
      $region11: #{multi_resolution_stft_loss.3} parent=5 // pred_region
        %s164 = ssub.s32 %s11, 1
        // Predicated region
        $region13: #{multi_resolution_stft_loss.3} parent=11 // pred_check
          %p165 = pneg %p72
        $region14: #{multi_resolution_stft_loss.3} parent=11 // pred_check_branch
          %167 = sbr.rel (%p165) target = $region16
        $region15: #{multi_resolution_stft_loss.3} parent=11 // pred_region
          _
        $region16: #{multi_resolution_stft_loss.3} parent=11 // pred_fallthru
          _
      $region12: #{multi_resolution_stft_loss.3} parent=5 // pred_fallthru
        _
      %p168 = scmp.lt.s32.totalorder %s11, 2
      // Predicated region
      $region17: #{multi_resolution_stft_loss.3} parent=5 // pred_check
        %p169 = pneg %p168
      $region18: #{multi_resolution_stft_loss.3} parent=5 // pred_check_branch
        %171 = sbr.rel (%p169) target = $region20
      $region19: #{multi_resolution_stft_loss.3} parent=5 // pred_region
        // Predicated region
        $region21: #{multi_resolution_stft_loss.3} parent=19 // pred_check
          %p172 = pneg %p45
        $region22: #{multi_resolution_stft_loss.3} parent=19 // pred_check_branch
          %174 = sbr.rel (%p172) target = $region24
        $region23: #{multi_resolution_stft_loss.3} parent=19 // pred_region
          %s175 = sand.u32 %s35, 1
          %s176 = sand.u32 %s35, 1
          %s177 = smul.addr %s176, 128
          %s178 = scalar_lea.vmem [#allocation5], %s177
          %s179 = sadd.s32 %s18, %s19
          %s180 = smul.u32 4, %s179
          %s181 = smul.addr %s180, 2
          %s182 = smul.addr %s181, 8
          %s183 = scalar_lea.vmem %s0, %s182
          // Predicated region
          $region25: #{multi_resolution_stft_loss.3} parent=23 // pred_check
            _
          $region26: #{multi_resolution_stft_loss.3} parent=23 // pred_check_branch
            %185 = sbr.rel (0) target = $region28
          $region27: #{multi_resolution_stft_loss.3} parent=23 // pred_region
            // Predicated region
            $region29: #{multi_resolution_stft_loss.3} parent=27 // pred_check
              _
            $region30: #{multi_resolution_stft_loss.3} parent=27 // pred_check_branch
              %187 = sbr.rel (0) target = $region32
            $region31: #{multi_resolution_stft_loss.3} parent=27 // pred_region
              loop: start=0, step=1, limit=1
              $region33: #{multi_resolution_stft_loss.3} parent=31 // loop_pre_header
                _
              $region34: #{multi_resolution_stft_loss.3} parent=31 // loop_header
                %s189 = sphi 0, %s193
                %p190 = scmp.ge.s32.totalorder %s189, 1
                %s194 = sphi %s183, %s183
                %s195 = sphi %s178, %s178
              $region35: #{multi_resolution_stft_loss.3} parent=31 // loop_header_branch
                %192 = sbr.rel (%p190) target = $region39
              $region36: #{multi_resolution_stft_loss.3} parent=31 // loop_body
                %v196 = vld [vmem:[%s194] sm:$0xff]
                %197 = vst [vmem:[%s195] sm:$0xff] %v196
                %v198 = vld [vmem:[%s194 + $0x8] sm:$0xff]
                %199 = vst [vmem:[%s195 + $0x8] sm:$0xff] %v198
                %v200 = vld [vmem:[%s194 + $0x10] sm:$0xff]
                %201 = vst [vmem:[%s195 + $0x10] sm:$0xff] %v200
                %v202 = vld [vmem:[%s194 + $0x18] sm:$0xff]
                %203 = vst [vmem:[%s195 + $0x18] sm:$0xff] %v202
                %v204 = vld [vmem:[%s194 + $0x20] sm:$0xff]
                %205 = vst [vmem:[%s195 + $0x20] sm:$0xff] %v204
                %v206 = vld [vmem:[%s194 + $0x28] sm:$0xff]
                %207 = vst [vmem:[%s195 + $0x28] sm:$0xff] %v206
                %v208 = vld [vmem:[%s194 + $0x30] sm:$0xff]
                %209 = vst [vmem:[%s195 + $0x30] sm:$0xff] %v208
                %v210 = vld [vmem:[%s194 + $0x38] sm:$0xff]
                %211 = vst [vmem:[%s195 + $0x38] sm:$0xff] %v210
                %v212 = vld [vmem:[%s194 + $0x80] sm:$0xff]
                %213 = vst [vmem:[%s195 + $0x40] sm:$0xff] %v212
                %v214 = vld [vmem:[%s194 + $0x88] sm:$0xff]
                %215 = vst [vmem:[%s195 + $0x48] sm:$0xff] %v214
                %v216 = vld [vmem:[%s194 + $0x90] sm:$0xff]
                %217 = vst [vmem:[%s195 + $0x50] sm:$0xff] %v216
                %v218 = vld [vmem:[%s194 + $0x98] sm:$0xff]
                %219 = vst [vmem:[%s195 + $0x58] sm:$0xff] %v218
                %v220 = vld [vmem:[%s194 + $0xa0] sm:$0xff]
                %221 = vst [vmem:[%s195 + $0x60] sm:$0xff] %v220
                %v222 = vld [vmem:[%s194 + $0xa8] sm:$0xff]
                %223 = vst [vmem:[%s195 + $0x68] sm:$0xff] %v222
                %v224 = vld [vmem:[%s194 + $0xb0] sm:$0xff]
                %225 = vst [vmem:[%s195 + $0x70] sm:$0xff] %v224
                %v226 = vld [vmem:[%s194 + $0xb8] sm:$0xff]
                %227 = vst [vmem:[%s195 + $0x78] sm:$0xff] %v226
              $region37: #{multi_resolution_stft_loss.3} parent=31 // loop_footer
                %s193 = sadd.s32 1, %s189
              $region38: #{multi_resolution_stft_loss.3} parent=31 // loop_footer_branch
                %188 = sbr.rel target = $region34
              $region39: #{multi_resolution_stft_loss.3} parent=31 // loop_exit
                _
            $region32: #{multi_resolution_stft_loss.3} parent=27 // pred_fallthru
              _
            // Predicated region
            $region40: #{multi_resolution_stft_loss.3} parent=27 // pred_check
              _
            $region41: #{multi_resolution_stft_loss.3} parent=27 // pred_check_branch
              %229 = sbr.rel target = $region43
            $region42: #{multi_resolution_stft_loss.3} parent=27 // pred_region
              _
            $region43: #{multi_resolution_stft_loss.3} parent=27 // pred_fallthru
              _
          $region28: #{multi_resolution_stft_loss.3} parent=23 // pred_fallthru
            _
          %230 = vnop
        $region24: #{multi_resolution_stft_loss.3} parent=19 // pred_fallthru
          _
      $region20: #{multi_resolution_stft_loss.3} parent=5 // pred_fallthru
        _
      %p231 = scmp.le.s32.totalorder 1, %s11
      %p232 = scmp.lt.s32.totalorder %s11, 3
      %p233 = pnand %p231, %p232
      %p234 = pneg %p233
      // Predicated region
      $region44: #{multi_resolution_stft_loss.3} parent=5 // pred_check
        _
      $region45: #{multi_resolution_stft_loss.3} parent=5 // pred_check_branch
        %236 = sbr.rel (%p233) target = $region47
      $region46: #{multi_resolution_stft_loss.3} parent=5 // pred_region
        %s237 = ssub.s32 %s11, 1
        %s238 = sand.u32 %s38, 1
        %s239 = sand.u32 %s38, 1
        %s240 = smul.addr %s239, 128
        %s241 = scalar_lea.vmem [#allocation5], %s240
        // Predicated region
        $region48: #{multi_resolution_stft_loss.3} parent=46 // pred_check
          %p242 = pneg %p51
        $region49: #{multi_resolution_stft_loss.3} parent=46 // pred_check_branch
          %244 = sbr.rel (%p242) target = $region51
        $region50: #{multi_resolution_stft_loss.3} parent=46 // pred_region
          _
        $region51: #{multi_resolution_stft_loss.3} parent=46 // pred_fallthru
          _
        %s245 = sand.u32 %s38, 1
        %s246 = sand.u32 %s38, 1
        %s247 = smul.addr %s246, 128
        %s248 = scalar_lea.vmem [#allocation5], %s247
        %p249 = pneg %p51
        %p250 = pneg %p48
        %p251 = pneg %p72
        %p252 = pneg %p69
        %p253 = pneg %p98
        %p254 = pneg %p95
        %p255 = scmp.lt.s32.totalorder %s20, 1
        %s256 = scalar_select %p255, %s20, 1
        %s257 = smul.addr %s256, 8
        %s258 = smul.addr %s257, 8
        %s259 = scalar_lea.vmem %s2, %s258
        %p260 = pneg %p124
        %p261 = pneg %p121
        %p262 = scmp.lt.s32.totalorder %s20, 1
        %s263 = scalar_select %p262, %s20, 1
        %s264 = smul.addr %s263, 8
        %s265 = smul.addr %s264, 8
        %s266 = scalar_lea.vmem %s3, %s265
        %p267 = pneg %p150
        %p268 = pneg %p147
        %p269 = scmp.lt.s32.totalorder %s20, 1
        %s270 = scalar_select %p269, %s20, 1
        %s271 = smul.addr %s270, 8
        %s272 = smul.addr %s271, 8
        %s273 = scalar_lea.vmem %s4, %s272
        %s274 = sadd.s32 %s20, %s21
        %s275 = smul.u32 4, %s274
        %p276 = scmp.lt.s32.totalorder %s20, 1
        %s277 = scalar_select %p276, %s20, 1
        %s278 = smul.addr %s277, 8
        %s279 = smul.addr %s278, 8
        %s280 = scalar_lea.vmem %s2, %s279
        %p281 = scmp.lt.s32.totalorder %s20, 1
        %s282 = scalar_select %p281, %s20, 1
        %s283 = smul.addr %s282, 8
        %s284 = smul.addr %s283, 8
        %s285 = scalar_lea.vmem %s3, %s284
        %p286 = scmp.lt.s32.totalorder %s20, 1
        %s287 = scalar_select %p286, %s20, 1
        %s288 = smul.addr %s287, 8
        %s289 = smul.addr %s288, 8
        %s290 = scalar_lea.vmem %s4, %s289
        %p291 = scmp.eq.s32.totalorder %s21, 0
        // Predicated region
        $region52: #{multi_resolution_stft_loss.3} parent=46 // pred_check
          %p292 = pneg %p291
        $region53: #{multi_resolution_stft_loss.3} parent=46 // pred_check_branch
          %294 = sbr.rel (%p292) target = $region55
        $region54: #{multi_resolution_stft_loss.3} parent=46 // pred_region
          %295 = vst [vmem:[#allocation2] sm:$0xff] 0.0
          %296 = vst [vmem:[#allocation2 + $0x8] sm:$0xff] 0.0
          %297 = vst [vmem:[#allocation2 + $0x10] sm:$0xff] 0.0
          %298 = vst [vmem:[#allocation2 + $0x18] sm:$0xff] 0.0
          %299 = vst [vmem:[#allocation2 + $0x20] sm:$0xff] 0.0
          %300 = vst [vmem:[#allocation2 + $0x28] sm:$0xff] 0.0
          %301 = vst [vmem:[#allocation2 + $0x30] sm:$0xff] 0.0
          %302 = vst [vmem:[#allocation2 + $0x38] sm:$0xff] 0.0
          %303 = vst [vmem:[#allocation3] sm:$0xff] 0.0
          %304 = vst [vmem:[#allocation3 + $0x8] sm:$0xff] 0.0
          %305 = vst [vmem:[#allocation3 + $0x10] sm:$0xff] 0.0
          %306 = vst [vmem:[#allocation3 + $0x18] sm:$0xff] 0.0
          %307 = vst [vmem:[#allocation3 + $0x20] sm:$0xff] 0.0
          %308 = vst [vmem:[#allocation3 + $0x28] sm:$0xff] 0.0
          %309 = vst [vmem:[#allocation3 + $0x30] sm:$0xff] 0.0
          %310 = vst [vmem:[#allocation3 + $0x38] sm:$0xff] 0.0
          %311 = vst [vmem:[#allocation4] sm:$0xff] 0.0
          %312 = vst [vmem:[#allocation4 + $0x8] sm:$0xff] 0.0
          %313 = vst [vmem:[#allocation4 + $0x10] sm:$0xff] 0.0
          %314 = vst [vmem:[#allocation4 + $0x18] sm:$0xff] 0.0
          %315 = vst [vmem:[#allocation4 + $0x20] sm:$0xff] 0.0
          %316 = vst [vmem:[#allocation4 + $0x28] sm:$0xff] 0.0
          %317 = vst [vmem:[#allocation4 + $0x30] sm:$0xff] 0.0
          %318 = vst [vmem:[#allocation4 + $0x38] sm:$0xff] 0.0
        $region55: #{multi_resolution_stft_loss.3} parent=46 // pred_fallthru
          _
        %v319 = vld [vmem:[%s241] sm:$0xff]
        %v320 = vld [vmem:[%s241 + $0x8] sm:$0xff]
        %v321 = vld [vmem:[%s241 + $0x10] sm:$0xff]
        %v322 = vld [vmem:[%s241 + $0x18] sm:$0xff]
        %v323 = vld [vmem:[%s241 + $0x20] sm:$0xff]
        %v324 = vld [vmem:[%s241 + $0x28] sm:$0xff]
        %v325 = vld [vmem:[%s241 + $0x30] sm:$0xff]
        %v326 = vld [vmem:[%s241 + $0x38] sm:$0xff]
        %v327 = vld [vmem:[%s241 + $0x40] sm:$0xff]
        %v328 = vld [vmem:[%s241 + $0x48] sm:$0xff]
        %v329 = vld [vmem:[%s241 + $0x50] sm:$0xff]
        %v330 = vld [vmem:[%s241 + $0x58] sm:$0xff]
        %v331 = vld [vmem:[%s241 + $0x60] sm:$0xff]
        %v332 = vld [vmem:[%s241 + $0x68] sm:$0xff]
        %v333 = vld [vmem:[%s241 + $0x70] sm:$0xff]
        %v334 = vld [vmem:[%s241 + $0x78] sm:$0xff]
        %v335 = vld [vmem:[%s1] sm:$0xff]
        %v336 = vld [vmem:[%s1 + $0x8] sm:$0xff]
        %v337 = vld [vmem:[%s1 + $0x10] sm:$0xff]
        %v338 = vld [vmem:[%s1 + $0x18] sm:$0xff]
        %v339 = vld [vmem:[%s1 + $0x20] sm:$0xff]
        %v340 = vld [vmem:[%s1 + $0x28] sm:$0xff]
        %v341 = vld [vmem:[%s1 + $0x30] sm:$0xff]
        %v342 = vld [vmem:[%s1 + $0x38] sm:$0xff]
        %v343 = vld [vmem:[%s1 + $0x40] sm:$0xff]
        %v344 = vld [vmem:[%s1 + $0x48] sm:$0xff]
        %v345 = vld [vmem:[%s1 + $0x50] sm:$0xff]
        %v346 = vld [vmem:[%s1 + $0x58] sm:$0xff]
        %v347 = vld [vmem:[%s1 + $0x60] sm:$0xff]
        %v348 = vld [vmem:[%s1 + $0x68] sm:$0xff]
        %v349 = vld [vmem:[%s1 + $0x70] sm:$0xff]
        %v350 = vld [vmem:[%s1 + $0x78] sm:$0xff]
        %v351 = vld [vmem:[%s1 + $0x80] sm:$0xff]
        %v352 = vld [vmem:[%s1 + $0x88] sm:$0xff]
        %v353 = vld [vmem:[%s1 + $0x90] sm:$0xff]
        %v354 = vld [vmem:[%s1 + $0x98] sm:$0xff]
        %v355 = vld [vmem:[%s1 + $0xa0] sm:$0xff]
        %v356 = vld [vmem:[%s1 + $0xa8] sm:$0xff]
        %v357 = vld [vmem:[%s1 + $0xb0] sm:$0xff]
        %v358 = vld [vmem:[%s1 + $0xb8] sm:$0xff]
        %v359 = vld [vmem:[%s1 + $0xc0] sm:$0xff]
        %v360 = vld [vmem:[%s1 + $0xc8] sm:$0xff]
        %v361 = vld [vmem:[%s1 + $0xd0] sm:$0xff]
        %v362 = vld [vmem:[%s1 + $0xd8] sm:$0xff]
        %v363 = vld [vmem:[%s1 + $0xe0] sm:$0xff]
        %v364 = vld [vmem:[%s1 + $0xe8] sm:$0xff]
        %v365 = vld [vmem:[%s1 + $0xf0] sm:$0xff]
        %v366 = vld [vmem:[%s1 + $0xf8] sm:$0xff]
        %v367 = vld [vmem:[%s1 + $0x100] sm:$0xff]
        %v368 = vld [vmem:[%s1 + $0x108] sm:$0xff]
        %v369 = vld [vmem:[%s1 + $0x110] sm:$0xff]
        %v370 = vld [vmem:[%s1 + $0x118] sm:$0xff]
        %v371 = vld [vmem:[%s1 + $0x120] sm:$0xff]
        %v372 = vld [vmem:[%s1 + $0x128] sm:$0xff]
        %v373 = vld [vmem:[%s1 + $0x130] sm:$0xff]
        %v374 = vld [vmem:[%s1 + $0x138] sm:$0xff]
        %v375 = vld [vmem:[%s1 + $0x140] sm:$0xff]
        %v376 = vld [vmem:[%s1 + $0x148] sm:$0xff]
        %v377 = vld [vmem:[%s1 + $0x150] sm:$0xff]
        %v378 = vld [vmem:[%s1 + $0x158] sm:$0xff]
        %v379 = vld [vmem:[%s1 + $0x160] sm:$0xff]
        %v380 = vld [vmem:[%s1 + $0x168] sm:$0xff]
        %v381 = vld [vmem:[%s1 + $0x170] sm:$0xff]
        %v382 = vld [vmem:[%s1 + $0x178] sm:$0xff]
        %v383 = vld [vmem:[%s1 + $0x180] sm:$0xff]
        %v384 = vld [vmem:[%s1 + $0x188] sm:$0xff]
        %v385 = vld [vmem:[%s1 + $0x190] sm:$0xff]
        %v386 = vld [vmem:[%s1 + $0x198] sm:$0xff]
        %v387 = vld [vmem:[%s1 + $0x1a0] sm:$0xff]
        %v388 = vld [vmem:[%s1 + $0x1a8] sm:$0xff]
        %v389 = vld [vmem:[%s1 + $0x1b0] sm:$0xff]
        %v390 = vld [vmem:[%s1 + $0x1b8] sm:$0xff]
        %v391 = vld [vmem:[%s1 + $0x1c0] sm:$0xff]
        %v392 = vld [vmem:[%s1 + $0x1c8] sm:$0xff]
        %v393 = vld [vmem:[%s1 + $0x1d0] sm:$0xff]
        %v394 = vld [vmem:[%s1 + $0x1d8] sm:$0xff]
        %v395 = vld [vmem:[%s1 + $0x1e0] sm:$0xff]
        %v396 = vld [vmem:[%s1 + $0x1e8] sm:$0xff]
        %v397 = vld [vmem:[%s1 + $0x1f0] sm:$0xff]
        %v398 = vld [vmem:[%s1 + $0x1f8] sm:$0xff]
        %v399 = vld [vmem:[%s1 + $0x200] sm:$0xff]
        %v400 = vld [vmem:[%s1 + $0x208] sm:$0xff]
        %v401 = vld [vmem:[%s1 + $0x210] sm:$0xff]
        %v402 = vld [vmem:[%s1 + $0x218] sm:$0xff]
        %v403 = vld [vmem:[%s1 + $0x220] sm:$0xff]
        %v404 = vld [vmem:[%s1 + $0x228] sm:$0xff]
        %v405 = vld [vmem:[%s1 + $0x230] sm:$0xff]
        %v406 = vld [vmem:[%s1 + $0x238] sm:$0xff]
        %v407 = vld [vmem:[%s1 + $0x240] sm:$0xff]
        %v408 = vld [vmem:[%s1 + $0x248] sm:$0xff]
        %v409 = vld [vmem:[%s1 + $0x250] sm:$0xff]
        %v410 = vld [vmem:[%s1 + $0x258] sm:$0xff]
        %v411 = vld [vmem:[%s1 + $0x260] sm:$0xff]
        %v412 = vld [vmem:[%s1 + $0x268] sm:$0xff]
        %v413 = vld [vmem:[%s1 + $0x270] sm:$0xff]
        %v414 = vld [vmem:[%s1 + $0x278] sm:$0xff]
        %v415 = vld [vmem:[%s1 + $0x280] sm:$0xff]
        %v416 = vld [vmem:[%s1 + $0x288] sm:$0xff]
        %v417 = vld [vmem:[%s1 + $0x290] sm:$0xff]
        %v418 = vld [vmem:[%s1 + $0x298] sm:$0xff]
        %v419 = vld [vmem:[%s1 + $0x2a0] sm:$0xff]
        %v420 = vld [vmem:[%s1 + $0x2a8] sm:$0xff]
        %v421 = vld [vmem:[%s1 + $0x2b0] sm:$0xff]
        %v422 = vld [vmem:[%s1 + $0x2b8] sm:$0xff]
        %v423 = vld [vmem:[%s1 + $0x2c0] sm:$0xff]
        %v424 = vld [vmem:[%s1 + $0x2c8] sm:$0xff]
        %v425 = vld [vmem:[%s1 + $0x2d0] sm:$0xff]
        %v426 = vld [vmem:[%s1 + $0x2d8] sm:$0xff]
        %v427 = vld [vmem:[%s1 + $0x2e0] sm:$0xff]
        %v428 = vld [vmem:[%s1 + $0x2e8] sm:$0xff]
        %v429 = vld [vmem:[%s1 + $0x2f0] sm:$0xff]
        %v430 = vld [vmem:[%s1 + $0x2f8] sm:$0xff]
        %v431 = vld [vmem:[%s1 + $0x300] sm:$0xff]
        %v432 = vld [vmem:[%s1 + $0x308] sm:$0xff]
        %v433 = vld [vmem:[%s1 + $0x310] sm:$0xff]
        %v434 = vld [vmem:[%s1 + $0x318] sm:$0xff]
        %v435 = vld [vmem:[%s1 + $0x320] sm:$0xff]
        %v436 = vld [vmem:[%s1 + $0x328] sm:$0xff]
        %v437 = vld [vmem:[%s1 + $0x330] sm:$0xff]
        %v438 = vld [vmem:[%s1 + $0x338] sm:$0xff]
        %v439 = vld [vmem:[%s1 + $0x340] sm:$0xff]
        %v440 = vld [vmem:[%s1 + $0x348] sm:$0xff]
        %v441 = vld [vmem:[%s1 + $0x350] sm:$0xff]
        %v442 = vld [vmem:[%s1 + $0x358] sm:$0xff]
        %v443 = vld [vmem:[%s1 + $0x360] sm:$0xff]
        %v444 = vld [vmem:[%s1 + $0x368] sm:$0xff]
        %v445 = vld [vmem:[%s1 + $0x370] sm:$0xff]
        %v446 = vld [vmem:[%s1 + $0x378] sm:$0xff]
        %v447 = vld [vmem:[%s1 + $0x380] sm:$0xff]
        %v448 = vld [vmem:[%s1 + $0x388] sm:$0xff]
        %v449 = vld [vmem:[%s1 + $0x390] sm:$0xff]
        %v450 = vld [vmem:[%s1 + $0x398] sm:$0xff]
        %v451 = vld [vmem:[%s1 + $0x3a0] sm:$0xff]
        %v452 = vld [vmem:[%s1 + $0x3a8] sm:$0xff]
        %v453 = vld [vmem:[%s1 + $0x3b0] sm:$0xff]
        %v454 = vld [vmem:[%s1 + $0x3b8] sm:$0xff]
        %v455 = vld [vmem:[%s1 + $0x3c0] sm:$0xff]
        %v456 = vld [vmem:[%s1 + $0x3c8] sm:$0xff]
        %v457 = vld [vmem:[%s1 + $0x3d0] sm:$0xff]
        %v458 = vld [vmem:[%s1 + $0x3d8] sm:$0xff]
        %v459 = vld [vmem:[%s1 + $0x3e0] sm:$0xff]
        %v460 = vld [vmem:[%s1 + $0x3e8] sm:$0xff]
        %v461 = vld [vmem:[%s1 + $0x3f0] sm:$0xff]
        %v462 = vld [vmem:[%s1 + $0x3f8] sm:$0xff]
        %463 = vmatpush.msra.mxu0 %v395
        %464 = vmatpush.msra.mxu0 %v391
        %465 = vmatpush.msra.mxu0 %v387
        %466 = vmatpush.msra.mxu0 %v383
        %467 = vmatpush.msra.mxu0 %v379
        %468 = vmatpush.msra.mxu0 %v375
        %469 = vmatpush.msra.mxu0 %v371
        %470 = vmatpush.msra.mxu0 %v367
        %471 = vmatpush.msra.mxu0 %v363
        %472 = vmatpush.msra.mxu0 %v359
        %473 = vmatpush.msra.mxu0 %v355
        %474 = vmatpush.msra.mxu0 %v351
        %475 = vmatpush.msra.mxu0 %v347
        %476 = vmatpush.msra.mxu0 %v343
        %477 = vmatpush.msra.mxu0 %v339
        %478 = vmatpush.msra.mxu0 %v335
        %479 = vmatmul.f32.gmra.mxu0 %v319
        %v480 = vpop.f32.mrf.mxu0
        %v481 = vadd.f32 0.0, %v480
        %482 = vmatmul.f32.gmra.mxu0 %v321
        %v483 = vpop.f32.mrf.mxu0
        %v484 = vadd.f32 0.0, %v483
        %485 = vmatmul.f32.gmra.mxu0 %v323
        %v486 = vpop.f32.mrf.mxu0
        %v487 = vadd.f32 0.0, %v486
        %488 = vmatmul.f32.gmra.mxu0 %v325
        %v489 = vpop.f32.mrf.mxu0
        %v490 = vadd.f32 0.0, %v489
        %491 = vmatmul.f32.gmra.mxu0 %v327
        %v492 = vpop.f32.mrf.mxu0
        %v493 = vadd.f32 0.0, %v492
        %494 = vmatmul.f32.gmra.mxu0 %v329
        %v495 = vpop.f32.mrf.mxu0
        %v496 = vadd.f32 0.0, %v495
        %497 = vmatmul.f32.gmra.mxu0 %v331
        %v498 = vpop.f32.mrf.mxu0
        %v499 = vadd.f32 0.0, %v498
        %500 = vmatmul.f32.gmra.mxu0 %v333
        %v501 = vpop.f32.mrf.mxu0
        %v502 = vadd.f32 0.0, %v501
        %503 = vdwg.mxu0
        %504 = vmatpush.msra.mxu0 %v459
        %505 = vmatpush.msra.mxu0 %v455
        %506 = vmatpush.msra.mxu0 %v451
        %507 = vmatpush.msra.mxu0 %v447
        %508 = vmatpush.msra.mxu0 %v443
        %509 = vmatpush.msra.mxu0 %v439
        %510 = vmatpush.msra.mxu0 %v435
        %511 = vmatpush.msra.mxu0 %v431
        %512 = vmatpush.msra.mxu0 %v427
        %513 = vmatpush.msra.mxu0 %v423
        %514 = vmatpush.msra.mxu0 %v419
        %515 = vmatpush.msra.mxu0 %v415
        %516 = vmatpush.msra.mxu0 %v411
        %517 = vmatpush.msra.mxu0 %v407
        %518 = vmatpush.msra.mxu0 %v403
        %519 = vmatpush.msra.mxu0 %v399
        %520 = vmatmul.f32.gmra.mxu0 %v320
        %v521 = vpop.f32.mrf.mxu0
        %v522 = vadd.f32 %v481, %v521
        %523 = vmatmul.f32.gmra.mxu0 %v322
        %v524 = vpop.f32.mrf.mxu0
        %v525 = vadd.f32 %v484, %v524
        %526 = vmatmul.f32.gmra.mxu0 %v324
        %v527 = vpop.f32.mrf.mxu0
        %v528 = vadd.f32 %v487, %v527
        %529 = vmatmul.f32.gmra.mxu0 %v326
        %v530 = vpop.f32.mrf.mxu0
        %v531 = vadd.f32 %v490, %v530
        %532 = vmatmul.f32.gmra.mxu0 %v328
        %v533 = vpop.f32.mrf.mxu0
        %v534 = vadd.f32 %v493, %v533
        %535 = vmatmul.f32.gmra.mxu0 %v330
        %v536 = vpop.f32.mrf.mxu0
        %v537 = vadd.f32 %v496, %v536
        %538 = vmatmul.f32.gmra.mxu0 %v332
        %v539 = vpop.f32.mrf.mxu0
        %v540 = vadd.f32 %v499, %v539
        %541 = vmatmul.f32.gmra.mxu0 %v334
        %v542 = vpop.f32.mrf.mxu0
        %v543 = vadd.f32 %v502, %v542
        %544 = vdwg.mxu0
        %545 = vmatpush.msra.mxu0 %v396
        %546 = vmatpush.msra.mxu0 %v392
        %547 = vmatpush.msra.mxu0 %v388
        %548 = vmatpush.msra.mxu0 %v384
        %549 = vmatpush.msra.mxu0 %v380
        %550 = vmatpush.msra.mxu0 %v376
        %551 = vmatpush.msra.mxu0 %v372
        %552 = vmatpush.msra.mxu0 %v368
        %553 = vmatpush.msra.mxu0 %v364
        %554 = vmatpush.msra.mxu0 %v360
        %555 = vmatpush.msra.mxu0 %v356
        %556 = vmatpush.msra.mxu0 %v352
        %557 = vmatpush.msra.mxu0 %v348
        %558 = vmatpush.msra.mxu0 %v344
        %559 = vmatpush.msra.mxu0 %v340
        %560 = vmatpush.msra.mxu0 %v336
        %561 = vmatmul.f32.gmra.mxu0 %v319
        %v562 = vpop.f32.mrf.mxu0
        %v563 = vadd.f32 0.0, %v562
        %564 = vmatmul.f32.gmra.mxu0 %v321
        %v565 = vpop.f32.mrf.mxu0
        %v566 = vadd.f32 0.0, %v565
        %567 = vmatmul.f32.gmra.mxu0 %v323
        %v568 = vpop.f32.mrf.mxu0
        %v569 = vadd.f32 0.0, %v568
        %570 = vmatmul.f32.gmra.mxu0 %v325
        %v571 = vpop.f32.mrf.mxu0
        %v572 = vadd.f32 0.0, %v571
        %573 = vmatmul.f32.gmra.mxu0 %v327
        %v574 = vpop.f32.mrf.mxu0
        %v575 = vadd.f32 0.0, %v574
        %576 = vmatmul.f32.gmra.mxu0 %v329
        %v577 = vpop.f32.mrf.mxu0
        %v578 = vadd.f32 0.0, %v577
        %579 = vmatmul.f32.gmra.mxu0 %v331
        %v580 = vpop.f32.mrf.mxu0
        %v581 = vadd.f32 0.0, %v580
        %582 = vmatmul.f32.gmra.mxu0 %v333
        %v583 = vpop.f32.mrf.mxu0
        %v584 = vadd.f32 0.0, %v583
        %585 = vdwg.mxu0
        %586 = vmatpush.msra.mxu0 %v460
        %587 = vmatpush.msra.mxu0 %v456
        %588 = vmatpush.msra.mxu0 %v452
        %589 = vmatpush.msra.mxu0 %v448
        %590 = vmatpush.msra.mxu0 %v444
        %591 = vmatpush.msra.mxu0 %v440
        %592 = vmatpush.msra.mxu0 %v436
        %593 = vmatpush.msra.mxu0 %v432
        %594 = vmatpush.msra.mxu0 %v428
        %595 = vmatpush.msra.mxu0 %v424
        %596 = vmatpush.msra.mxu0 %v420
        %597 = vmatpush.msra.mxu0 %v416
        %598 = vmatpush.msra.mxu0 %v412
        %599 = vmatpush.msra.mxu0 %v408
        %600 = vmatpush.msra.mxu0 %v404
        %601 = vmatpush.msra.mxu0 %v400
        %602 = vmatmul.f32.gmra.mxu0 %v320
        %v603 = vpop.f32.mrf.mxu0
        %v604 = vadd.f32 %v563, %v603
        %605 = vmatmul.f32.gmra.mxu0 %v322
        %v606 = vpop.f32.mrf.mxu0
        %v607 = vadd.f32 %v566, %v606
        %608 = vmatmul.f32.gmra.mxu0 %v324
        %v609 = vpop.f32.mrf.mxu0
        %v610 = vadd.f32 %v569, %v609
        %611 = vmatmul.f32.gmra.mxu0 %v326
        %v612 = vpop.f32.mrf.mxu0
        %v613 = vadd.f32 %v572, %v612
        %614 = vmatmul.f32.gmra.mxu0 %v328
        %v615 = vpop.f32.mrf.mxu0
        %v616 = vadd.f32 %v575, %v615
        %617 = vmatmul.f32.gmra.mxu0 %v330
        %v618 = vpop.f32.mrf.mxu0
        %v619 = vadd.f32 %v578, %v618
        %620 = vmatmul.f32.gmra.mxu0 %v332
        %v621 = vpop.f32.mrf.mxu0
        %v622 = vadd.f32 %v581, %v621
        %623 = vmatmul.f32.gmra.mxu0 %v334
        %v624 = vpop.f32.mrf.mxu0
        %v625 = vadd.f32 %v584, %v624
        %626 = vdwg.mxu0
        %627 = vmatpush.msra.mxu0 %v397
        %628 = vmatpush.msra.mxu0 %v393
        %629 = vmatpush.msra.mxu0 %v389
        %630 = vmatpush.msra.mxu0 %v385
        %631 = vmatpush.msra.mxu0 %v381
        %632 = vmatpush.msra.mxu0 %v377
        %633 = vmatpush.msra.mxu0 %v373
        %634 = vmatpush.msra.mxu0 %v369
        %635 = vmatpush.msra.mxu0 %v365
        %636 = vmatpush.msra.mxu0 %v361
        %637 = vmatpush.msra.mxu0 %v357
        %638 = vmatpush.msra.mxu0 %v353
        %639 = vmatpush.msra.mxu0 %v349
        %640 = vmatpush.msra.mxu0 %v345
        %641 = vmatpush.msra.mxu0 %v341
        %642 = vmatpush.msra.mxu0 %v337
        %643 = vmatmul.f32.gmra.mxu0 %v319
        %v644 = vpop.f32.mrf.mxu0
        %v645 = vadd.f32 0.0, %v644
        %646 = vmatmul.f32.gmra.mxu0 %v321
        %v647 = vpop.f32.mrf.mxu0
        %v648 = vadd.f32 0.0, %v647
        %649 = vmatmul.f32.gmra.mxu0 %v323
        %v650 = vpop.f32.mrf.mxu0
        %v651 = vadd.f32 0.0, %v650
        %652 = vmatmul.f32.gmra.mxu0 %v325
        %v653 = vpop.f32.mrf.mxu0
        %v654 = vadd.f32 0.0, %v653
        %655 = vmatmul.f32.gmra.mxu0 %v327
        %v656 = vpop.f32.mrf.mxu0
        %v657 = vadd.f32 0.0, %v656
        %658 = vmatmul.f32.gmra.mxu0 %v329
        %v659 = vpop.f32.mrf.mxu0
        %v660 = vadd.f32 0.0, %v659
        %661 = vmatmul.f32.gmra.mxu0 %v331
        %v662 = vpop.f32.mrf.mxu0
        %v663 = vadd.f32 0.0, %v662
        %664 = vmatmul.f32.gmra.mxu0 %v333
        %v665 = vpop.f32.mrf.mxu0
        %v666 = vadd.f32 0.0, %v665
        %667 = vdwg.mxu0
        %668 = vmatpush.msra.mxu0 %v461
        %669 = vmatpush.msra.mxu0 %v457
        %670 = vmatpush.msra.mxu0 %v453
        %671 = vmatpush.msra.mxu0 %v449
        %672 = vmatpush.msra.mxu0 %v445
        %673 = vmatpush.msra.mxu0 %v441
        %674 = vmatpush.msra.mxu0 %v437
        %675 = vmatpush.msra.mxu0 %v433
        %676 = vmatpush.msra.mxu0 %v429
        %677 = vmatpush.msra.mxu0 %v425
        %678 = vmatpush.msra.mxu0 %v421
        %679 = vmatpush.msra.mxu0 %v417
        %680 = vmatpush.msra.mxu0 %v413
        %681 = vmatpush.msra.mxu0 %v409
        %682 = vmatpush.msra.mxu0 %v405
        %683 = vmatpush.msra.mxu0 %v401
        %684 = vmatmul.f32.gmra.mxu0 %v320
        %v685 = vpop.f32.mrf.mxu0
        %v686 = vadd.f32 %v645, %v685
        %687 = vmatmul.f32.gmra.mxu0 %v322
        %v688 = vpop.f32.mrf.mxu0
        %v689 = vadd.f32 %v648, %v688
        %690 = vmatmul.f32.gmra.mxu0 %v324
        %v691 = vpop.f32.mrf.mxu0
        %v692 = vadd.f32 %v651, %v691
        %693 = vmatmul.f32.gmra.mxu0 %v326
        %v694 = vpop.f32.mrf.mxu0
        %v695 = vadd.f32 %v654, %v694
        %696 = vmatmul.f32.gmra.mxu0 %v328
        %v697 = vpop.f32.mrf.mxu0
        %v698 = vadd.f32 %v657, %v697
        %699 = vmatmul.f32.gmra.mxu0 %v330
        %v700 = vpop.f32.mrf.mxu0
        %v701 = vadd.f32 %v660, %v700
        %702 = vmatmul.f32.gmra.mxu0 %v332
        %v703 = vpop.f32.mrf.mxu0
        %v704 = vadd.f32 %v663, %v703
        %705 = vmatmul.f32.gmra.mxu0 %v334
        %v706 = vpop.f32.mrf.mxu0
        %v707 = vadd.f32 %v666, %v706
        %708 = vdwg.mxu0
        %709 = vmatpush.msra.mxu0 %v398
        %710 = vmatpush.msra.mxu0 %v394
        %711 = vmatpush.msra.mxu0 %v390
        %712 = vmatpush.msra.mxu0 %v386
        %713 = vmatpush.msra.mxu0 %v382
        %714 = vmatpush.msra.mxu0 %v378
        %715 = vmatpush.msra.mxu0 %v374
        %716 = vmatpush.msra.mxu0 %v370
        %717 = vmatpush.msra.mxu0 %v366
        %718 = vmatpush.msra.mxu0 %v362
        %719 = vmatpush.msra.mxu0 %v358
        %720 = vmatpush.msra.mxu0 %v354
        %721 = vmatpush.msra.mxu0 %v350
        %722 = vmatpush.msra.mxu0 %v346
        %723 = vmatpush.msra.mxu0 %v342
        %724 = vmatpush.msra.mxu0 %v338
        %725 = vmatmul.f32.gmra.mxu0 %v319
        %v726 = vpop.f32.mrf.mxu0
        %v727 = vadd.f32 0.0, %v726
        %728 = vmatmul.f32.gmra.mxu0 %v321
        %v729 = vpop.f32.mrf.mxu0
        %v730 = vadd.f32 0.0, %v729
        %731 = vmatmul.f32.gmra.mxu0 %v323
        %v732 = vpop.f32.mrf.mxu0
        %v733 = vadd.f32 0.0, %v732
        %734 = vmatmul.f32.gmra.mxu0 %v325
        %v735 = vpop.f32.mrf.mxu0
        %v736 = vadd.f32 0.0, %v735
        %737 = vmatmul.f32.gmra.mxu0 %v327
        %v738 = vpop.f32.mrf.mxu0
        %v739 = vadd.f32 0.0, %v738
        %740 = vmatmul.f32.gmra.mxu0 %v329
        %v741 = vpop.f32.mrf.mxu0
        %v742 = vadd.f32 0.0, %v741
        %743 = vmatmul.f32.gmra.mxu0 %v331
        %v744 = vpop.f32.mrf.mxu0
        %v745 = vadd.f32 0.0, %v744
        %746 = vmatmul.f32.gmra.mxu0 %v333
        %v747 = vpop.f32.mrf.mxu0
        %v748 = vadd.f32 0.0, %v747
        %749 = vdwg.mxu0
        %750 = vmatpush.msra.mxu0 %v462
        %751 = vmatpush.msra.mxu0 %v458
        %752 = vmatpush.msra.mxu0 %v454
        %753 = vmatpush.msra.mxu0 %v450
        %754 = vmatpush.msra.mxu0 %v446
        %755 = vmatpush.msra.mxu0 %v442
        %756 = vmatpush.msra.mxu0 %v438
        %757 = vmatpush.msra.mxu0 %v434
        %758 = vmatpush.msra.mxu0 %v430
        %759 = vmatpush.msra.mxu0 %v426
        %760 = vmatpush.msra.mxu0 %v422
        %761 = vmatpush.msra.mxu0 %v418
        %762 = vmatpush.msra.mxu0 %v414
        %763 = vmatpush.msra.mxu0 %v410
        %764 = vmatpush.msra.mxu0 %v406
        %765 = vmatpush.msra.mxu0 %v402
        %766 = vmatmul.f32.gmra.mxu0 %v320
        %v767 = vpop.f32.mrf.mxu0
        %v768 = vadd.f32 %v727, %v767
        %769 = vmatmul.f32.gmra.mxu0 %v322
        %v770 = vpop.f32.mrf.mxu0
        %v771 = vadd.f32 %v730, %v770
        %772 = vmatmul.f32.gmra.mxu0 %v324
        %v773 = vpop.f32.mrf.mxu0
        %v774 = vadd.f32 %v733, %v773
        %775 = vmatmul.f32.gmra.mxu0 %v326
        %v776 = vpop.f32.mrf.mxu0
        %v777 = vadd.f32 %v736, %v776
        %778 = vmatmul.f32.gmra.mxu0 %v328
        %v779 = vpop.f32.mrf.mxu0
        %v780 = vadd.f32 %v739, %v779
        %781 = vmatmul.f32.gmra.mxu0 %v330
        %v782 = vpop.f32.mrf.mxu0
        %v783 = vadd.f32 %v742, %v782
        %784 = vmatmul.f32.gmra.mxu0 %v332
        %v785 = vpop.f32.mrf.mxu0
        %v786 = vadd.f32 %v745, %v785
        %787 = vmatmul.f32.gmra.mxu0 %v334
        %v788 = vpop.f32.mrf.mxu0
        %v789 = vadd.f32 %v748, %v788
        %790 = vdwg.mxu0
        %v791 = vmul.f32 %v522, %v522
        %v792 = vmul.f32 %v604, %v604
        %v793 = vmul.f32 %v525, %v525
        %v794 = vmul.f32 %v607, %v607
        %v795 = vmul.f32 %v528, %v528
        %v796 = vmul.f32 %v610, %v610
        %v797 = vmul.f32 %v531, %v531
        %v798 = vmul.f32 %v613, %v613
        %v799 = vmul.f32 %v686, %v686
        %v800 = vmul.f32 %v768, %v768
        %v801 = vmul.f32 %v689, %v689
        %v802 = vmul.f32 %v771, %v771
        %v803 = vmul.f32 %v692, %v692
        %v804 = vmul.f32 %v774, %v774
        %v805 = vmul.f32 %v695, %v695
        %v806 = vmul.f32 %v777, %v777
        %v807 = vadd.f32 %v791, %v799
        %v808 = vadd.f32 %v792, %v800
        %v809 = vadd.f32 %v793, %v801
        %v810 = vadd.f32 %v794, %v802
        %v811 = vadd.f32 %v795, %v803
        %v812 = vadd.f32 %v796, %v804
        %v813 = vadd.f32 %v797, %v805
        %v814 = vadd.f32 %v798, %v806
        %v815 = vmul.f32 %v534, %v534
        %v816 = vmul.f32 %v616, %v616
        %v817 = vmul.f32 %v537, %v537
        %v818 = vmul.f32 %v619, %v619
        %v819 = vmul.f32 %v540, %v540
        %v820 = vmul.f32 %v622, %v622
        %v821 = vmul.f32 %v543, %v543
        %v822 = vmul.f32 %v625, %v625
        %v823 = vmul.f32 %v698, %v698
        %v824 = vmul.f32 %v780, %v780
        %v825 = vmul.f32 %v701, %v701
        %v826 = vmul.f32 %v783, %v783
        %v827 = vmul.f32 %v704, %v704
        %v828 = vmul.f32 %v786, %v786
        %v829 = vmul.f32 %v707, %v707
        %v830 = vmul.f32 %v789, %v789
        %v831 = vadd.f32 %v815, %v823
        %v832 = vadd.f32 %v816, %v824
        %v833 = vadd.f32 %v817, %v825
        %v834 = vadd.f32 %v818, %v826
        %v835 = vadd.f32 %v819, %v827
        %v836 = vadd.f32 %v820, %v828
        %v837 = vadd.f32 %v821, %v829
        %v838 = vadd.f32 %v822, %v830
        %v839 = vmul.f32 %v807, %v831
        %v840 = vmul.f32 %v808, %v832
        %v841 = vmul.f32 %v809, %v833
        %v842 = vmul.f32 %v810, %v834
        %v843 = vmul.f32 %v811, %v835
        %v844 = vmul.f32 %v812, %v836
        %v845 = vmul.f32 %v813, %v837
        %v846 = vmul.f32 %v814, %v838
        %v847 = vrsqrt.pop %v839
        %v848 = vmul.f32 %v847, %v839
        %v849 = vmul.f32 %v848, %v847
        %v850 = vmul.f32 0.5, %v849
        %v851 = vsub.f32 1.5, %v850
        %v852 = vmul.f32 %v847, %v851
        %v853 = vmul.f32 %v839, %v852
        %vm854 = vcmp.eq.f32.partialorder %v839, inf
        %v855 = vsel %vm854, %v839, %v853
        %vm856 = vcmp.eq.f32.partialorder %v839, 0.0
        %v857 = vand.u32 %v839, 2147483648
        %v858 = vsel %vm856, %v857, %v855
        %v859 = vrsqrt.pop %v840
        %v860 = vmul.f32 %v859, %v840
        %v861 = vmul.f32 %v860, %v859
        %v862 = vmul.f32 0.5, %v861
        %v863 = vsub.f32 1.5, %v862
        %v864 = vmul.f32 %v859, %v863
        %v865 = vmul.f32 %v840, %v864
        %vm866 = vcmp.eq.f32.partialorder %v840, inf
        %v867 = vsel %vm866, %v840, %v865
        %vm868 = vcmp.eq.f32.partialorder %v840, 0.0
        %v869 = vand.u32 %v840, 2147483648
        %v870 = vsel %vm868, %v869, %v867
        %v871 = vrsqrt.pop %v841
        %v872 = vmul.f32 %v871, %v841
        %v873 = vmul.f32 %v872, %v871
        %v874 = vmul.f32 0.5, %v873
        %v875 = vsub.f32 1.5, %v874
        %v876 = vmul.f32 %v871, %v875
        %v877 = vmul.f32 %v841, %v876
        %vm878 = vcmp.eq.f32.partialorder %v841, inf
        %v879 = vsel %vm878, %v841, %v877
        %vm880 = vcmp.eq.f32.partialorder %v841, 0.0
        %v881 = vand.u32 %v841, 2147483648
        %v882 = vsel %vm880, %v881, %v879
        %v883 = vrsqrt.pop %v842
        %v884 = vmul.f32 %v883, %v842
        %v885 = vmul.f32 %v884, %v883
        %v886 = vmul.f32 0.5, %v885
        %v887 = vsub.f32 1.5, %v886
        %v888 = vmul.f32 %v883, %v887
        %v889 = vmul.f32 %v842, %v888
        %vm890 = vcmp.eq.f32.partialorder %v842, inf
        %v891 = vsel %vm890, %v842, %v889
        %vm892 = vcmp.eq.f32.partialorder %v842, 0.0
        %v893 = vand.u32 %v842, 2147483648
        %v894 = vsel %vm892, %v893, %v891
        %v895 = vrsqrt.pop %v843
        %v896 = vmul.f32 %v895, %v843
        %v897 = vmul.f32 %v896, %v895
        %v898 = vmul.f32 0.5, %v897
        %v899 = vsub.f32 1.5, %v898
        %v900 = vmul.f32 %v895, %v899
        %v901 = vmul.f32 %v843, %v900
        %vm902 = vcmp.eq.f32.partialorder %v843, inf
        %v903 = vsel %vm902, %v843, %v901
        %vm904 = vcmp.eq.f32.partialorder %v843, 0.0
        %v905 = vand.u32 %v843, 2147483648
        %v906 = vsel %vm904, %v905, %v903
        %v907 = vrsqrt.pop %v844
        %v908 = vmul.f32 %v907, %v844
        %v909 = vmul.f32 %v908, %v907
        %v910 = vmul.f32 0.5, %v909
        %v911 = vsub.f32 1.5, %v910
        %v912 = vmul.f32 %v907, %v911
        %v913 = vmul.f32 %v844, %v912
        %vm914 = vcmp.eq.f32.partialorder %v844, inf
        %v915 = vsel %vm914, %v844, %v913
        %vm916 = vcmp.eq.f32.partialorder %v844, 0.0
        %v917 = vand.u32 %v844, 2147483648
        %v918 = vsel %vm916, %v917, %v915
        %v919 = vrsqrt.pop %v845
        %v920 = vmul.f32 %v919, %v845
        %v921 = vmul.f32 %v920, %v919
        %v922 = vmul.f32 0.5, %v921
        %v923 = vsub.f32 1.5, %v922
        %v924 = vmul.f32 %v919, %v923
        %v925 = vmul.f32 %v845, %v924
        %vm926 = vcmp.eq.f32.partialorder %v845, inf
        %v927 = vsel %vm926, %v845, %v925
        %vm928 = vcmp.eq.f32.partialorder %v845, 0.0
        %v929 = vand.u32 %v845, 2147483648
        %v930 = vsel %vm928, %v929, %v927
        %v931 = vrsqrt.pop %v846
        %v932 = vmul.f32 %v931, %v846
        %v933 = vmul.f32 %v932, %v931
        %v934 = vmul.f32 0.5, %v933
        %v935 = vsub.f32 1.5, %v934
        %v936 = vmul.f32 %v931, %v935
        %v937 = vmul.f32 %v846, %v936
        %vm938 = vcmp.eq.f32.partialorder %v846, inf
        %v939 = vsel %vm938, %v846, %v937
        %vm940 = vcmp.eq.f32.partialorder %v846, 0.0
        %v941 = vand.u32 %v846, 2147483648
        %v942 = vsel %vm940, %v941, %v939
        %v943 = vld [vmem:[#allocation2] sm:$0xff]
        %v944 = vld [vmem:[#allocation2 + $0x8] sm:$0xff]
        %v945 = vld [vmem:[#allocation2 + $0x10] sm:$0xff]
        %v946 = vld [vmem:[#allocation2 + $0x18] sm:$0xff]
        %v947 = vld [vmem:[#allocation2 + $0x20] sm:$0xff]
        %v948 = vld [vmem:[#allocation2 + $0x28] sm:$0xff]
        %v949 = vld [vmem:[#allocation2 + $0x30] sm:$0xff]
        %v950 = vld [vmem:[#allocation2 + $0x38] sm:$0xff]
        %v951 = vadd.f32 %v831, %v807
        %v952 = vadd.f32 %v832, %v808
        %v953 = vadd.f32 %v833, %v809
        %v954 = vadd.f32 %v834, %v810
        %v955 = vadd.f32 %v835, %v811
        %v956 = vadd.f32 %v836, %v812
        %v957 = vadd.f32 %v837, %v813
        %v958 = vadd.f32 %v838, %v814
        %v959 = vmul.f32 %v858, 2.0
        %v960 = vmul.f32 %v870, 2.0
        %v961 = vmul.f32 %v882, 2.0
        %v962 = vmul.f32 %v894, 2.0
        %v963 = vmul.f32 %v906, 2.0
        %v964 = vmul.f32 %v918, 2.0
        %v965 = vmul.f32 %v930, 2.0
        %v966 = vmul.f32 %v942, 2.0
        %v967 = vsub.f32 %v951, %v959
        %v968 = vsub.f32 %v952, %v960
        %v969 = vsub.f32 %v953, %v961
        %v970 = vsub.f32 %v954, %v962
        %v971 = vsub.f32 %v955, %v963
        %v972 = vsub.f32 %v956, %v964
        %v973 = vsub.f32 %v957, %v965
        %v974 = vsub.f32 %v958, %v966
        %v975 = vmax.f32 %v967, 0.0
        %v976 = vmax.f32 %v968, 0.0
        %v977 = vmax.f32 %v969, 0.0
        %v978 = vmax.f32 %v970, 0.0
        %v979 = vmax.f32 %v971, 0.0
        %v980 = vmax.f32 %v972, 0.0
        %v981 = vmax.f32 %v973, 0.0
        %v982 = vmax.f32 %v974, 0.0
        %v983 = vadd.f32 %v943, %v975
        %v984 = vadd.f32 %v944, %v976
        %v985 = vadd.f32 %v945, %v977
        %v986 = vadd.f32 %v946, %v978
        %v987 = vadd.f32 %v947, %v979
        %v988 = vadd.f32 %v948, %v980
        %v989 = vadd.f32 %v949, %v981
        %v990 = vadd.f32 %v950, %v982
        %991 = vst [vmem:[#allocation2] sm:$0xff] %v983
        %992 = vst [vmem:[#allocation2 + $0x8] sm:$0xff] %v984
        %993 = vst [vmem:[#allocation2 + $0x10] sm:$0xff] %v985
        %994 = vst [vmem:[#allocation2 + $0x18] sm:$0xff] %v986
        %995 = vst [vmem:[#allocation2 + $0x20] sm:$0xff] %v987
        %996 = vst [vmem:[#allocation2 + $0x28] sm:$0xff] %v988
        %997 = vst [vmem:[#allocation2 + $0x30] sm:$0xff] %v989
        %998 = vst [vmem:[#allocation2 + $0x38] sm:$0xff] %v990
        %v999 = vld [vmem:[#allocation3] sm:$0xff]
        %v1000 = vld [vmem:[#allocation3 + $0x8] sm:$0xff]
        %v1001 = vld [vmem:[#allocation3 + $0x10] sm:$0xff]
        %v1002 = vld [vmem:[#allocation3 + $0x18] sm:$0xff]
        %v1003 = vld [vmem:[#allocation3 + $0x20] sm:$0xff]
        %v1004 = vld [vmem:[#allocation3 + $0x28] sm:$0xff]
        %v1005 = vld [vmem:[#allocation3 + $0x30] sm:$0xff]
        %v1006 = vld [vmem:[#allocation3 + $0x38] sm:$0xff]
        %v1007 = vadd.f32 %v999, %v831
        %v1008 = vadd.f32 %v1000, %v832
        %v1009 = vadd.f32 %v1001, %v833
        %v1010 = vadd.f32 %v1002, %v834
        %v1011 = vadd.f32 %v1003, %v835
        %v1012 = vadd.f32 %v1004, %v836
        %v1013 = vadd.f32 %v1005, %v837
        %v1014 = vadd.f32 %v1006, %v838
        %1015 = vst [vmem:[#allocation3] sm:$0xff] %v1007
        %1016 = vst [vmem:[#allocation3 + $0x8] sm:$0xff] %v1008
        %1017 = vst [vmem:[#allocation3 + $0x10] sm:$0xff] %v1009
        %1018 = vst [vmem:[#allocation3 + $0x18] sm:$0xff] %v1010
        %1019 = vst [vmem:[#allocation3 + $0x20] sm:$0xff] %v1011
        %1020 = vst [vmem:[#allocation3 + $0x28] sm:$0xff] %v1012
        %1021 = vst [vmem:[#allocation3 + $0x30] sm:$0xff] %v1013
        %1022 = vst [vmem:[#allocation3 + $0x38] sm:$0xff] %v1014
        %v1023 = vmax.f32 %v807, 1e-24
        %v1024 = vmax.f32 %v808, 1e-24
        %v1025 = vmax.f32 %v809, 1e-24
        %v1026 = vmax.f32 %v810, 1e-24
        %v1027 = vmax.f32 %v811, 1e-24
        %v1028 = vmax.f32 %v812, 1e-24
        %v1029 = vmax.f32 %v813, 1e-24
        %v1030 = vmax.f32 %v814, 1e-24
        %v1031 = vmax.f32 %v831, 1e-24
        %v1032 = vmax.f32 %v832, 1e-24
        %v1033 = vmax.f32 %v833, 1e-24
        %v1034 = vmax.f32 %v834, 1e-24
        %v1035 = vmax.f32 %v835, 1e-24
        %v1036 = vmax.f32 %v836, 1e-24
        %v1037 = vmax.f32 %v837, 1e-24
        %v1038 = vmax.f32 %v838, 1e-24
        %v1039 = vld [vmem:[#allocation4] sm:$0xff]
        %v1040 = vld [vmem:[#allocation4 + $0x8] sm:$0xff]
        %v1041 = vld [vmem:[#allocation4 + $0x10] sm:$0xff]
        %v1042 = vld [vmem:[#allocation4 + $0x18] sm:$0xff]
        %v1043 = vld [vmem:[#allocation4 + $0x20] sm:$0xff]
        %v1044 = vld [vmem:[#allocation4 + $0x28] sm:$0xff]
        %v1045 = vld [vmem:[#allocation4 + $0x30] sm:$0xff]
        %v1046 = vld [vmem:[#allocation4 + $0x38] sm:$0xff]
        %v1047 = vrcp.pop %v1031
        %v1048 = vmul.f32 %v1031, %v1047
        %v1049 = vsub.f32 1.0, %v1048
        %v1050 = vmul.f32 %v1047, %v1049
        %v1051 = vadd.f32 %v1047, %v1050
        %vm1052 = vweird.f32 %v1031
        %vm1053 = vweird.f32 %v1047
        %vm1054 = vmor %vm1052, %vm1053
        %v1055 = vsel %vm1054, %v1047, %v1051
        %v1056 = vand.u32 2147483647, %v1031
        %vm1057 = vcmp.eq.f32.partialorder %v1056, 8.507059e+37
        %v1058 = vand.u32 %v1031, 2147483648
        %v1059 = vor.u32 1.1754944e-38, %v1058
        %v1060 = vsel %vm1057, %v1059, %v1055
        %v1061 = vmul.f32 %v1023, %v1060
        %v1062 = vrcp.pop %v1032
        %v1063 = vmul.f32 %v1032, %v1062
        %v1064 = vsub.f32 1.0, %v1063
        %v1065 = vmul.f32 %v1062, %v1064
        %v1066 = vadd.f32 %v1062, %v1065
        %vm1067 = vweird.f32 %v1032
        %vm1068 = vweird.f32 %v1062
        %vm1069 = vmor %vm1067, %vm1068
        %v1070 = vsel %vm1069, %v1062, %v1066
        %v1071 = vand.u32 2147483647, %v1032
        %vm1072 = vcmp.eq.f32.partialorder %v1071, 8.507059e+37
        %v1073 = vand.u32 %v1032, 2147483648
        %v1074 = vor.u32 1.1754944e-38, %v1073
        %v1075 = vsel %vm1072, %v1074, %v1070
        %v1076 = vmul.f32 %v1024, %v1075
        %v1077 = vrcp.pop %v1033
        %v1078 = vmul.f32 %v1033, %v1077
        %v1079 = vsub.f32 1.0, %v1078
        %v1080 = vmul.f32 %v1077, %v1079
        %v1081 = vadd.f32 %v1077, %v1080
        %vm1082 = vweird.f32 %v1033
        %vm1083 = vweird.f32 %v1077
        %vm1084 = vmor %vm1082, %vm1083
        %v1085 = vsel %vm1084, %v1077, %v1081
        %v1086 = vand.u32 2147483647, %v1033
        %vm1087 = vcmp.eq.f32.partialorder %v1086, 8.507059e+37
        %v1088 = vand.u32 %v1033, 2147483648
        %v1089 = vor.u32 1.1754944e-38, %v1088
        %v1090 = vsel %vm1087, %v1089, %v1085
        %v1091 = vmul.f32 %v1025, %v1090
        %v1092 = vrcp.pop %v1034
        %v1093 = vmul.f32 %v1034, %v1092
        %v1094 = vsub.f32 1.0, %v1093
        %v1095 = vmul.f32 %v1092, %v1094
        %v1096 = vadd.f32 %v1092, %v1095
        %vm1097 = vweird.f32 %v1034
        %vm1098 = vweird.f32 %v1092
        %vm1099 = vmor %vm1097, %vm1098
        %v1100 = vsel %vm1099, %v1092, %v1096
        %v1101 = vand.u32 2147483647, %v1034
        %vm1102 = vcmp.eq.f32.partialorder %v1101, 8.507059e+37
        %v1103 = vand.u32 %v1034, 2147483648
        %v1104 = vor.u32 1.1754944e-38, %v1103
        %v1105 = vsel %vm1102, %v1104, %v1100
        %v1106 = vmul.f32 %v1026, %v1105
        %v1107 = vrcp.pop %v1035
        %v1108 = vmul.f32 %v1035, %v1107
        %v1109 = vsub.f32 1.0, %v1108
        %v1110 = vmul.f32 %v1107, %v1109
        %v1111 = vadd.f32 %v1107, %v1110
        %vm1112 = vweird.f32 %v1035
        %vm1113 = vweird.f32 %v1107
        %vm1114 = vmor %vm1112, %vm1113
        %v1115 = vsel %vm1114, %v1107, %v1111
        %v1116 = vand.u32 2147483647, %v1035
        %vm1117 = vcmp.eq.f32.partialorder %v1116, 8.507059e+37
        %v1118 = vand.u32 %v1035, 2147483648
        %v1119 = vor.u32 1.1754944e-38, %v1118
        %v1120 = vsel %vm1117, %v1119, %v1115
        %v1121 = vmul.f32 %v1027, %v1120
        %v1122 = vrcp.pop %v1036
        %v1123 = vmul.f32 %v1036, %v1122
        %v1124 = vsub.f32 1.0, %v1123
        %v1125 = vmul.f32 %v1122, %v1124
        %v1126 = vadd.f32 %v1122, %v1125
        %vm1127 = vweird.f32 %v1036
        %vm1128 = vweird.f32 %v1122
        %vm1129 = vmor %vm1127, %vm1128
        %v1130 = vsel %vm1129, %v1122, %v1126
        %v1131 = vand.u32 2147483647, %v1036
        %vm1132 = vcmp.eq.f32.partialorder %v1131, 8.507059e+37
        %v1133 = vand.u32 %v1036, 2147483648
        %v1134 = vor.u32 1.1754944e-38, %v1133
        %v1135 = vsel %vm1132, %v1134, %v1130
        %v1136 = vmul.f32 %v1028, %v1135
        %v1137 = vrcp.pop %v1037
        %v1138 = vmul.f32 %v1037, %v1137
        %v1139 = vsub.f32 1.0, %v1138
        %v1140 = vmul.f32 %v1137, %v1139
        %v1141 = vadd.f32 %v1137, %v1140
        %vm1142 = vweird.f32 %v1037
        %vm1143 = vweird.f32 %v1137
        %vm1144 = vmor %vm1142, %vm1143
        %v1145 = vsel %vm1144, %v1137, %v1141
        %v1146 = vand.u32 2147483647, %v1037
        %vm1147 = vcmp.eq.f32.partialorder %v1146, 8.507059e+37
        %v1148 = vand.u32 %v1037, 2147483648
        %v1149 = vor.u32 1.1754944e-38, %v1148
        %v1150 = vsel %vm1147, %v1149, %v1145
        %v1151 = vmul.f32 %v1029, %v1150
        %v1152 = vrcp.pop %v1038
        %v1153 = vmul.f32 %v1038, %v1152
        %v1154 = vsub.f32 1.0, %v1153
        %v1155 = vmul.f32 %v1152, %v1154
        %v1156 = vadd.f32 %v1152, %v1155
        %vm1157 = vweird.f32 %v1038
        %vm1158 = vweird.f32 %v1152
        %vm1159 = vmor %vm1157, %vm1158
        %v1160 = vsel %vm1159, %v1152, %v1156
        %v1161 = vand.u32 2147483647, %v1038
        %vm1162 = vcmp.eq.f32.partialorder %v1161, 8.507059e+37
        %v1163 = vand.u32 %v1038, 2147483648
        %v1164 = vor.u32 1.1754944e-38, %v1163
        %v1165 = vsel %vm1162, %v1164, %v1160
        %v1166 = vmul.f32 %v1030, %v1165
        %v1167 = vlog2.pop %v1061
        %v1168 = vmul.f32 %v1167, 0.6931472
        %v1169 = vlog2.pop %v1076
        %v1170 = vmul.f32 %v1169, 0.6931472
        %v1171 = vlog2.pop %v1091
        %v1172 = vmul.f32 %v1171, 0.6931472
        %v1173 = vlog2.pop %v1106
        %v1174 = vmul.f32 %v1173, 0.6931472
        %v1175 = vlog2.pop %v1121
        %v1176 = vmul.f32 %v1175, 0.6931472
        %v1177 = vlog2.pop %v1136
        %v1178 = vmul.f32 %v1177, 0.6931472
        %v1179 = vlog2.pop %v1151
        %v1180 = vmul.f32 %v1179, 0.6931472
        %v1181 = vlog2.pop %v1166
        %v1182 = vmul.f32 %v1181, 0.6931472
        %v1183 = vand.u32 2147483647, %v1168
        %v1184 = vand.u32 2147483647, %v1170
        %v1185 = vand.u32 2147483647, %v1172
        %v1186 = vand.u32 2147483647, %v1174
        %v1187 = vand.u32 2147483647, %v1176
        %v1188 = vand.u32 2147483647, %v1178
        %v1189 = vand.u32 2147483647, %v1180
        %v1190 = vand.u32 2147483647, %v1182
        %v1191 = vmul.f32 %v1183, 0.5
        %v1192 = vmul.f32 %v1184, 0.5
        %v1193 = vmul.f32 %v1185, 0.5
        %v1194 = vmul.f32 %v1186, 0.5
        %v1195 = vmul.f32 %v1187, 0.5
        %v1196 = vmul.f32 %v1188, 0.5
        %v1197 = vmul.f32 %v1189, 0.5
        %v1198 = vmul.f32 %v1190, 0.5
        %v1199 = vadd.f32 %v1039, %v1191
        %v1200 = vadd.f32 %v1040, %v1192
        %v1201 = vadd.f32 %v1041, %v1193
        %v1202 = vadd.f32 %v1042, %v1194
        %v1203 = vadd.f32 %v1043, %v1195
        %v1204 = vadd.f32 %v1044, %v1196
        %v1205 = vadd.f32 %v1045, %v1197
        %v1206 = vadd.f32 %v1046, %v1198
        %1207 = vst [vmem:[#allocation4] sm:$0xff] %v1199
        %1208 = vst [vmem:[#allocation4 + $0x8] sm:$0xff] %v1200
        %1209 = vst [vmem:[#allocation4 + $0x10] sm:$0xff] %v1201
        %1210 = vst [vmem:[#allocation4 + $0x18] sm:$0xff] %v1202
        %1211 = vst [vmem:[#allocation4 + $0x20] sm:$0xff] %v1203
        %1212 = vst [vmem:[#allocation4 + $0x28] sm:$0xff] %v1204
        %1213 = vst [vmem:[#allocation4 + $0x30] sm:$0xff] %v1205
        %1214 = vst [vmem:[#allocation4 + $0x38] sm:$0xff] %v1206
        // Predicated region
        $region56: #{multi_resolution_stft_loss.3} parent=46 // pred_check
          %p1215 = pneg %p291
        $region57: #{multi_resolution_stft_loss.3} parent=46 // pred_check_branch
          %1217 = sbr.rel (%p1215) target = $region59
        $region58: #{multi_resolution_stft_loss.3} parent=46 // pred_region
          %v1218 = vld [vmem:[#allocation2] sm:$0xff]
          %v1219 = vld [vmem:[#allocation2 + $0x8] sm:$0xff]
          %v1220 = vld [vmem:[#allocation2 + $0x10] sm:$0xff]
          %v1221 = vld [vmem:[#allocation2 + $0x18] sm:$0xff]
          %v1222 = vld [vmem:[#allocation2 + $0x20] sm:$0xff]
          %v1223 = vld [vmem:[#allocation2 + $0x28] sm:$0xff]
          %v1224 = vld [vmem:[#allocation2 + $0x30] sm:$0xff]
          %v1225 = vld [vmem:[#allocation2 + $0x38] sm:$0xff]
          %1226 = vst [vmem:[%s280] sm:$0xff] %v1218
          %1227 = vst [vmem:[%s280 + $0x8] sm:$0xff] %v1219
          %1228 = vst [vmem:[%s280 + $0x10] sm:$0xff] %v1220
          %1229 = vst [vmem:[%s280 + $0x18] sm:$0xff] %v1221
          %1230 = vst [vmem:[%s280 + $0x20] sm:$0xff] %v1222
          %1231 = vst [vmem:[%s280 + $0x28] sm:$0xff] %v1223
          %1232 = vst [vmem:[%s280 + $0x30] sm:$0xff] %v1224
          %1233 = vst [vmem:[%s280 + $0x38] sm:$0xff] %v1225
          %v1234 = vld [vmem:[#allocation3] sm:$0xff]
          %v1235 = vld [vmem:[#allocation3 + $0x8] sm:$0xff]
          %v1236 = vld [vmem:[#allocation3 + $0x10] sm:$0xff]
          %v1237 = vld [vmem:[#allocation3 + $0x18] sm:$0xff]
          %v1238 = vld [vmem:[#allocation3 + $0x20] sm:$0xff]
          %v1239 = vld [vmem:[#allocation3 + $0x28] sm:$0xff]
          %v1240 = vld [vmem:[#allocation3 + $0x30] sm:$0xff]
          %v1241 = vld [vmem:[#allocation3 + $0x38] sm:$0xff]
          %1242 = vst [vmem:[%s285] sm:$0xff] %v1234
          %1243 = vst [vmem:[%s285 + $0x8] sm:$0xff] %v1235
          %1244 = vst [vmem:[%s285 + $0x10] sm:$0xff] %v1236
          %1245 = vst [vmem:[%s285 + $0x18] sm:$0xff] %v1237
          %1246 = vst [vmem:[%s285 + $0x20] sm:$0xff] %v1238
          %1247 = vst [vmem:[%s285 + $0x28] sm:$0xff] %v1239
          %1248 = vst [vmem:[%s285 + $0x30] sm:$0xff] %v1240
          %1249 = vst [vmem:[%s285 + $0x38] sm:$0xff] %v1241
          %v1250 = vld [vmem:[#allocation4] sm:$0xff]
          %v1251 = vld [vmem:[#allocation4 + $0x8] sm:$0xff]
          %v1252 = vld [vmem:[#allocation4 + $0x10] sm:$0xff]
          %v1253 = vld [vmem:[#allocation4 + $0x18] sm:$0xff]
          %v1254 = vld [vmem:[#allocation4 + $0x20] sm:$0xff]
          %v1255 = vld [vmem:[#allocation4 + $0x28] sm:$0xff]
          %v1256 = vld [vmem:[#allocation4 + $0x30] sm:$0xff]
          %v1257 = vld [vmem:[#allocation4 + $0x38] sm:$0xff]
          %1258 = vst [vmem:[%s290] sm:$0xff] %v1250
          %1259 = vst [vmem:[%s290 + $0x8] sm:$0xff] %v1251
          %1260 = vst [vmem:[%s290 + $0x10] sm:$0xff] %v1252
          %1261 = vst [vmem:[%s290 + $0x18] sm:$0xff] %v1253
          %1262 = vst [vmem:[%s290 + $0x20] sm:$0xff] %v1254
          %1263 = vst [vmem:[%s290 + $0x28] sm:$0xff] %v1255
          %1264 = vst [vmem:[%s290 + $0x30] sm:$0xff] %v1256
          %1265 = vst [vmem:[%s290 + $0x38] sm:$0xff] %v1257
        $region59: #{multi_resolution_stft_loss.3} parent=46 // pred_fallthru
          _
        %p1266 = scmp.lt.s32.totalorder %s20, 1
        %s1267 = scalar_select %p1266, %s20, 1
        %s1268 = smul.addr %s1267, 8
        %s1269 = smul.addr %s1268, 8
        %s1270 = scalar_lea.vmem %s2, %s1269
        %p1271 = scmp.lt.s32.totalorder %s20, 1
        %s1272 = scalar_select %p1271, %s20, 1
        %s1273 = smul.addr %s1272, 8
        %s1274 = smul.addr %s1273, 8
        %s1275 = scalar_lea.vmem %s3, %s1274
        %p1276 = scmp.lt.s32.totalorder %s20, 1
        %s1277 = scalar_select %p1276, %s20, 1
        %s1278 = smul.addr %s1277, 8
        %s1279 = smul.addr %s1278, 8
        %s1280 = scalar_lea.vmem %s4, %s1279
        // Predicated region
        $region60: #{multi_resolution_stft_loss.3} parent=46 // pred_check
          %p1281 = pneg %p95
        $region61: #{multi_resolution_stft_loss.3} parent=46 // pred_check_branch
          %1283 = sbr.rel (%p1281) target = $region63
        $region62: #{multi_resolution_stft_loss.3} parent=46 // pred_region
          _
        $region63: #{multi_resolution_stft_loss.3} parent=46 // pred_fallthru
          _
        // Predicated region
        $region64: #{multi_resolution_stft_loss.3} parent=46 // pred_check
          %p1284 = pneg %p121
        $region65: #{multi_resolution_stft_loss.3} parent=46 // pred_check_branch
          %1286 = sbr.rel (%p1284) target = $region67
        $region66: #{multi_resolution_stft_loss.3} parent=46 // pred_region
          _
        $region67: #{multi_resolution_stft_loss.3} parent=46 // pred_fallthru
          _
        // Predicated region
        $region68: #{multi_resolution_stft_loss.3} parent=46 // pred_check
          %p1287 = pneg %p147
        $region69: #{multi_resolution_stft_loss.3} parent=46 // pred_check_branch
          %1289 = sbr.rel (%p1287) target = $region71
        $region70: #{multi_resolution_stft_loss.3} parent=46 // pred_region
          _
        $region71: #{multi_resolution_stft_loss.3} parent=46 // pred_fallthru
          _
      $region47: #{multi_resolution_stft_loss.3} parent=5 // pred_fallthru
        _
      %p1290 = scmp.le.s32.totalorder 2, %s11
      // Predicated region
      $region72: #{multi_resolution_stft_loss.3} parent=5 // pred_check
        %p1291 = pneg %p1290
      $region73: #{multi_resolution_stft_loss.3} parent=5 // pred_check_branch
        %1293 = sbr.rel (%p1291) target = $region75
      $region74: #{multi_resolution_stft_loss.3} parent=5 // pred_region
        %s1294 = ssub.s32 %s11, 2
        // Predicated region
        $region76: #{multi_resolution_stft_loss.3} parent=74 // pred_check
          %p1295 = pneg %p101
        $region77: #{multi_resolution_stft_loss.3} parent=74 // pred_check_branch
          %1297 = sbr.rel (%p1295) target = $region79
        $region78: #{multi_resolution_stft_loss.3} parent=74 // pred_region
          %p1298 = scmp.lt.s32.totalorder %s22, 1
          %s1299 = scalar_select %p1298, %s22, 1
          %s1300 = smul.addr %s1299, 8
          %s1301 = smul.addr %s1300, 8
          %s1302 = scalar_lea.vmem %s2, %s1301
        $region79: #{multi_resolution_stft_loss.3} parent=74 // pred_fallthru
          _
        // Predicated region
        $region80: #{multi_resolution_stft_loss.3} parent=74 // pred_check
          %p1303 = pneg %p127
        $region81: #{multi_resolution_stft_loss.3} parent=74 // pred_check_branch
          %1305 = sbr.rel (%p1303) target = $region83
        $region82: #{multi_resolution_stft_loss.3} parent=74 // pred_region
          %p1306 = scmp.lt.s32.totalorder %s22, 1
          %s1307 = scalar_select %p1306, %s22, 1
          %s1308 = smul.addr %s1307, 8
          %s1309 = smul.addr %s1308, 8
          %s1310 = scalar_lea.vmem %s3, %s1309
        $region83: #{multi_resolution_stft_loss.3} parent=74 // pred_fallthru
          _
        // Predicated region
        $region84: #{multi_resolution_stft_loss.3} parent=74 // pred_check
          %p1311 = pneg %p153
        $region85: #{multi_resolution_stft_loss.3} parent=74 // pred_check_branch
          %1313 = sbr.rel (%p1311) target = $region87
        $region86: #{multi_resolution_stft_loss.3} parent=74 // pred_region
          %p1314 = scmp.lt.s32.totalorder %s22, 1
          %s1315 = scalar_select %p1314, %s22, 1
          %s1316 = smul.addr %s1315, 8
          %s1317 = smul.addr %s1316, 8
          %s1318 = scalar_lea.vmem %s4, %s1317
        $region87: #{multi_resolution_stft_loss.3} parent=74 // pred_fallthru
          _
      $region75: #{multi_resolution_stft_loss.3} parent=5 // pred_fallthru
        _
    $region6: #{multi_resolution_stft_loss.3} parent=1 // loop_footer
      %s15 = sadd.s32 1, %s11
    $region7: #{multi_resolution_stft_loss.3} parent=1 // loop_footer_branch
      %10 = sbr.rel target = $region3
    $region8: #{multi_resolution_stft_loss.3} parent=1 // loop_exit
      _

// kernel: multi_resolution_stft_loss.4
$region0: #{multi_resolution_stft_loss.4}
  #allocation0 [shape = 'u32[]', space=smem, size = 0x4, offset = 0x4, fixed_abs, tag = 'smem constant byte address 0x4 - core index']
  #allocation1 [shape = 'u32[72,128]{1,0:T(1,128)}', space=vmem, size = 0x9000, scoped, tag = 'internal scratch']
  #allocation2 [shape = 'f32[64,128]{1,0:T(8,128)}', space=vmem, size = 0x8000, scoped, tag = 'scratch operand']
  #allocation3 [shape = 'f32[64,128]{1,0:T(8,128)}', space=vmem, size = 0x8000, scoped, tag = 'scratch operand']
  #allocation4 [shape = 'f32[64,128]{1,0:T(8,128)}', space=vmem, size = 0x8000, scoped, tag = 'scratch operand']
  %s0 = inlined_call_operand.vmem [shape: f32[2,128,128], index: 0, kind: input, shape index: {}]
  %s1 = inlined_call_operand.vmem [shape: f32[128,256], index: 1, kind: input, shape index: {}]
  %s2 = inlined_call_operand.vmem [shape: f32[2,64,128], index: 2, kind: output, shape index: {0}]
  %s3 = inlined_call_operand.vmem [shape: f32[2,64,128], index: 3, kind: output, shape index: {1}]
  %s4 = inlined_call_operand.vmem [shape: f32[2,64,128], index: 4, kind: output, shape index: {2}]
  %5 = xla_tuple %s2, %s3, %s4
  %s6 = sld [smem:[#allocation0]]
  $region103: #{multi_resolution_stft_loss.4} parent=0
    _
  %s8 = ssub.s32 1, %s6
  %s9 = scalar_select 0, %s8, %s6
  $region1: #{multi_resolution_stft_loss.4} parent=0
    #allocation5 [shape = 'u8[131072]{0}', space=vmem, size = 0x20000, scoped, tag = 'input window, operand 0']
    loop: start=0, step=1, limit=4
    $region2: #{multi_resolution_stft_loss.4} parent=1 // loop_pre_header
      _
    $region3: #{multi_resolution_stft_loss.4} parent=1 // loop_header
      %s11 = sphi 0, %s15
      %p12 = scmp.ge.s32.totalorder %s11, 4
      %s18 = sphi 0, %s30
      %s19 = sphi 0, %s26
      %s20 = sphi 0, %s18
      %s21 = sphi 0, %s19
      %s22 = sphi 0, %s20
      %s23 = sphi 0, %s21
      %s35 = sphi 0, %s37
      %s38 = sphi 0, %s35
      %s39 = sphi 0, %s38
      %s55 = sphi 0, %s39
      %s59 = sphi 0, %s59
      %s61 = sphi 0, %s59
      %s62 = sphi 0, %s61
      %s76 = sphi 0, %s62
      %s82 = sphi 0, %s84
      %s85 = sphi 0, %s82
      %s86 = sphi 0, %s85
      %s102 = sphi 0, %s86
      %s108 = sphi 0, %s110
      %s111 = sphi 0, %s108
      %s112 = sphi 0, %s111
      %s128 = sphi 0, %s112
      %s134 = sphi 0, %s136
      %s137 = sphi 0, %s134
      %s138 = sphi 0, %s137
      %s154 = sphi 0, %s138
    $region4: #{multi_resolution_stft_loss.4} parent=1 // loop_header_branch
      %14 = sbr.rel (%p12) target = $region8
    $region5: #{multi_resolution_stft_loss.4} parent=1 // loop_body
      %s16 = ssub.s32 %s11, 1
      %s17 = ssub.s32 %s11, 2
      %s24 = sadd.s32 1, %s19
      %p25 = scmp.ge.s32.totalorder %s24, 1
      %s26 = scalar_select %p25, 0, %s24
      %s27 = sadd.s32 1, %s18
      %s28 = scalar_select %p25, %s27, %s18
      %p29 = scmp.ge.s32.totalorder %s28, 2
      %s30 = scalar_select %p29, 0, %s28
      %s31 = sadd.s32 %s18, %s19
      %s32 = sadd.s32 %s30, %s26
      %s33 = ssub.s32 %s31, %s32
      %p34 = scmp.eq.s32.totalorder %s33, 0
      %s36 = sadd.s32 %s35, 1
      %s37 = scalar_select %p34, %s35, %s36
      %p40 = pneg %p34
      %p41 = scmp.eq.s32.totalorder %s11, 1
      %p42 = por %p40, %p41
      %p43 = scmp.ne.s32.totalorder %s35, %s38
      %p44 = scmp.eq.s32.totalorder %s11, 0
      %p45 = por %p43, %p44
      %p46 = scmp.ne.s32.totalorder %s35, %s38
      %p47 = scmp.eq.s32.totalorder %s16, 1
      %p48 = por %p46, %p47
      %p49 = scmp.ne.s32.totalorder %s38, %s39
      %p50 = scmp.eq.s32.totalorder %s16, 0
      %p51 = por %p49, %p50
      %p52 = scmp.ne.s32.totalorder %s38, %s39
      %p53 = scmp.eq.s32.totalorder %s17, 1
      %p54 = por %p52, %p53
      %p56 = scmp.ne.s32.totalorder %s39, %s55
      %p57 = scmp.eq.s32.totalorder %s17, 0
      %p58 = por %p56, %p57
      %s60 = sadd.s32 %s59, 1
      %p63 = scmp.eq.s32.totalorder %s11, 1
      %p64 = scmp.ne.s32.totalorder %s59, %s61
      %p65 = scmp.eq.s32.totalorder %s11, 0
      %p66 = por %p64, %p65
      %p67 = scmp.ne.s32.totalorder %s59, %s61
      %p68 = scmp.eq.s32.totalorder %s16, 1
      %p69 = por %p67, %p68
      %p70 = scmp.ne.s32.totalorder %s61, %s62
      %p71 = scmp.eq.s32.totalorder %s16, 0
      %p72 = por %p70, %p71
      %p73 = scmp.ne.s32.totalorder %s61, %s62
      %p74 = scmp.eq.s32.totalorder %s17, 1
      %p75 = por %p73, %p74
      %p77 = scmp.ne.s32.totalorder %s62, %s76
      %p78 = scmp.eq.s32.totalorder %s17, 0
      %p79 = por %p77, %p78
      %s80 = ssub.s32 %s18, %s30
      %p81 = scmp.eq.s32.totalorder %s80, 0
      %s83 = sadd.s32 %s82, 1
      %s84 = scalar_select %p81, %s82, %s83
      %p87 = pneg %p81
      %p88 = scmp.eq.s32.totalorder %s11, 1
      %p89 = por %p87, %p88
      %p90 = scmp.ne.s32.totalorder %s82, %s85
      %p91 = scmp.eq.s32.totalorder %s11, 0
      %p92 = por %p90, %p91
      %p93 = scmp.ne.s32.totalorder %s82, %s85
      %p94 = scmp.eq.s32.totalorder %s16, 1
      %p95 = por %p93, %p94
      %p96 = scmp.ne.s32.totalorder %s85, %s86
      %p97 = scmp.eq.s32.totalorder %s16, 0
      %p98 = por %p96, %p97
      %p99 = scmp.ne.s32.totalorder %s85, %s86
      %p100 = scmp.eq.s32.totalorder %s17, 1
      %p101 = por %p99, %p100
      %p103 = scmp.ne.s32.totalorder %s86, %s102
      %p104 = scmp.eq.s32.totalorder %s17, 0
      %p105 = por %p103, %p104
      %s106 = ssub.s32 %s18, %s30
      %p107 = scmp.eq.s32.totalorder %s106, 0
      %s109 = sadd.s32 %s108, 1
      %s110 = scalar_select %p107, %s108, %s109
      %p113 = pneg %p107
      %p114 = scmp.eq.s32.totalorder %s11, 1
      %p115 = por %p113, %p114
      %p116 = scmp.ne.s32.totalorder %s108, %s111
      %p117 = scmp.eq.s32.totalorder %s11, 0
      %p118 = por %p116, %p117
      %p119 = scmp.ne.s32.totalorder %s108, %s111
      %p120 = scmp.eq.s32.totalorder %s16, 1
      %p121 = por %p119, %p120
      %p122 = scmp.ne.s32.totalorder %s111, %s112
      %p123 = scmp.eq.s32.totalorder %s16, 0
      %p124 = por %p122, %p123
      %p125 = scmp.ne.s32.totalorder %s111, %s112
      %p126 = scmp.eq.s32.totalorder %s17, 1
      %p127 = por %p125, %p126
      %p129 = scmp.ne.s32.totalorder %s112, %s128
      %p130 = scmp.eq.s32.totalorder %s17, 0
      %p131 = por %p129, %p130
      %s132 = ssub.s32 %s18, %s30
      %p133 = scmp.eq.s32.totalorder %s132, 0
      %s135 = sadd.s32 %s134, 1
      %s136 = scalar_select %p133, %s134, %s135
      %p139 = pneg %p133
      %p140 = scmp.eq.s32.totalorder %s11, 1
      %p141 = por %p139, %p140
      %p142 = scmp.ne.s32.totalorder %s134, %s137
      %p143 = scmp.eq.s32.totalorder %s11, 0
      %p144 = por %p142, %p143
      %p145 = scmp.ne.s32.totalorder %s134, %s137
      %p146 = scmp.eq.s32.totalorder %s16, 1
      %p147 = por %p145, %p146
      %p148 = scmp.ne.s32.totalorder %s137, %s138
      %p149 = scmp.eq.s32.totalorder %s16, 0
      %p150 = por %p148, %p149
      %p151 = scmp.ne.s32.totalorder %s137, %s138
      %p152 = scmp.eq.s32.totalorder %s17, 1
      %p153 = por %p151, %p152
      %p155 = scmp.ne.s32.totalorder %s138, %s154
      %p156 = scmp.eq.s32.totalorder %s17, 0
      %p157 = por %p155, %p156
      %p158 = scmp.le.s32.totalorder 1, %s11
      %p159 = scmp.lt.s32.totalorder %s11, 3
      %p160 = pnand %p158, %p159
      %p161 = pneg %p160
      // Predicated region
      $region9: #{multi_resolution_stft_loss.4} parent=5 // pred_check
        _
      $region10: #{multi_resolution_stft_loss.4} parent=5 // pred_check_branch
        %163 = sbr.rel (%p160) target = $region12
      $region11: #{multi_resolution_stft_loss.4} parent=5 // pred_region
        %s164 = ssub.s32 %s11, 1
        // Predicated region
        $region13: #{multi_resolution_stft_loss.4} parent=11 // pred_check
          %p165 = pneg %p72
        $region14: #{multi_resolution_stft_loss.4} parent=11 // pred_check_branch
          %167 = sbr.rel (%p165) target = $region16
        $region15: #{multi_resolution_stft_loss.4} parent=11 // pred_region
          _
        $region16: #{multi_resolution_stft_loss.4} parent=11 // pred_fallthru
          _
      $region12: #{multi_resolution_stft_loss.4} parent=5 // pred_fallthru
        _
      %p168 = scmp.lt.s32.totalorder %s11, 2
      // Predicated region
      $region17: #{multi_resolution_stft_loss.4} parent=5 // pred_check
        %p169 = pneg %p168
      $region18: #{multi_resolution_stft_loss.4} parent=5 // pred_check_branch
        %171 = sbr.rel (%p169) target = $region20
      $region19: #{multi_resolution_stft_loss.4} parent=5 // pred_region
        // Predicated region
        $region21: #{multi_resolution_stft_loss.4} parent=19 // pred_check
          %p172 = pneg %p45
        $region22: #{multi_resolution_stft_loss.4} parent=19 // pred_check_branch
          %174 = sbr.rel (%p172) target = $region24
        $region23: #{multi_resolution_stft_loss.4} parent=19 // pred_region
          %s175 = sand.u32 %s35, 1
          %s176 = sand.u32 %s35, 1
          %s177 = smul.addr %s176, 128
          %s178 = scalar_lea.vmem [#allocation5], %s177
          %s179 = sadd.s32 %s18, %s19
          %s180 = smul.u32 8, %s179
          %s181 = smul.addr %s180, 8
          %s182 = scalar_lea.vmem %s0, %s181
          // Predicated region
          $region25: #{multi_resolution_stft_loss.4} parent=23 // pred_check
            _
          $region26: #{multi_resolution_stft_loss.4} parent=23 // pred_check_branch
            %184 = sbr.rel (0) target = $region28
          $region27: #{multi_resolution_stft_loss.4} parent=23 // pred_region
            // Predicated region
            $region29: #{multi_resolution_stft_loss.4} parent=27 // pred_check
              _
            $region30: #{multi_resolution_stft_loss.4} parent=27 // pred_check_branch
              %186 = sbr.rel (0) target = $region32
            $region31: #{multi_resolution_stft_loss.4} parent=27 // pred_region
              // Predicated region
              $region44: #{multi_resolution_stft_loss.4} parent=31 // pred_check
                _
              $region45: #{multi_resolution_stft_loss.4} parent=31 // pred_check_branch
                %232 = sbr.rel (0) target = $region47
              $region46: #{multi_resolution_stft_loss.4} parent=31 // pred_region
                loop: start=0, step=1, limit=1
                $region48: #{multi_resolution_stft_loss.4} parent=46 // loop_pre_header
                  _
                $region49: #{multi_resolution_stft_loss.4} parent=46 // loop_header
                  %s234 = sphi 0, %s238
                  %p235 = scmp.ge.s32.totalorder %s234, 1
                  %s239 = sphi %s182, %s182
                  %s240 = sphi %s178, %s178
                $region50: #{multi_resolution_stft_loss.4} parent=46 // loop_header_branch
                  %237 = sbr.rel (%p235) target = $region54
                $region51: #{multi_resolution_stft_loss.4} parent=46 // loop_body
                  %v241 = vld [vmem:[%s239] sm:$0xff]
                  %242 = vst [vmem:[%s240] sm:$0xff] %v241
                  %v243 = vld [vmem:[%s239 + $0x8] sm:$0xff]
                  %244 = vst [vmem:[%s240 + $0x8] sm:$0xff] %v243
                  %v245 = vld [vmem:[%s239 + $0x10] sm:$0xff]
                  %246 = vst [vmem:[%s240 + $0x10] sm:$0xff] %v245
                  %v247 = vld [vmem:[%s239 + $0x18] sm:$0xff]
                  %248 = vst [vmem:[%s240 + $0x18] sm:$0xff] %v247
                  %v249 = vld [vmem:[%s239 + $0x20] sm:$0xff]
                  %250 = vst [vmem:[%s240 + $0x20] sm:$0xff] %v249
                  %v251 = vld [vmem:[%s239 + $0x28] sm:$0xff]
                  %252 = vst [vmem:[%s240 + $0x28] sm:$0xff] %v251
                  %v253 = vld [vmem:[%s239 + $0x30] sm:$0xff]
                  %254 = vst [vmem:[%s240 + $0x30] sm:$0xff] %v253
                  %v255 = vld [vmem:[%s239 + $0x38] sm:$0xff]
                  %256 = vst [vmem:[%s240 + $0x38] sm:$0xff] %v255
                  %v257 = vld [vmem:[%s239 + $0x80] sm:$0xff]
                  %258 = vst [vmem:[%s240 + $0x40] sm:$0xff] %v257
                  %v259 = vld [vmem:[%s239 + $0x88] sm:$0xff]
                  %260 = vst [vmem:[%s240 + $0x48] sm:$0xff] %v259
                  %v261 = vld [vmem:[%s239 + $0x90] sm:$0xff]
                  %262 = vst [vmem:[%s240 + $0x50] sm:$0xff] %v261
                  %v263 = vld [vmem:[%s239 + $0x98] sm:$0xff]
                  %264 = vst [vmem:[%s240 + $0x58] sm:$0xff] %v263
                  %v265 = vld [vmem:[%s239 + $0xa0] sm:$0xff]
                  %266 = vst [vmem:[%s240 + $0x60] sm:$0xff] %v265
                  %v267 = vld [vmem:[%s239 + $0xa8] sm:$0xff]
                  %268 = vst [vmem:[%s240 + $0x68] sm:$0xff] %v267
                  %v269 = vld [vmem:[%s239 + $0xb0] sm:$0xff]
                  %270 = vst [vmem:[%s240 + $0x70] sm:$0xff] %v269
                  %v271 = vld [vmem:[%s239 + $0xb8] sm:$0xff]
                  %272 = vst [vmem:[%s240 + $0x78] sm:$0xff] %v271
                $region52: #{multi_resolution_stft_loss.4} parent=46 // loop_footer
                  %s238 = sadd.s32 1, %s234
                $region53: #{multi_resolution_stft_loss.4} parent=46 // loop_footer_branch
                  %233 = sbr.rel target = $region49
                $region54: #{multi_resolution_stft_loss.4} parent=46 // loop_exit
                  _
              $region47: #{multi_resolution_stft_loss.4} parent=31 // pred_fallthru
                _
              // Predicated region
              $region55: #{multi_resolution_stft_loss.4} parent=31 // pred_check
                _
              $region56: #{multi_resolution_stft_loss.4} parent=31 // pred_check_branch
                %274 = sbr.rel target = $region58
              $region57: #{multi_resolution_stft_loss.4} parent=31 // pred_region
                _
              $region58: #{multi_resolution_stft_loss.4} parent=31 // pred_fallthru
                _
            $region32: #{multi_resolution_stft_loss.4} parent=27 // pred_fallthru
              _
            // Predicated region
            $region33: #{multi_resolution_stft_loss.4} parent=27 // pred_check
              _
            $region34: #{multi_resolution_stft_loss.4} parent=27 // pred_check_branch
              %188 = sbr.rel target = $region36
            $region35: #{multi_resolution_stft_loss.4} parent=27 // pred_region
              %s190 = ssub.s32 256, 1
              loop: start=0, step=1, limit=1
              $region37: #{multi_resolution_stft_loss.4} parent=35 // loop_pre_header
                _
              $region38: #{multi_resolution_stft_loss.4} parent=35 // loop_header
                %s192 = sphi 0, %s196
                %p193 = scmp.ge.s32.totalorder %s192, 1
                %s197 = sphi %s182, %s182
                %s198 = sphi %s178, %s178
              $region39: #{multi_resolution_stft_loss.4} parent=35 // loop_header_branch
                %195 = sbr.rel (%p193) target = $region43
              $region40: #{multi_resolution_stft_loss.4} parent=35 // loop_body
                %v199 = vld [vmem:[%s197] sm:%s190]
                %200 = vst [vmem:[%s198] sm:%s190] %v199
                %v201 = vld [vmem:[%s197 + $0x8] sm:%s190]
                %202 = vst [vmem:[%s198 + $0x8] sm:%s190] %v201
                %v203 = vld [vmem:[%s197 + $0x10] sm:%s190]
                %204 = vst [vmem:[%s198 + $0x10] sm:%s190] %v203
                %v205 = vld [vmem:[%s197 + $0x18] sm:%s190]
                %206 = vst [vmem:[%s198 + $0x18] sm:%s190] %v205
                %v207 = vld [vmem:[%s197 + $0x20] sm:%s190]
                %208 = vst [vmem:[%s198 + $0x20] sm:%s190] %v207
                %v209 = vld [vmem:[%s197 + $0x28] sm:%s190]
                %210 = vst [vmem:[%s198 + $0x28] sm:%s190] %v209
                %v211 = vld [vmem:[%s197 + $0x30] sm:%s190]
                %212 = vst [vmem:[%s198 + $0x30] sm:%s190] %v211
                %v213 = vld [vmem:[%s197 + $0x38] sm:%s190]
                %214 = vst [vmem:[%s198 + $0x38] sm:%s190] %v213
                %v215 = vld [vmem:[%s197 + $0x80] sm:%s190]
                %216 = vst [vmem:[%s198 + $0x40] sm:%s190] %v215
                %v217 = vld [vmem:[%s197 + $0x88] sm:%s190]
                %218 = vst [vmem:[%s198 + $0x48] sm:%s190] %v217
                %v219 = vld [vmem:[%s197 + $0x90] sm:%s190]
                %220 = vst [vmem:[%s198 + $0x50] sm:%s190] %v219
                %v221 = vld [vmem:[%s197 + $0x98] sm:%s190]
                %222 = vst [vmem:[%s198 + $0x58] sm:%s190] %v221
                %v223 = vld [vmem:[%s197 + $0xa0] sm:%s190]
                %224 = vst [vmem:[%s198 + $0x60] sm:%s190] %v223
                %v225 = vld [vmem:[%s197 + $0xa8] sm:%s190]
                %226 = vst [vmem:[%s198 + $0x68] sm:%s190] %v225
                %v227 = vld [vmem:[%s197 + $0xb0] sm:%s190]
                %228 = vst [vmem:[%s198 + $0x70] sm:%s190] %v227
                %v229 = vld [vmem:[%s197 + $0xb8] sm:%s190]
                %230 = vst [vmem:[%s198 + $0x78] sm:%s190] %v229
              $region41: #{multi_resolution_stft_loss.4} parent=35 // loop_footer
                %s196 = sadd.s32 1, %s192
              $region42: #{multi_resolution_stft_loss.4} parent=35 // loop_footer_branch
                %191 = sbr.rel target = $region38
              $region43: #{multi_resolution_stft_loss.4} parent=35 // loop_exit
                _
            $region36: #{multi_resolution_stft_loss.4} parent=27 // pred_fallthru
              _
          $region28: #{multi_resolution_stft_loss.4} parent=23 // pred_fallthru
            _
          %275 = vnop
        $region24: #{multi_resolution_stft_loss.4} parent=19 // pred_fallthru
          _
      $region20: #{multi_resolution_stft_loss.4} parent=5 // pred_fallthru
        _
      %p276 = scmp.le.s32.totalorder 1, %s11
      %p277 = scmp.lt.s32.totalorder %s11, 3
      %p278 = pnand %p276, %p277
      %p279 = pneg %p278
      // Predicated region
      $region59: #{multi_resolution_stft_loss.4} parent=5 // pred_check
        _
      $region60: #{multi_resolution_stft_loss.4} parent=5 // pred_check_branch
        %281 = sbr.rel (%p278) target = $region62
      $region61: #{multi_resolution_stft_loss.4} parent=5 // pred_region
        %s282 = ssub.s32 %s11, 1
        %s283 = sand.u32 %s38, 1
        %s284 = sand.u32 %s38, 1
        %s285 = smul.addr %s284, 128
        %s286 = scalar_lea.vmem [#allocation5], %s285
        // Predicated region
        $region63: #{multi_resolution_stft_loss.4} parent=61 // pred_check
          %p287 = pneg %p51
        $region64: #{multi_resolution_stft_loss.4} parent=61 // pred_check_branch
          %289 = sbr.rel (%p287) target = $region66
        $region65: #{multi_resolution_stft_loss.4} parent=61 // pred_region
          _
        $region66: #{multi_resolution_stft_loss.4} parent=61 // pred_fallthru
          _
        %s290 = sand.u32 %s38, 1
        %s291 = sand.u32 %s38, 1
        %s292 = smul.addr %s291, 128
        %s293 = scalar_lea.vmem [#allocation5], %s292
        %p294 = pneg %p51
        %p295 = pneg %p48
        %p296 = pneg %p72
        %p297 = pneg %p69
        %p298 = pneg %p98
        %p299 = pneg %p95
        %p300 = scmp.lt.s32.totalorder %s20, 1
        %s301 = scalar_select %p300, %s20, 1
        %s302 = smul.addr %s301, 8
        %s303 = smul.addr %s302, 8
        %s304 = scalar_lea.vmem %s2, %s303
        %p305 = pneg %p124
        %p306 = pneg %p121
        %p307 = scmp.lt.s32.totalorder %s20, 1
        %s308 = scalar_select %p307, %s20, 1
        %s309 = smul.addr %s308, 8
        %s310 = smul.addr %s309, 8
        %s311 = scalar_lea.vmem %s3, %s310
        %p312 = pneg %p150
        %p313 = pneg %p147
        %p314 = scmp.lt.s32.totalorder %s20, 1
        %s315 = scalar_select %p314, %s20, 1
        %s316 = smul.addr %s315, 8
        %s317 = smul.addr %s316, 8
        %s318 = scalar_lea.vmem %s4, %s317
        %s319 = sadd.s32 %s20, %s21
        %s320 = smul.u32 8, %s319
        %p321 = scmp.lt.s32.totalorder %s20, 1
        %s322 = scalar_select %p321, %s20, 1
        %s323 = smul.addr %s322, 8
        %s324 = smul.addr %s323, 8
        %s325 = scalar_lea.vmem %s2, %s324
        %p326 = scmp.lt.s32.totalorder %s20, 1
        %s327 = scalar_select %p326, %s20, 1
        %s328 = smul.addr %s327, 8
        %s329 = smul.addr %s328, 8
        %s330 = scalar_lea.vmem %s3, %s329
        %p331 = scmp.lt.s32.totalorder %s20, 1
        %s332 = scalar_select %p331, %s20, 1
        %s333 = smul.addr %s332, 8
        %s334 = smul.addr %s333, 8
        %s335 = scalar_lea.vmem %s4, %s334
        %p336 = scmp.eq.s32.totalorder %s21, 0
        // Predicated region
        $region67: #{multi_resolution_stft_loss.4} parent=61 // pred_check
          %p337 = pneg %p336
        $region68: #{multi_resolution_stft_loss.4} parent=61 // pred_check_branch
          %339 = sbr.rel (%p337) target = $region70
        $region69: #{multi_resolution_stft_loss.4} parent=61 // pred_region
          %340 = vst [vmem:[#allocation2] sm:$0xff] 0.0
          %341 = vst [vmem:[#allocation2 + $0x8] sm:$0xff] 0.0
          %342 = vst [vmem:[#allocation2 + $0x10] sm:$0xff] 0.0
          %343 = vst [vmem:[#allocation2 + $0x18] sm:$0xff] 0.0
          %344 = vst [vmem:[#allocation2 + $0x20] sm:$0xff] 0.0
          %345 = vst [vmem:[#allocation2 + $0x28] sm:$0xff] 0.0
          %346 = vst [vmem:[#allocation2 + $0x30] sm:$0xff] 0.0
          %347 = vst [vmem:[#allocation2 + $0x38] sm:$0xff] 0.0
          %348 = vst [vmem:[#allocation3] sm:$0xff] 0.0
          %349 = vst [vmem:[#allocation3 + $0x8] sm:$0xff] 0.0
          %350 = vst [vmem:[#allocation3 + $0x10] sm:$0xff] 0.0
          %351 = vst [vmem:[#allocation3 + $0x18] sm:$0xff] 0.0
          %352 = vst [vmem:[#allocation3 + $0x20] sm:$0xff] 0.0
          %353 = vst [vmem:[#allocation3 + $0x28] sm:$0xff] 0.0
          %354 = vst [vmem:[#allocation3 + $0x30] sm:$0xff] 0.0
          %355 = vst [vmem:[#allocation3 + $0x38] sm:$0xff] 0.0
          %356 = vst [vmem:[#allocation4] sm:$0xff] 0.0
          %357 = vst [vmem:[#allocation4 + $0x8] sm:$0xff] 0.0
          %358 = vst [vmem:[#allocation4 + $0x10] sm:$0xff] 0.0
          %359 = vst [vmem:[#allocation4 + $0x18] sm:$0xff] 0.0
          %360 = vst [vmem:[#allocation4 + $0x20] sm:$0xff] 0.0
          %361 = vst [vmem:[#allocation4 + $0x28] sm:$0xff] 0.0
          %362 = vst [vmem:[#allocation4 + $0x30] sm:$0xff] 0.0
          %363 = vst [vmem:[#allocation4 + $0x38] sm:$0xff] 0.0
        $region70: #{multi_resolution_stft_loss.4} parent=61 // pred_fallthru
          _
        %v364 = vld [vmem:[%s286] sm:$0xff]
        %v365 = vld [vmem:[%s286 + $0x8] sm:$0xff]
        %v366 = vld [vmem:[%s286 + $0x10] sm:$0xff]
        %v367 = vld [vmem:[%s286 + $0x18] sm:$0xff]
        %v368 = vld [vmem:[%s286 + $0x20] sm:$0xff]
        %v369 = vld [vmem:[%s286 + $0x28] sm:$0xff]
        %v370 = vld [vmem:[%s286 + $0x30] sm:$0xff]
        %v371 = vld [vmem:[%s286 + $0x38] sm:$0xff]
        %v372 = vld [vmem:[%s286 + $0x40] sm:$0xff]
        %v373 = vld [vmem:[%s286 + $0x48] sm:$0xff]
        %v374 = vld [vmem:[%s286 + $0x50] sm:$0xff]
        %v375 = vld [vmem:[%s286 + $0x58] sm:$0xff]
        %v376 = vld [vmem:[%s286 + $0x60] sm:$0xff]
        %v377 = vld [vmem:[%s286 + $0x68] sm:$0xff]
        %v378 = vld [vmem:[%s286 + $0x70] sm:$0xff]
        %v379 = vld [vmem:[%s286 + $0x78] sm:$0xff]
        %v380 = vld [vmem:[%s1] sm:$0xff]
        %v381 = vld [vmem:[%s1 + $0x8] sm:$0xff]
        %v382 = vld [vmem:[%s1 + $0x10] sm:$0xff]
        %v383 = vld [vmem:[%s1 + $0x18] sm:$0xff]
        %v384 = vld [vmem:[%s1 + $0x20] sm:$0xff]
        %v385 = vld [vmem:[%s1 + $0x28] sm:$0xff]
        %v386 = vld [vmem:[%s1 + $0x30] sm:$0xff]
        %v387 = vld [vmem:[%s1 + $0x38] sm:$0xff]
        %v388 = vld [vmem:[%s1 + $0x40] sm:$0xff]
        %v389 = vld [vmem:[%s1 + $0x48] sm:$0xff]
        %v390 = vld [vmem:[%s1 + $0x50] sm:$0xff]
        %v391 = vld [vmem:[%s1 + $0x58] sm:$0xff]
        %v392 = vld [vmem:[%s1 + $0x60] sm:$0xff]
        %v393 = vld [vmem:[%s1 + $0x68] sm:$0xff]
        %v394 = vld [vmem:[%s1 + $0x70] sm:$0xff]
        %v395 = vld [vmem:[%s1 + $0x78] sm:$0xff]
        %v396 = vld [vmem:[%s1 + $0x80] sm:$0xff]
        %v397 = vld [vmem:[%s1 + $0x88] sm:$0xff]
        %v398 = vld [vmem:[%s1 + $0x90] sm:$0xff]
        %v399 = vld [vmem:[%s1 + $0x98] sm:$0xff]
        %v400 = vld [vmem:[%s1 + $0xa0] sm:$0xff]
        %v401 = vld [vmem:[%s1 + $0xa8] sm:$0xff]
        %v402 = vld [vmem:[%s1 + $0xb0] sm:$0xff]
        %v403 = vld [vmem:[%s1 + $0xb8] sm:$0xff]
        %v404 = vld [vmem:[%s1 + $0xc0] sm:$0xff]
        %v405 = vld [vmem:[%s1 + $0xc8] sm:$0xff]
        %v406 = vld [vmem:[%s1 + $0xd0] sm:$0xff]
        %v407 = vld [vmem:[%s1 + $0xd8] sm:$0xff]
        %v408 = vld [vmem:[%s1 + $0xe0] sm:$0xff]
        %v409 = vld [vmem:[%s1 + $0xe8] sm:$0xff]
        %v410 = vld [vmem:[%s1 + $0xf0] sm:$0xff]
        %v411 = vld [vmem:[%s1 + $0xf8] sm:$0xff]
        %412 = vmatpush.msra.mxu0 %v410
        %413 = vmatpush.msra.mxu0 %v408
        %414 = vmatpush.msra.mxu0 %v406
        %415 = vmatpush.msra.mxu0 %v404
        %416 = vmatpush.msra.mxu0 %v402
        %417 = vmatpush.msra.mxu0 %v400
        %418 = vmatpush.msra.mxu0 %v398
        %419 = vmatpush.msra.mxu0 %v396
        %420 = vmatpush.msra.mxu0 %v394
        %421 = vmatpush.msra.mxu0 %v392
        %422 = vmatpush.msra.mxu0 %v390
        %423 = vmatpush.msra.mxu0 %v388
        %424 = vmatpush.msra.mxu0 %v386
        %425 = vmatpush.msra.mxu0 %v384
        %426 = vmatpush.msra.mxu0 %v382
        %427 = vmatpush.msra.mxu0 %v380
        %428 = vmatmul.f32.gmra.mxu0 %v364
        %v429 = vpop.f32.mrf.mxu0
        %v430 = vadd.f32 0.0, %v429
        %431 = vmatmul.f32.gmra.mxu0 %v365
        %v432 = vpop.f32.mrf.mxu0
        %v433 = vadd.f32 0.0, %v432
        %434 = vmatmul.f32.gmra.mxu0 %v366
        %v435 = vpop.f32.mrf.mxu0
        %v436 = vadd.f32 0.0, %v435
        %437 = vmatmul.f32.gmra.mxu0 %v367
        %v438 = vpop.f32.mrf.mxu0
        %v439 = vadd.f32 0.0, %v438
        %440 = vmatmul.f32.gmra.mxu0 %v368
        %v441 = vpop.f32.mrf.mxu0
        %v442 = vadd.f32 0.0, %v441
        %443 = vmatmul.f32.gmra.mxu0 %v369
        %v444 = vpop.f32.mrf.mxu0
        %v445 = vadd.f32 0.0, %v444
        %446 = vmatmul.f32.gmra.mxu0 %v370
        %v447 = vpop.f32.mrf.mxu0
        %v448 = vadd.f32 0.0, %v447
        %449 = vmatmul.f32.gmra.mxu0 %v371
        %v450 = vpop.f32.mrf.mxu0
        %v451 = vadd.f32 0.0, %v450
        %452 = vmatmul.f32.gmra.mxu0 %v372
        %v453 = vpop.f32.mrf.mxu0
        %v454 = vadd.f32 0.0, %v453
        %455 = vmatmul.f32.gmra.mxu0 %v373
        %v456 = vpop.f32.mrf.mxu0
        %v457 = vadd.f32 0.0, %v456
        %458 = vmatmul.f32.gmra.mxu0 %v374
        %v459 = vpop.f32.mrf.mxu0
        %v460 = vadd.f32 0.0, %v459
        %461 = vmatmul.f32.gmra.mxu0 %v375
        %v462 = vpop.f32.mrf.mxu0
        %v463 = vadd.f32 0.0, %v462
        %464 = vmatmul.f32.gmra.mxu0 %v376
        %v465 = vpop.f32.mrf.mxu0
        %v466 = vadd.f32 0.0, %v465
        %467 = vmatmul.f32.gmra.mxu0 %v377
        %v468 = vpop.f32.mrf.mxu0
        %v469 = vadd.f32 0.0, %v468
        %470 = vmatmul.f32.gmra.mxu0 %v378
        %v471 = vpop.f32.mrf.mxu0
        %v472 = vadd.f32 0.0, %v471
        %473 = vmatmul.f32.gmra.mxu0 %v379
        %v474 = vpop.f32.mrf.mxu0
        %v475 = vadd.f32 0.0, %v474
        %476 = vdwg.mxu0
        %477 = vmatpush.msra.mxu0 %v411
        %478 = vmatpush.msra.mxu0 %v409
        %479 = vmatpush.msra.mxu0 %v407
        %480 = vmatpush.msra.mxu0 %v405
        %481 = vmatpush.msra.mxu0 %v403
        %482 = vmatpush.msra.mxu0 %v401
        %483 = vmatpush.msra.mxu0 %v399
        %484 = vmatpush.msra.mxu0 %v397
        %485 = vmatpush.msra.mxu0 %v395
        %486 = vmatpush.msra.mxu0 %v393
        %487 = vmatpush.msra.mxu0 %v391
        %488 = vmatpush.msra.mxu0 %v389
        %489 = vmatpush.msra.mxu0 %v387
        %490 = vmatpush.msra.mxu0 %v385
        %491 = vmatpush.msra.mxu0 %v383
        %492 = vmatpush.msra.mxu0 %v381
        %493 = vmatmul.f32.gmra.mxu0 %v364
        %v494 = vpop.f32.mrf.mxu0
        %v495 = vadd.f32 0.0, %v494
        %496 = vmatmul.f32.gmra.mxu0 %v365
        %v497 = vpop.f32.mrf.mxu0
        %v498 = vadd.f32 0.0, %v497
        %499 = vmatmul.f32.gmra.mxu0 %v366
        %v500 = vpop.f32.mrf.mxu0
        %v501 = vadd.f32 0.0, %v500
        %502 = vmatmul.f32.gmra.mxu0 %v367
        %v503 = vpop.f32.mrf.mxu0
        %v504 = vadd.f32 0.0, %v503
        %505 = vmatmul.f32.gmra.mxu0 %v368
        %v506 = vpop.f32.mrf.mxu0
        %v507 = vadd.f32 0.0, %v506
        %508 = vmatmul.f32.gmra.mxu0 %v369
        %v509 = vpop.f32.mrf.mxu0
        %v510 = vadd.f32 0.0, %v509
        %511 = vmatmul.f32.gmra.mxu0 %v370
        %v512 = vpop.f32.mrf.mxu0
        %v513 = vadd.f32 0.0, %v512
        %514 = vmatmul.f32.gmra.mxu0 %v371
        %v515 = vpop.f32.mrf.mxu0
        %v516 = vadd.f32 0.0, %v515
        %517 = vmatmul.f32.gmra.mxu0 %v372
        %v518 = vpop.f32.mrf.mxu0
        %v519 = vadd.f32 0.0, %v518
        %520 = vmatmul.f32.gmra.mxu0 %v373
        %v521 = vpop.f32.mrf.mxu0
        %v522 = vadd.f32 0.0, %v521
        %523 = vmatmul.f32.gmra.mxu0 %v374
        %v524 = vpop.f32.mrf.mxu0
        %v525 = vadd.f32 0.0, %v524
        %526 = vmatmul.f32.gmra.mxu0 %v375
        %v527 = vpop.f32.mrf.mxu0
        %v528 = vadd.f32 0.0, %v527
        %529 = vmatmul.f32.gmra.mxu0 %v376
        %v530 = vpop.f32.mrf.mxu0
        %v531 = vadd.f32 0.0, %v530
        %532 = vmatmul.f32.gmra.mxu0 %v377
        %v533 = vpop.f32.mrf.mxu0
        %v534 = vadd.f32 0.0, %v533
        %535 = vmatmul.f32.gmra.mxu0 %v378
        %v536 = vpop.f32.mrf.mxu0
        %v537 = vadd.f32 0.0, %v536
        %538 = vmatmul.f32.gmra.mxu0 %v379
        %v539 = vpop.f32.mrf.mxu0
        %v540 = vadd.f32 0.0, %v539
        %541 = vdwg.mxu0
        %v542 = vmul.f32 %v430, %v430
        %v543 = vmul.f32 %v433, %v433
        %v544 = vmul.f32 %v436, %v436
        %v545 = vmul.f32 %v439, %v439
        %v546 = vmul.f32 %v442, %v442
        %v547 = vmul.f32 %v445, %v445
        %v548 = vmul.f32 %v448, %v448
        %v549 = vmul.f32 %v451, %v451
        %v550 = vmul.f32 %v495, %v495
        %v551 = vmul.f32 %v498, %v498
        %v552 = vmul.f32 %v501, %v501
        %v553 = vmul.f32 %v504, %v504
        %v554 = vmul.f32 %v507, %v507
        %v555 = vmul.f32 %v510, %v510
        %v556 = vmul.f32 %v513, %v513
        %v557 = vmul.f32 %v516, %v516
        %v558 = vadd.f32 %v542, %v550
        %v559 = vadd.f32 %v543, %v551
        %v560 = vadd.f32 %v544, %v552
        %v561 = vadd.f32 %v545, %v553
        %v562 = vadd.f32 %v546, %v554
        %v563 = vadd.f32 %v547, %v555
        %v564 = vadd.f32 %v548, %v556
        %v565 = vadd.f32 %v549, %v557
        %v566 = vmul.f32 %v454, %v454
        %v567 = vmul.f32 %v457, %v457
        %v568 = vmul.f32 %v460, %v460
        %v569 = vmul.f32 %v463, %v463
        %v570 = vmul.f32 %v466, %v466
        %v571 = vmul.f32 %v469, %v469
        %v572 = vmul.f32 %v472, %v472
        %v573 = vmul.f32 %v475, %v475
        %v574 = vmul.f32 %v519, %v519
        %v575 = vmul.f32 %v522, %v522
        %v576 = vmul.f32 %v525, %v525
        %v577 = vmul.f32 %v528, %v528
        %v578 = vmul.f32 %v531, %v531
        %v579 = vmul.f32 %v534, %v534
        %v580 = vmul.f32 %v537, %v537
        %v581 = vmul.f32 %v540, %v540
        %v582 = vadd.f32 %v566, %v574
        %v583 = vadd.f32 %v567, %v575
        %v584 = vadd.f32 %v568, %v576
        %v585 = vadd.f32 %v569, %v577
        %v586 = vadd.f32 %v570, %v578
        %v587 = vadd.f32 %v571, %v579
        %v588 = vadd.f32 %v572, %v580
        %v589 = vadd.f32 %v573, %v581
        %v590 = vmul.f32 %v558, %v582
        %v591 = vmul.f32 %v559, %v583
        %v592 = vmul.f32 %v560, %v584
        %v593 = vmul.f32 %v561, %v585
        %v594 = vmul.f32 %v562, %v586
        %v595 = vmul.f32 %v563, %v587
        %v596 = vmul.f32 %v564, %v588
        %v597 = vmul.f32 %v565, %v589
        %v598 = vrsqrt.pop %v590
        %v599 = vmul.f32 %v598, %v590
        %v600 = vmul.f32 %v599, %v598
        %v601 = vmul.f32 0.5, %v600
        %v602 = vsub.f32 1.5, %v601
        %v603 = vmul.f32 %v598, %v602
        %v604 = vmul.f32 %v590, %v603
        %vm605 = vcmp.eq.f32.partialorder %v590, inf
        %v606 = vsel %vm605, %v590, %v604
        %vm607 = vcmp.eq.f32.partialorder %v590, 0.0
        %v608 = vand.u32 %v590, 2147483648
        %v609 = vsel %vm607, %v608, %v606
        %v610 = vrsqrt.pop %v591
        %v611 = vmul.f32 %v610, %v591
        %v612 = vmul.f32 %v611, %v610
        %v613 = vmul.f32 0.5, %v612
        %v614 = vsub.f32 1.5, %v613
        %v615 = vmul.f32 %v610, %v614
        %v616 = vmul.f32 %v591, %v615
        %vm617 = vcmp.eq.f32.partialorder %v591, inf
        %v618 = vsel %vm617, %v591, %v616
        %vm619 = vcmp.eq.f32.partialorder %v591, 0.0
        %v620 = vand.u32 %v591, 2147483648
        %v621 = vsel %vm619, %v620, %v618
        %v622 = vrsqrt.pop %v592
        %v623 = vmul.f32 %v622, %v592
        %v624 = vmul.f32 %v623, %v622
        %v625 = vmul.f32 0.5, %v624
        %v626 = vsub.f32 1.5, %v625
        %v627 = vmul.f32 %v622, %v626
        %v628 = vmul.f32 %v592, %v627
        %vm629 = vcmp.eq.f32.partialorder %v592, inf
        %v630 = vsel %vm629, %v592, %v628
        %vm631 = vcmp.eq.f32.partialorder %v592, 0.0
        %v632 = vand.u32 %v592, 2147483648
        %v633 = vsel %vm631, %v632, %v630
        %v634 = vrsqrt.pop %v593
        %v635 = vmul.f32 %v634, %v593
        %v636 = vmul.f32 %v635, %v634
        %v637 = vmul.f32 0.5, %v636
        %v638 = vsub.f32 1.5, %v637
        %v639 = vmul.f32 %v634, %v638
        %v640 = vmul.f32 %v593, %v639
        %vm641 = vcmp.eq.f32.partialorder %v593, inf
        %v642 = vsel %vm641, %v593, %v640
        %vm643 = vcmp.eq.f32.partialorder %v593, 0.0
        %v644 = vand.u32 %v593, 2147483648
        %v645 = vsel %vm643, %v644, %v642
        %v646 = vrsqrt.pop %v594
        %v647 = vmul.f32 %v646, %v594
        %v648 = vmul.f32 %v647, %v646
        %v649 = vmul.f32 0.5, %v648
        %v650 = vsub.f32 1.5, %v649
        %v651 = vmul.f32 %v646, %v650
        %v652 = vmul.f32 %v594, %v651
        %vm653 = vcmp.eq.f32.partialorder %v594, inf
        %v654 = vsel %vm653, %v594, %v652
        %vm655 = vcmp.eq.f32.partialorder %v594, 0.0
        %v656 = vand.u32 %v594, 2147483648
        %v657 = vsel %vm655, %v656, %v654
        %v658 = vrsqrt.pop %v595
        %v659 = vmul.f32 %v658, %v595
        %v660 = vmul.f32 %v659, %v658
        %v661 = vmul.f32 0.5, %v660
        %v662 = vsub.f32 1.5, %v661
        %v663 = vmul.f32 %v658, %v662
        %v664 = vmul.f32 %v595, %v663
        %vm665 = vcmp.eq.f32.partialorder %v595, inf
        %v666 = vsel %vm665, %v595, %v664
        %vm667 = vcmp.eq.f32.partialorder %v595, 0.0
        %v668 = vand.u32 %v595, 2147483648
        %v669 = vsel %vm667, %v668, %v666
        %v670 = vrsqrt.pop %v596
        %v671 = vmul.f32 %v670, %v596
        %v672 = vmul.f32 %v671, %v670
        %v673 = vmul.f32 0.5, %v672
        %v674 = vsub.f32 1.5, %v673
        %v675 = vmul.f32 %v670, %v674
        %v676 = vmul.f32 %v596, %v675
        %vm677 = vcmp.eq.f32.partialorder %v596, inf
        %v678 = vsel %vm677, %v596, %v676
        %vm679 = vcmp.eq.f32.partialorder %v596, 0.0
        %v680 = vand.u32 %v596, 2147483648
        %v681 = vsel %vm679, %v680, %v678
        %v682 = vrsqrt.pop %v597
        %v683 = vmul.f32 %v682, %v597
        %v684 = vmul.f32 %v683, %v682
        %v685 = vmul.f32 0.5, %v684
        %v686 = vsub.f32 1.5, %v685
        %v687 = vmul.f32 %v682, %v686
        %v688 = vmul.f32 %v597, %v687
        %vm689 = vcmp.eq.f32.partialorder %v597, inf
        %v690 = vsel %vm689, %v597, %v688
        %vm691 = vcmp.eq.f32.partialorder %v597, 0.0
        %v692 = vand.u32 %v597, 2147483648
        %v693 = vsel %vm691, %v692, %v690
        %v694 = vld [vmem:[#allocation2] sm:$0xff]
        %v695 = vld [vmem:[#allocation2 + $0x8] sm:$0xff]
        %v696 = vld [vmem:[#allocation2 + $0x10] sm:$0xff]
        %v697 = vld [vmem:[#allocation2 + $0x18] sm:$0xff]
        %v698 = vld [vmem:[#allocation2 + $0x20] sm:$0xff]
        %v699 = vld [vmem:[#allocation2 + $0x28] sm:$0xff]
        %v700 = vld [vmem:[#allocation2 + $0x30] sm:$0xff]
        %v701 = vld [vmem:[#allocation2 + $0x38] sm:$0xff]
        %v702 = vadd.f32 %v582, %v558
        %v703 = vadd.f32 %v583, %v559
        %v704 = vadd.f32 %v584, %v560
        %v705 = vadd.f32 %v585, %v561
        %v706 = vadd.f32 %v586, %v562
        %v707 = vadd.f32 %v587, %v563
        %v708 = vadd.f32 %v588, %v564
        %v709 = vadd.f32 %v589, %v565
        %v710 = vmul.f32 %v609, 2.0
        %v711 = vmul.f32 %v621, 2.0
        %v712 = vmul.f32 %v633, 2.0
        %v713 = vmul.f32 %v645, 2.0
        %v714 = vmul.f32 %v657, 2.0
        %v715 = vmul.f32 %v669, 2.0
        %v716 = vmul.f32 %v681, 2.0
        %v717 = vmul.f32 %v693, 2.0
        %v718 = vsub.f32 %v702, %v710
        %v719 = vsub.f32 %v703, %v711
        %v720 = vsub.f32 %v704, %v712
        %v721 = vsub.f32 %v705, %v713
        %v722 = vsub.f32 %v706, %v714
        %v723 = vsub.f32 %v707, %v715
        %v724 = vsub.f32 %v708, %v716
        %v725 = vsub.f32 %v709, %v717
        %v726 = vmax.f32 %v718, 0.0
        %v727 = vmax.f32 %v719, 0.0
        %v728 = vmax.f32 %v720, 0.0
        %v729 = vmax.f32 %v721, 0.0
        %v730 = vmax.f32 %v722, 0.0
        %v731 = vmax.f32 %v723, 0.0
        %v732 = vmax.f32 %v724, 0.0
        %v733 = vmax.f32 %v725, 0.0
        %v734 = vadd.f32 %v694, %v726
        %v735 = vadd.f32 %v695, %v727
        %v736 = vadd.f32 %v696, %v728
        %v737 = vadd.f32 %v697, %v729
        %v738 = vadd.f32 %v698, %v730
        %v739 = vadd.f32 %v699, %v731
        %v740 = vadd.f32 %v700, %v732
        %v741 = vadd.f32 %v701, %v733
        %742 = vst [vmem:[#allocation2] sm:$0xff] %v734
        %743 = vst [vmem:[#allocation2 + $0x8] sm:$0xff] %v735
        %744 = vst [vmem:[#allocation2 + $0x10] sm:$0xff] %v736
        %745 = vst [vmem:[#allocation2 + $0x18] sm:$0xff] %v737
        %746 = vst [vmem:[#allocation2 + $0x20] sm:$0xff] %v738
        %747 = vst [vmem:[#allocation2 + $0x28] sm:$0xff] %v739
        %748 = vst [vmem:[#allocation2 + $0x30] sm:$0xff] %v740
        %749 = vst [vmem:[#allocation2 + $0x38] sm:$0xff] %v741
        %v750 = vld [vmem:[#allocation3] sm:$0xff]
        %v751 = vld [vmem:[#allocation3 + $0x8] sm:$0xff]
        %v752 = vld [vmem:[#allocation3 + $0x10] sm:$0xff]
        %v753 = vld [vmem:[#allocation3 + $0x18] sm:$0xff]
        %v754 = vld [vmem:[#allocation3 + $0x20] sm:$0xff]
        %v755 = vld [vmem:[#allocation3 + $0x28] sm:$0xff]
        %v756 = vld [vmem:[#allocation3 + $0x30] sm:$0xff]
        %v757 = vld [vmem:[#allocation3 + $0x38] sm:$0xff]
        %v758 = vadd.f32 %v750, %v582
        %v759 = vadd.f32 %v751, %v583
        %v760 = vadd.f32 %v752, %v584
        %v761 = vadd.f32 %v753, %v585
        %v762 = vadd.f32 %v754, %v586
        %v763 = vadd.f32 %v755, %v587
        %v764 = vadd.f32 %v756, %v588
        %v765 = vadd.f32 %v757, %v589
        %766 = vst [vmem:[#allocation3] sm:$0xff] %v758
        %767 = vst [vmem:[#allocation3 + $0x8] sm:$0xff] %v759
        %768 = vst [vmem:[#allocation3 + $0x10] sm:$0xff] %v760
        %769 = vst [vmem:[#allocation3 + $0x18] sm:$0xff] %v761
        %770 = vst [vmem:[#allocation3 + $0x20] sm:$0xff] %v762
        %771 = vst [vmem:[#allocation3 + $0x28] sm:$0xff] %v763
        %772 = vst [vmem:[#allocation3 + $0x30] sm:$0xff] %v764
        %773 = vst [vmem:[#allocation3 + $0x38] sm:$0xff] %v765
        %v774 = vmax.f32 %v558, 1e-24
        %v775 = vmax.f32 %v559, 1e-24
        %v776 = vmax.f32 %v560, 1e-24
        %v777 = vmax.f32 %v561, 1e-24
        %v778 = vmax.f32 %v562, 1e-24
        %v779 = vmax.f32 %v563, 1e-24
        %v780 = vmax.f32 %v564, 1e-24
        %v781 = vmax.f32 %v565, 1e-24
        %v782 = vmax.f32 %v582, 1e-24
        %v783 = vmax.f32 %v583, 1e-24
        %v784 = vmax.f32 %v584, 1e-24
        %v785 = vmax.f32 %v585, 1e-24
        %v786 = vmax.f32 %v586, 1e-24
        %v787 = vmax.f32 %v587, 1e-24
        %v788 = vmax.f32 %v588, 1e-24
        %v789 = vmax.f32 %v589, 1e-24
        %v790 = vld [vmem:[#allocation4] sm:$0xff]
        %v791 = vld [vmem:[#allocation4 + $0x8] sm:$0xff]
        %v792 = vld [vmem:[#allocation4 + $0x10] sm:$0xff]
        %v793 = vld [vmem:[#allocation4 + $0x18] sm:$0xff]
        %v794 = vld [vmem:[#allocation4 + $0x20] sm:$0xff]
        %v795 = vld [vmem:[#allocation4 + $0x28] sm:$0xff]
        %v796 = vld [vmem:[#allocation4 + $0x30] sm:$0xff]
        %v797 = vld [vmem:[#allocation4 + $0x38] sm:$0xff]
        %v798 = vrcp.pop %v782
        %v799 = vmul.f32 %v782, %v798
        %v800 = vsub.f32 1.0, %v799
        %v801 = vmul.f32 %v798, %v800
        %v802 = vadd.f32 %v798, %v801
        %vm803 = vweird.f32 %v782
        %vm804 = vweird.f32 %v798
        %vm805 = vmor %vm803, %vm804
        %v806 = vsel %vm805, %v798, %v802
        %v807 = vand.u32 2147483647, %v782
        %vm808 = vcmp.eq.f32.partialorder %v807, 8.507059e+37
        %v809 = vand.u32 %v782, 2147483648
        %v810 = vor.u32 1.1754944e-38, %v809
        %v811 = vsel %vm808, %v810, %v806
        %v812 = vmul.f32 %v774, %v811
        %v813 = vrcp.pop %v783
        %v814 = vmul.f32 %v783, %v813
        %v815 = vsub.f32 1.0, %v814
        %v816 = vmul.f32 %v813, %v815
        %v817 = vadd.f32 %v813, %v816
        %vm818 = vweird.f32 %v783
        %vm819 = vweird.f32 %v813
        %vm820 = vmor %vm818, %vm819
        %v821 = vsel %vm820, %v813, %v817
        %v822 = vand.u32 2147483647, %v783
        %vm823 = vcmp.eq.f32.partialorder %v822, 8.507059e+37
        %v824 = vand.u32 %v783, 2147483648
        %v825 = vor.u32 1.1754944e-38, %v824
        %v826 = vsel %vm823, %v825, %v821
        %v827 = vmul.f32 %v775, %v826
        %v828 = vrcp.pop %v784
        %v829 = vmul.f32 %v784, %v828
        %v830 = vsub.f32 1.0, %v829
        %v831 = vmul.f32 %v828, %v830
        %v832 = vadd.f32 %v828, %v831
        %vm833 = vweird.f32 %v784
        %vm834 = vweird.f32 %v828
        %vm835 = vmor %vm833, %vm834
        %v836 = vsel %vm835, %v828, %v832
        %v837 = vand.u32 2147483647, %v784
        %vm838 = vcmp.eq.f32.partialorder %v837, 8.507059e+37
        %v839 = vand.u32 %v784, 2147483648
        %v840 = vor.u32 1.1754944e-38, %v839
        %v841 = vsel %vm838, %v840, %v836
        %v842 = vmul.f32 %v776, %v841
        %v843 = vrcp.pop %v785
        %v844 = vmul.f32 %v785, %v843
        %v845 = vsub.f32 1.0, %v844
        %v846 = vmul.f32 %v843, %v845
        %v847 = vadd.f32 %v843, %v846
        %vm848 = vweird.f32 %v785
        %vm849 = vweird.f32 %v843
        %vm850 = vmor %vm848, %vm849
        %v851 = vsel %vm850, %v843, %v847
        %v852 = vand.u32 2147483647, %v785
        %vm853 = vcmp.eq.f32.partialorder %v852, 8.507059e+37
        %v854 = vand.u32 %v785, 2147483648
        %v855 = vor.u32 1.1754944e-38, %v854
        %v856 = vsel %vm853, %v855, %v851
        %v857 = vmul.f32 %v777, %v856
        %v858 = vrcp.pop %v786
        %v859 = vmul.f32 %v786, %v858
        %v860 = vsub.f32 1.0, %v859
        %v861 = vmul.f32 %v858, %v860
        %v862 = vadd.f32 %v858, %v861
        %vm863 = vweird.f32 %v786
        %vm864 = vweird.f32 %v858
        %vm865 = vmor %vm863, %vm864
        %v866 = vsel %vm865, %v858, %v862
        %v867 = vand.u32 2147483647, %v786
        %vm868 = vcmp.eq.f32.partialorder %v867, 8.507059e+37
        %v869 = vand.u32 %v786, 2147483648
        %v870 = vor.u32 1.1754944e-38, %v869
        %v871 = vsel %vm868, %v870, %v866
        %v872 = vmul.f32 %v778, %v871
        %v873 = vrcp.pop %v787
        %v874 = vmul.f32 %v787, %v873
        %v875 = vsub.f32 1.0, %v874
        %v876 = vmul.f32 %v873, %v875
        %v877 = vadd.f32 %v873, %v876
        %vm878 = vweird.f32 %v787
        %vm879 = vweird.f32 %v873
        %vm880 = vmor %vm878, %vm879
        %v881 = vsel %vm880, %v873, %v877
        %v882 = vand.u32 2147483647, %v787
        %vm883 = vcmp.eq.f32.partialorder %v882, 8.507059e+37
        %v884 = vand.u32 %v787, 2147483648
        %v885 = vor.u32 1.1754944e-38, %v884
        %v886 = vsel %vm883, %v885, %v881
        %v887 = vmul.f32 %v779, %v886
        %v888 = vrcp.pop %v788
        %v889 = vmul.f32 %v788, %v888
        %v890 = vsub.f32 1.0, %v889
        %v891 = vmul.f32 %v888, %v890
        %v892 = vadd.f32 %v888, %v891
        %vm893 = vweird.f32 %v788
        %vm894 = vweird.f32 %v888
        %vm895 = vmor %vm893, %vm894
        %v896 = vsel %vm895, %v888, %v892
        %v897 = vand.u32 2147483647, %v788
        %vm898 = vcmp.eq.f32.partialorder %v897, 8.507059e+37
        %v899 = vand.u32 %v788, 2147483648
        %v900 = vor.u32 1.1754944e-38, %v899
        %v901 = vsel %vm898, %v900, %v896
        %v902 = vmul.f32 %v780, %v901
        %v903 = vrcp.pop %v789
        %v904 = vmul.f32 %v789, %v903
        %v905 = vsub.f32 1.0, %v904
        %v906 = vmul.f32 %v903, %v905
        %v907 = vadd.f32 %v903, %v906
        %vm908 = vweird.f32 %v789
        %vm909 = vweird.f32 %v903
        %vm910 = vmor %vm908, %vm909
        %v911 = vsel %vm910, %v903, %v907
        %v912 = vand.u32 2147483647, %v789
        %vm913 = vcmp.eq.f32.partialorder %v912, 8.507059e+37
        %v914 = vand.u32 %v789, 2147483648
        %v915 = vor.u32 1.1754944e-38, %v914
        %v916 = vsel %vm913, %v915, %v911
        %v917 = vmul.f32 %v781, %v916
        %v918 = vlog2.pop %v812
        %v919 = vmul.f32 %v918, 0.6931472
        %v920 = vlog2.pop %v827
        %v921 = vmul.f32 %v920, 0.6931472
        %v922 = vlog2.pop %v842
        %v923 = vmul.f32 %v922, 0.6931472
        %v924 = vlog2.pop %v857
        %v925 = vmul.f32 %v924, 0.6931472
        %v926 = vlog2.pop %v872
        %v927 = vmul.f32 %v926, 0.6931472
        %v928 = vlog2.pop %v887
        %v929 = vmul.f32 %v928, 0.6931472
        %v930 = vlog2.pop %v902
        %v931 = vmul.f32 %v930, 0.6931472
        %v932 = vlog2.pop %v917
        %v933 = vmul.f32 %v932, 0.6931472
        %v934 = vand.u32 2147483647, %v919
        %v935 = vand.u32 2147483647, %v921
        %v936 = vand.u32 2147483647, %v923
        %v937 = vand.u32 2147483647, %v925
        %v938 = vand.u32 2147483647, %v927
        %v939 = vand.u32 2147483647, %v929
        %v940 = vand.u32 2147483647, %v931
        %v941 = vand.u32 2147483647, %v933
        %v942 = vmul.f32 %v934, 0.5
        %v943 = vmul.f32 %v935, 0.5
        %v944 = vmul.f32 %v936, 0.5
        %v945 = vmul.f32 %v937, 0.5
        %v946 = vmul.f32 %v938, 0.5
        %v947 = vmul.f32 %v939, 0.5
        %v948 = vmul.f32 %v940, 0.5
        %v949 = vmul.f32 %v941, 0.5
        %v950 = vadd.f32 %v790, %v942
        %v951 = vadd.f32 %v791, %v943
        %v952 = vadd.f32 %v792, %v944
        %v953 = vadd.f32 %v793, %v945
        %v954 = vadd.f32 %v794, %v946
        %v955 = vadd.f32 %v795, %v947
        %v956 = vadd.f32 %v796, %v948
        %v957 = vadd.f32 %v797, %v949
        %958 = vst [vmem:[#allocation4] sm:$0xff] %v950
        %959 = vst [vmem:[#allocation4 + $0x8] sm:$0xff] %v951
        %960 = vst [vmem:[#allocation4 + $0x10] sm:$0xff] %v952
        %961 = vst [vmem:[#allocation4 + $0x18] sm:$0xff] %v953
        %962 = vst [vmem:[#allocation4 + $0x20] sm:$0xff] %v954
        %963 = vst [vmem:[#allocation4 + $0x28] sm:$0xff] %v955
        %964 = vst [vmem:[#allocation4 + $0x30] sm:$0xff] %v956
        %965 = vst [vmem:[#allocation4 + $0x38] sm:$0xff] %v957
        // Predicated region
        $region71: #{multi_resolution_stft_loss.4} parent=61 // pred_check
          %p966 = pneg %p336
        $region72: #{multi_resolution_stft_loss.4} parent=61 // pred_check_branch
          %968 = sbr.rel (%p966) target = $region74
        $region73: #{multi_resolution_stft_loss.4} parent=61 // pred_region
          %v969 = vld [vmem:[#allocation2] sm:$0xff]
          %v970 = vld [vmem:[#allocation2 + $0x8] sm:$0xff]
          %v971 = vld [vmem:[#allocation2 + $0x10] sm:$0xff]
          %v972 = vld [vmem:[#allocation2 + $0x18] sm:$0xff]
          %v973 = vld [vmem:[#allocation2 + $0x20] sm:$0xff]
          %v974 = vld [vmem:[#allocation2 + $0x28] sm:$0xff]
          %v975 = vld [vmem:[#allocation2 + $0x30] sm:$0xff]
          %v976 = vld [vmem:[#allocation2 + $0x38] sm:$0xff]
          %977 = vst [vmem:[%s325] sm:$0xff] %v969
          %978 = vst [vmem:[%s325 + $0x8] sm:$0xff] %v970
          %979 = vst [vmem:[%s325 + $0x10] sm:$0xff] %v971
          %980 = vst [vmem:[%s325 + $0x18] sm:$0xff] %v972
          %981 = vst [vmem:[%s325 + $0x20] sm:$0xff] %v973
          %982 = vst [vmem:[%s325 + $0x28] sm:$0xff] %v974
          %983 = vst [vmem:[%s325 + $0x30] sm:$0xff] %v975
          %984 = vst [vmem:[%s325 + $0x38] sm:$0xff] %v976
          %v985 = vld [vmem:[#allocation3] sm:$0xff]
          %v986 = vld [vmem:[#allocation3 + $0x8] sm:$0xff]
          %v987 = vld [vmem:[#allocation3 + $0x10] sm:$0xff]
          %v988 = vld [vmem:[#allocation3 + $0x18] sm:$0xff]
          %v989 = vld [vmem:[#allocation3 + $0x20] sm:$0xff]
          %v990 = vld [vmem:[#allocation3 + $0x28] sm:$0xff]
          %v991 = vld [vmem:[#allocation3 + $0x30] sm:$0xff]
          %v992 = vld [vmem:[#allocation3 + $0x38] sm:$0xff]
          %993 = vst [vmem:[%s330] sm:$0xff] %v985
          %994 = vst [vmem:[%s330 + $0x8] sm:$0xff] %v986
          %995 = vst [vmem:[%s330 + $0x10] sm:$0xff] %v987
          %996 = vst [vmem:[%s330 + $0x18] sm:$0xff] %v988
          %997 = vst [vmem:[%s330 + $0x20] sm:$0xff] %v989
          %998 = vst [vmem:[%s330 + $0x28] sm:$0xff] %v990
          %999 = vst [vmem:[%s330 + $0x30] sm:$0xff] %v991
          %1000 = vst [vmem:[%s330 + $0x38] sm:$0xff] %v992
          %v1001 = vld [vmem:[#allocation4] sm:$0xff]
          %v1002 = vld [vmem:[#allocation4 + $0x8] sm:$0xff]
          %v1003 = vld [vmem:[#allocation4 + $0x10] sm:$0xff]
          %v1004 = vld [vmem:[#allocation4 + $0x18] sm:$0xff]
          %v1005 = vld [vmem:[#allocation4 + $0x20] sm:$0xff]
          %v1006 = vld [vmem:[#allocation4 + $0x28] sm:$0xff]
          %v1007 = vld [vmem:[#allocation4 + $0x30] sm:$0xff]
          %v1008 = vld [vmem:[#allocation4 + $0x38] sm:$0xff]
          %1009 = vst [vmem:[%s335] sm:$0xff] %v1001
          %1010 = vst [vmem:[%s335 + $0x8] sm:$0xff] %v1002
          %1011 = vst [vmem:[%s335 + $0x10] sm:$0xff] %v1003
          %1012 = vst [vmem:[%s335 + $0x18] sm:$0xff] %v1004
          %1013 = vst [vmem:[%s335 + $0x20] sm:$0xff] %v1005
          %1014 = vst [vmem:[%s335 + $0x28] sm:$0xff] %v1006
          %1015 = vst [vmem:[%s335 + $0x30] sm:$0xff] %v1007
          %1016 = vst [vmem:[%s335 + $0x38] sm:$0xff] %v1008
        $region74: #{multi_resolution_stft_loss.4} parent=61 // pred_fallthru
          _
        %p1017 = scmp.lt.s32.totalorder %s20, 1
        %s1018 = scalar_select %p1017, %s20, 1
        %s1019 = smul.addr %s1018, 8
        %s1020 = smul.addr %s1019, 8
        %s1021 = scalar_lea.vmem %s2, %s1020
        %p1022 = scmp.lt.s32.totalorder %s20, 1
        %s1023 = scalar_select %p1022, %s20, 1
        %s1024 = smul.addr %s1023, 8
        %s1025 = smul.addr %s1024, 8
        %s1026 = scalar_lea.vmem %s3, %s1025
        %p1027 = scmp.lt.s32.totalorder %s20, 1
        %s1028 = scalar_select %p1027, %s20, 1
        %s1029 = smul.addr %s1028, 8
        %s1030 = smul.addr %s1029, 8
        %s1031 = scalar_lea.vmem %s4, %s1030
        // Predicated region
        $region75: #{multi_resolution_stft_loss.4} parent=61 // pred_check
          %p1032 = pneg %p95
        $region76: #{multi_resolution_stft_loss.4} parent=61 // pred_check_branch
          %1034 = sbr.rel (%p1032) target = $region78
        $region77: #{multi_resolution_stft_loss.4} parent=61 // pred_region
          _
        $region78: #{multi_resolution_stft_loss.4} parent=61 // pred_fallthru
          _
        // Predicated region
        $region79: #{multi_resolution_stft_loss.4} parent=61 // pred_check
          %p1035 = pneg %p121
        $region80: #{multi_resolution_stft_loss.4} parent=61 // pred_check_branch
          %1037 = sbr.rel (%p1035) target = $region82
        $region81: #{multi_resolution_stft_loss.4} parent=61 // pred_region
          _
        $region82: #{multi_resolution_stft_loss.4} parent=61 // pred_fallthru
          _
        // Predicated region
        $region83: #{multi_resolution_stft_loss.4} parent=61 // pred_check
          %p1038 = pneg %p147
        $region84: #{multi_resolution_stft_loss.4} parent=61 // pred_check_branch
          %1040 = sbr.rel (%p1038) target = $region86
        $region85: #{multi_resolution_stft_loss.4} parent=61 // pred_region
          _
        $region86: #{multi_resolution_stft_loss.4} parent=61 // pred_fallthru
          _
      $region62: #{multi_resolution_stft_loss.4} parent=5 // pred_fallthru
        _
      %p1041 = scmp.le.s32.totalorder 2, %s11
      // Predicated region
      $region87: #{multi_resolution_stft_loss.4} parent=5 // pred_check
        %p1042 = pneg %p1041
      $region88: #{multi_resolution_stft_loss.4} parent=5 // pred_check_branch
        %1044 = sbr.rel (%p1042) target = $region90
      $region89: #{multi_resolution_stft_loss.4} parent=5 // pred_region
        %s1045 = ssub.s32 %s11, 2
        // Predicated region
        $region91: #{multi_resolution_stft_loss.4} parent=89 // pred_check
          %p1046 = pneg %p101
        $region92: #{multi_resolution_stft_loss.4} parent=89 // pred_check_branch
          %1048 = sbr.rel (%p1046) target = $region94
        $region93: #{multi_resolution_stft_loss.4} parent=89 // pred_region
          %p1049 = scmp.lt.s32.totalorder %s22, 1
          %s1050 = scalar_select %p1049, %s22, 1
          %s1051 = smul.addr %s1050, 8
          %s1052 = smul.addr %s1051, 8
          %s1053 = scalar_lea.vmem %s2, %s1052
        $region94: #{multi_resolution_stft_loss.4} parent=89 // pred_fallthru
          _
        // Predicated region
        $region95: #{multi_resolution_stft_loss.4} parent=89 // pred_check
          %p1054 = pneg %p127
        $region96: #{multi_resolution_stft_loss.4} parent=89 // pred_check_branch
          %1056 = sbr.rel (%p1054) target = $region98
        $region97: #{multi_resolution_stft_loss.4} parent=89 // pred_region
          %p1057 = scmp.lt.s32.totalorder %s22, 1
          %s1058 = scalar_select %p1057, %s22, 1
          %s1059 = smul.addr %s1058, 8
          %s1060 = smul.addr %s1059, 8
          %s1061 = scalar_lea.vmem %s3, %s1060
        $region98: #{multi_resolution_stft_loss.4} parent=89 // pred_fallthru
          _
        // Predicated region
        $region99: #{multi_resolution_stft_loss.4} parent=89 // pred_check
          %p1062 = pneg %p153
        $region100: #{multi_resolution_stft_loss.4} parent=89 // pred_check_branch
          %1064 = sbr.rel (%p1062) target = $region102
        $region101: #{multi_resolution_stft_loss.4} parent=89 // pred_region
          %p1065 = scmp.lt.s32.totalorder %s22, 1
          %s1066 = scalar_select %p1065, %s22, 1
          %s1067 = smul.addr %s1066, 8
          %s1068 = smul.addr %s1067, 8
          %s1069 = scalar_lea.vmem %s4, %s1068
        $region102: #{multi_resolution_stft_loss.4} parent=89 // pred_fallthru
          _
      $region90: #{multi_resolution_stft_loss.4} parent=5 // pred_fallthru
        _
    $region6: #{multi_resolution_stft_loss.4} parent=1 // loop_footer
      %s15 = sadd.s32 1, %s11
    $region7: #{multi_resolution_stft_loss.4} parent=1 // loop_footer_branch
      %10 = sbr.rel target = $region3
    $region8: #{multi_resolution_stft_loss.4} parent=1 // loop_exit
      _

// kernel: multi_resolution_stft_loss.5
$region0: #{multi_resolution_stft_loss.5}
  #allocation0 [shape = 'u32[]', space=smem, size = 0x4, offset = 0x4, fixed_abs, tag = 'smem constant byte address 0x4 - core index']
  #allocation1 [shape = 'u32[72,128]{1,0:T(1,128)}', space=vmem, size = 0x9000, scoped, tag = 'internal scratch']
  #allocation2 [shape = 'f32[128,128]{1,0:T(8,128)}', space=vmem, size = 0x10000, scoped, tag = 'scratch operand']
  #allocation3 [shape = 'f32[128,128]{1,0:T(8,128)}', space=vmem, size = 0x10000, scoped, tag = 'scratch operand']
  #allocation4 [shape = 'f32[128,128]{1,0:T(8,128)}', space=vmem, size = 0x10000, scoped, tag = 'scratch operand']
  %s0 = inlined_call_operand.vmem [shape: f32[2,256,128], index: 0, kind: input, shape index: {}]
  %s1 = inlined_call_operand.vmem [shape: f32[128,256], index: 1, kind: input, shape index: {}]
  %s2 = inlined_call_operand.vmem [shape: f32[2,128,128], index: 2, kind: output, shape index: {0}]
  %s3 = inlined_call_operand.vmem [shape: f32[2,128,128], index: 3, kind: output, shape index: {1}]
  %s4 = inlined_call_operand.vmem [shape: f32[2,128,128], index: 4, kind: output, shape index: {2}]
  %5 = xla_tuple %s2, %s3, %s4
  %s6 = sld [smem:[#allocation0]]
  $region103: #{multi_resolution_stft_loss.5} parent=0
    _
  %s8 = ssub.s32 1, %s6
  %s9 = scalar_select 0, %s8, %s6
  $region1: #{multi_resolution_stft_loss.5} parent=0
    #allocation5 [shape = 'u8[262144]{0}', space=vmem, size = 0x40000, scoped, tag = 'input window, operand 0']
    loop: start=0, step=1, limit=4
    $region2: #{multi_resolution_stft_loss.5} parent=1 // loop_pre_header
      _
    $region3: #{multi_resolution_stft_loss.5} parent=1 // loop_header
      %s11 = sphi 0, %s15
      %p12 = scmp.ge.s32.totalorder %s11, 4
      %s18 = sphi 0, %s30
      %s19 = sphi 0, %s26
      %s20 = sphi 0, %s18
      %s21 = sphi 0, %s19
      %s22 = sphi 0, %s20
      %s23 = sphi 0, %s21
      %s35 = sphi 0, %s37
      %s38 = sphi 0, %s35
      %s39 = sphi 0, %s38
      %s55 = sphi 0, %s39
      %s59 = sphi 0, %s59
      %s61 = sphi 0, %s59
      %s62 = sphi 0, %s61
      %s76 = sphi 0, %s62
      %s82 = sphi 0, %s84
      %s85 = sphi 0, %s82
      %s86 = sphi 0, %s85
      %s102 = sphi 0, %s86
      %s108 = sphi 0, %s110
      %s111 = sphi 0, %s108
      %s112 = sphi 0, %s111
      %s128 = sphi 0, %s112
      %s134 = sphi 0, %s136
      %s137 = sphi 0, %s134
      %s138 = sphi 0, %s137
      %s154 = sphi 0, %s138
    $region4: #{multi_resolution_stft_loss.5} parent=1 // loop_header_branch
      %14 = sbr.rel (%p12) target = $region8
    $region5: #{multi_resolution_stft_loss.5} parent=1 // loop_body
      %s16 = ssub.s32 %s11, 1
      %s17 = ssub.s32 %s11, 2
      %s24 = sadd.s32 1, %s19
      %p25 = scmp.ge.s32.totalorder %s24, 1
      %s26 = scalar_select %p25, 0, %s24
      %s27 = sadd.s32 1, %s18
      %s28 = scalar_select %p25, %s27, %s18
      %p29 = scmp.ge.s32.totalorder %s28, 2
      %s30 = scalar_select %p29, 0, %s28
      %s31 = sadd.s32 %s18, %s19
      %s32 = sadd.s32 %s30, %s26
      %s33 = ssub.s32 %s31, %s32
      %p34 = scmp.eq.s32.totalorder %s33, 0
      %s36 = sadd.s32 %s35, 1
      %s37 = scalar_select %p34, %s35, %s36
      %p40 = pneg %p34
      %p41 = scmp.eq.s32.totalorder %s11, 1
      %p42 = por %p40, %p41
      %p43 = scmp.ne.s32.totalorder %s35, %s38
      %p44 = scmp.eq.s32.totalorder %s11, 0
      %p45 = por %p43, %p44
      %p46 = scmp.ne.s32.totalorder %s35, %s38
      %p47 = scmp.eq.s32.totalorder %s16, 1
      %p48 = por %p46, %p47
      %p49 = scmp.ne.s32.totalorder %s38, %s39
      %p50 = scmp.eq.s32.totalorder %s16, 0
      %p51 = por %p49, %p50
      %p52 = scmp.ne.s32.totalorder %s38, %s39
      %p53 = scmp.eq.s32.totalorder %s17, 1
      %p54 = por %p52, %p53
      %p56 = scmp.ne.s32.totalorder %s39, %s55
      %p57 = scmp.eq.s32.totalorder %s17, 0
      %p58 = por %p56, %p57
      %s60 = sadd.s32 %s59, 1
      %p63 = scmp.eq.s32.totalorder %s11, 1
      %p64 = scmp.ne.s32.totalorder %s59, %s61
      %p65 = scmp.eq.s32.totalorder %s11, 0
      %p66 = por %p64, %p65
      %p67 = scmp.ne.s32.totalorder %s59, %s61
      %p68 = scmp.eq.s32.totalorder %s16, 1
      %p69 = por %p67, %p68
      %p70 = scmp.ne.s32.totalorder %s61, %s62
      %p71 = scmp.eq.s32.totalorder %s16, 0
      %p72 = por %p70, %p71
      %p73 = scmp.ne.s32.totalorder %s61, %s62
      %p74 = scmp.eq.s32.totalorder %s17, 1
      %p75 = por %p73, %p74
      %p77 = scmp.ne.s32.totalorder %s62, %s76
      %p78 = scmp.eq.s32.totalorder %s17, 0
      %p79 = por %p77, %p78
      %s80 = ssub.s32 %s18, %s30
      %p81 = scmp.eq.s32.totalorder %s80, 0
      %s83 = sadd.s32 %s82, 1
      %s84 = scalar_select %p81, %s82, %s83
      %p87 = pneg %p81
      %p88 = scmp.eq.s32.totalorder %s11, 1
      %p89 = por %p87, %p88
      %p90 = scmp.ne.s32.totalorder %s82, %s85
      %p91 = scmp.eq.s32.totalorder %s11, 0
      %p92 = por %p90, %p91
      %p93 = scmp.ne.s32.totalorder %s82, %s85
      %p94 = scmp.eq.s32.totalorder %s16, 1
      %p95 = por %p93, %p94
      %p96 = scmp.ne.s32.totalorder %s85, %s86
      %p97 = scmp.eq.s32.totalorder %s16, 0
      %p98 = por %p96, %p97
      %p99 = scmp.ne.s32.totalorder %s85, %s86
      %p100 = scmp.eq.s32.totalorder %s17, 1
      %p101 = por %p99, %p100
      %p103 = scmp.ne.s32.totalorder %s86, %s102
      %p104 = scmp.eq.s32.totalorder %s17, 0
      %p105 = por %p103, %p104
      %s106 = ssub.s32 %s18, %s30
      %p107 = scmp.eq.s32.totalorder %s106, 0
      %s109 = sadd.s32 %s108, 1
      %s110 = scalar_select %p107, %s108, %s109
      %p113 = pneg %p107
      %p114 = scmp.eq.s32.totalorder %s11, 1
      %p115 = por %p113, %p114
      %p116 = scmp.ne.s32.totalorder %s108, %s111
      %p117 = scmp.eq.s32.totalorder %s11, 0
      %p118 = por %p116, %p117
      %p119 = scmp.ne.s32.totalorder %s108, %s111
      %p120 = scmp.eq.s32.totalorder %s16, 1
      %p121 = por %p119, %p120
      %p122 = scmp.ne.s32.totalorder %s111, %s112
      %p123 = scmp.eq.s32.totalorder %s16, 0
      %p124 = por %p122, %p123
      %p125 = scmp.ne.s32.totalorder %s111, %s112
      %p126 = scmp.eq.s32.totalorder %s17, 1
      %p127 = por %p125, %p126
      %p129 = scmp.ne.s32.totalorder %s112, %s128
      %p130 = scmp.eq.s32.totalorder %s17, 0
      %p131 = por %p129, %p130
      %s132 = ssub.s32 %s18, %s30
      %p133 = scmp.eq.s32.totalorder %s132, 0
      %s135 = sadd.s32 %s134, 1
      %s136 = scalar_select %p133, %s134, %s135
      %p139 = pneg %p133
      %p140 = scmp.eq.s32.totalorder %s11, 1
      %p141 = por %p139, %p140
      %p142 = scmp.ne.s32.totalorder %s134, %s137
      %p143 = scmp.eq.s32.totalorder %s11, 0
      %p144 = por %p142, %p143
      %p145 = scmp.ne.s32.totalorder %s134, %s137
      %p146 = scmp.eq.s32.totalorder %s16, 1
      %p147 = por %p145, %p146
      %p148 = scmp.ne.s32.totalorder %s137, %s138
      %p149 = scmp.eq.s32.totalorder %s16, 0
      %p150 = por %p148, %p149
      %p151 = scmp.ne.s32.totalorder %s137, %s138
      %p152 = scmp.eq.s32.totalorder %s17, 1
      %p153 = por %p151, %p152
      %p155 = scmp.ne.s32.totalorder %s138, %s154
      %p156 = scmp.eq.s32.totalorder %s17, 0
      %p157 = por %p155, %p156
      %p158 = scmp.le.s32.totalorder 1, %s11
      %p159 = scmp.lt.s32.totalorder %s11, 3
      %p160 = pnand %p158, %p159
      %p161 = pneg %p160
      // Predicated region
      $region9: #{multi_resolution_stft_loss.5} parent=5 // pred_check
        _
      $region10: #{multi_resolution_stft_loss.5} parent=5 // pred_check_branch
        %163 = sbr.rel (%p160) target = $region12
      $region11: #{multi_resolution_stft_loss.5} parent=5 // pred_region
        %s164 = ssub.s32 %s11, 1
        // Predicated region
        $region13: #{multi_resolution_stft_loss.5} parent=11 // pred_check
          %p165 = pneg %p72
        $region14: #{multi_resolution_stft_loss.5} parent=11 // pred_check_branch
          %167 = sbr.rel (%p165) target = $region16
        $region15: #{multi_resolution_stft_loss.5} parent=11 // pred_region
          _
        $region16: #{multi_resolution_stft_loss.5} parent=11 // pred_fallthru
          _
      $region12: #{multi_resolution_stft_loss.5} parent=5 // pred_fallthru
        _
      %p168 = scmp.lt.s32.totalorder %s11, 2
      // Predicated region
      $region17: #{multi_resolution_stft_loss.5} parent=5 // pred_check
        %p169 = pneg %p168
      $region18: #{multi_resolution_stft_loss.5} parent=5 // pred_check_branch
        %171 = sbr.rel (%p169) target = $region20
      $region19: #{multi_resolution_stft_loss.5} parent=5 // pred_region
        // Predicated region
        $region21: #{multi_resolution_stft_loss.5} parent=19 // pred_check
          %p172 = pneg %p45
        $region22: #{multi_resolution_stft_loss.5} parent=19 // pred_check_branch
          %174 = sbr.rel (%p172) target = $region24
        $region23: #{multi_resolution_stft_loss.5} parent=19 // pred_region
          %s175 = sand.u32 %s35, 1
          %s176 = sand.u32 %s35, 1
          %s177 = smul.addr %s176, 256
          %s178 = scalar_lea.vmem [#allocation5], %s177
          %s179 = sadd.s32 %s18, %s19
          %s180 = smul.u32 16, %s179
          %s181 = smul.addr %s180, 8
          %s182 = scalar_lea.vmem %s0, %s181
          // Predicated region
          $region25: #{multi_resolution_stft_loss.5} parent=23 // pred_check
            _
          $region26: #{multi_resolution_stft_loss.5} parent=23 // pred_check_branch
            %184 = sbr.rel (0) target = $region28
          $region27: #{multi_resolution_stft_loss.5} parent=23 // pred_region
            // Predicated region
            $region29: #{multi_resolution_stft_loss.5} parent=27 // pred_check
              _
            $region30: #{multi_resolution_stft_loss.5} parent=27 // pred_check_branch
              %186 = sbr.rel (0) target = $region32
            $region31: #{multi_resolution_stft_loss.5} parent=27 // pred_region
              // Predicated region
              $region44: #{multi_resolution_stft_loss.5} parent=31 // pred_check
                _
              $region45: #{multi_resolution_stft_loss.5} parent=31 // pred_check_branch
                %264 = sbr.rel (0) target = $region47
              $region46: #{multi_resolution_stft_loss.5} parent=31 // pred_region
                loop: start=0, step=1, limit=1
                $region48: #{multi_resolution_stft_loss.5} parent=46 // loop_pre_header
                  _
                $region49: #{multi_resolution_stft_loss.5} parent=46 // loop_header
                  %s266 = sphi 0, %s270
                  %p267 = scmp.ge.s32.totalorder %s266, 1
                  %s271 = sphi %s182, %s182
                  %s272 = sphi %s178, %s178
                $region50: #{multi_resolution_stft_loss.5} parent=46 // loop_header_branch
                  %269 = sbr.rel (%p267) target = $region54
                $region51: #{multi_resolution_stft_loss.5} parent=46 // loop_body
                  %v273 = vld [vmem:[%s271] sm:$0xff]
                  %274 = vst [vmem:[%s272] sm:$0xff] %v273
                  %v275 = vld [vmem:[%s271 + $0x8] sm:$0xff]
                  %276 = vst [vmem:[%s272 + $0x8] sm:$0xff] %v275
                  %v277 = vld [vmem:[%s271 + $0x10] sm:$0xff]
                  %278 = vst [vmem:[%s272 + $0x10] sm:$0xff] %v277
                  %v279 = vld [vmem:[%s271 + $0x18] sm:$0xff]
                  %280 = vst [vmem:[%s272 + $0x18] sm:$0xff] %v279
                  %v281 = vld [vmem:[%s271 + $0x20] sm:$0xff]
                  %282 = vst [vmem:[%s272 + $0x20] sm:$0xff] %v281
                  %v283 = vld [vmem:[%s271 + $0x28] sm:$0xff]
                  %284 = vst [vmem:[%s272 + $0x28] sm:$0xff] %v283
                  %v285 = vld [vmem:[%s271 + $0x30] sm:$0xff]
                  %286 = vst [vmem:[%s272 + $0x30] sm:$0xff] %v285
                  %v287 = vld [vmem:[%s271 + $0x38] sm:$0xff]
                  %288 = vst [vmem:[%s272 + $0x38] sm:$0xff] %v287
                  %v289 = vld [vmem:[%s271 + $0x40] sm:$0xff]
                  %290 = vst [vmem:[%s272 + $0x40] sm:$0xff] %v289
                  %v291 = vld [vmem:[%s271 + $0x48] sm:$0xff]
                  %292 = vst [vmem:[%s272 + $0x48] sm:$0xff] %v291
                  %v293 = vld [vmem:[%s271 + $0x50] sm:$0xff]
                  %294 = vst [vmem:[%s272 + $0x50] sm:$0xff] %v293
                  %v295 = vld [vmem:[%s271 + $0x58] sm:$0xff]
                  %296 = vst [vmem:[%s272 + $0x58] sm:$0xff] %v295
                  %v297 = vld [vmem:[%s271 + $0x60] sm:$0xff]
                  %298 = vst [vmem:[%s272 + $0x60] sm:$0xff] %v297
                  %v299 = vld [vmem:[%s271 + $0x68] sm:$0xff]
                  %300 = vst [vmem:[%s272 + $0x68] sm:$0xff] %v299
                  %v301 = vld [vmem:[%s271 + $0x70] sm:$0xff]
                  %302 = vst [vmem:[%s272 + $0x70] sm:$0xff] %v301
                  %v303 = vld [vmem:[%s271 + $0x78] sm:$0xff]
                  %304 = vst [vmem:[%s272 + $0x78] sm:$0xff] %v303
                  %v305 = vld [vmem:[%s271 + $0x100] sm:$0xff]
                  %306 = vst [vmem:[%s272 + $0x80] sm:$0xff] %v305
                  %v307 = vld [vmem:[%s271 + $0x108] sm:$0xff]
                  %308 = vst [vmem:[%s272 + $0x88] sm:$0xff] %v307
                  %v309 = vld [vmem:[%s271 + $0x110] sm:$0xff]
                  %310 = vst [vmem:[%s272 + $0x90] sm:$0xff] %v309
                  %v311 = vld [vmem:[%s271 + $0x118] sm:$0xff]
                  %312 = vst [vmem:[%s272 + $0x98] sm:$0xff] %v311
                  %v313 = vld [vmem:[%s271 + $0x120] sm:$0xff]
                  %314 = vst [vmem:[%s272 + $0xa0] sm:$0xff] %v313
                  %v315 = vld [vmem:[%s271 + $0x128] sm:$0xff]
                  %316 = vst [vmem:[%s272 + $0xa8] sm:$0xff] %v315
                  %v317 = vld [vmem:[%s271 + $0x130] sm:$0xff]
                  %318 = vst [vmem:[%s272 + $0xb0] sm:$0xff] %v317
                  %v319 = vld [vmem:[%s271 + $0x138] sm:$0xff]
                  %320 = vst [vmem:[%s272 + $0xb8] sm:$0xff] %v319
                  %v321 = vld [vmem:[%s271 + $0x140] sm:$0xff]
                  %322 = vst [vmem:[%s272 + $0xc0] sm:$0xff] %v321
                  %v323 = vld [vmem:[%s271 + $0x148] sm:$0xff]
                  %324 = vst [vmem:[%s272 + $0xc8] sm:$0xff] %v323
                  %v325 = vld [vmem:[%s271 + $0x150] sm:$0xff]
                  %326 = vst [vmem:[%s272 + $0xd0] sm:$0xff] %v325
                  %v327 = vld [vmem:[%s271 + $0x158] sm:$0xff]
                  %328 = vst [vmem:[%s272 + $0xd8] sm:$0xff] %v327
                  %v329 = vld [vmem:[%s271 + $0x160] sm:$0xff]
                  %330 = vst [vmem:[%s272 + $0xe0] sm:$0xff] %v329
                  %v331 = vld [vmem:[%s271 + $0x168] sm:$0xff]
                  %332 = vst [vmem:[%s272 + $0xe8] sm:$0xff] %v331
                  %v333 = vld [vmem:[%s271 + $0x170] sm:$0xff]
                  %334 = vst [vmem:[%s272 + $0xf0] sm:$0xff] %v333
                  %v335 = vld [vmem:[%s271 + $0x178] sm:$0xff]
                  %336 = vst [vmem:[%s272 + $0xf8] sm:$0xff] %v335
                $region52: #{multi_resolution_stft_loss.5} parent=46 // loop_footer
                  %s270 = sadd.s32 1, %s266
                $region53: #{multi_resolution_stft_loss.5} parent=46 // loop_footer_branch
                  %265 = sbr.rel target = $region49
                $region54: #{multi_resolution_stft_loss.5} parent=46 // loop_exit
                  _
              $region47: #{multi_resolution_stft_loss.5} parent=31 // pred_fallthru
                _
              // Predicated region
              $region55: #{multi_resolution_stft_loss.5} parent=31 // pred_check
                _
              $region56: #{multi_resolution_stft_loss.5} parent=31 // pred_check_branch
                %338 = sbr.rel target = $region58
              $region57: #{multi_resolution_stft_loss.5} parent=31 // pred_region
                _
              $region58: #{multi_resolution_stft_loss.5} parent=31 // pred_fallthru
                _
            $region32: #{multi_resolution_stft_loss.5} parent=27 // pred_fallthru
              _
            // Predicated region
            $region33: #{multi_resolution_stft_loss.5} parent=27 // pred_check
              _
            $region34: #{multi_resolution_stft_loss.5} parent=27 // pred_check_branch
              %188 = sbr.rel target = $region36
            $region35: #{multi_resolution_stft_loss.5} parent=27 // pred_region
              %s190 = ssub.s32 256, 1
              loop: start=0, step=1, limit=1
              $region37: #{multi_resolution_stft_loss.5} parent=35 // loop_pre_header
                _
              $region38: #{multi_resolution_stft_loss.5} parent=35 // loop_header
                %s192 = sphi 0, %s196
                %p193 = scmp.ge.s32.totalorder %s192, 1
                %s197 = sphi %s182, %s182
                %s198 = sphi %s178, %s178
              $region39: #{multi_resolution_stft_loss.5} parent=35 // loop_header_branch
                %195 = sbr.rel (%p193) target = $region43
              $region40: #{multi_resolution_stft_loss.5} parent=35 // loop_body
                %v199 = vld [vmem:[%s197] sm:%s190]
                %200 = vst [vmem:[%s198] sm:%s190] %v199
                %v201 = vld [vmem:[%s197 + $0x8] sm:%s190]
                %202 = vst [vmem:[%s198 + $0x8] sm:%s190] %v201
                %v203 = vld [vmem:[%s197 + $0x10] sm:%s190]
                %204 = vst [vmem:[%s198 + $0x10] sm:%s190] %v203
                %v205 = vld [vmem:[%s197 + $0x18] sm:%s190]
                %206 = vst [vmem:[%s198 + $0x18] sm:%s190] %v205
                %v207 = vld [vmem:[%s197 + $0x20] sm:%s190]
                %208 = vst [vmem:[%s198 + $0x20] sm:%s190] %v207
                %v209 = vld [vmem:[%s197 + $0x28] sm:%s190]
                %210 = vst [vmem:[%s198 + $0x28] sm:%s190] %v209
                %v211 = vld [vmem:[%s197 + $0x30] sm:%s190]
                %212 = vst [vmem:[%s198 + $0x30] sm:%s190] %v211
                %v213 = vld [vmem:[%s197 + $0x38] sm:%s190]
                %214 = vst [vmem:[%s198 + $0x38] sm:%s190] %v213
                %v215 = vld [vmem:[%s197 + $0x40] sm:%s190]
                %216 = vst [vmem:[%s198 + $0x40] sm:%s190] %v215
                %v217 = vld [vmem:[%s197 + $0x48] sm:%s190]
                %218 = vst [vmem:[%s198 + $0x48] sm:%s190] %v217
                %v219 = vld [vmem:[%s197 + $0x50] sm:%s190]
                %220 = vst [vmem:[%s198 + $0x50] sm:%s190] %v219
                %v221 = vld [vmem:[%s197 + $0x58] sm:%s190]
                %222 = vst [vmem:[%s198 + $0x58] sm:%s190] %v221
                %v223 = vld [vmem:[%s197 + $0x60] sm:%s190]
                %224 = vst [vmem:[%s198 + $0x60] sm:%s190] %v223
                %v225 = vld [vmem:[%s197 + $0x68] sm:%s190]
                %226 = vst [vmem:[%s198 + $0x68] sm:%s190] %v225
                %v227 = vld [vmem:[%s197 + $0x70] sm:%s190]
                %228 = vst [vmem:[%s198 + $0x70] sm:%s190] %v227
                %v229 = vld [vmem:[%s197 + $0x78] sm:%s190]
                %230 = vst [vmem:[%s198 + $0x78] sm:%s190] %v229
                %v231 = vld [vmem:[%s197 + $0x100] sm:%s190]
                %232 = vst [vmem:[%s198 + $0x80] sm:%s190] %v231
                %v233 = vld [vmem:[%s197 + $0x108] sm:%s190]
                %234 = vst [vmem:[%s198 + $0x88] sm:%s190] %v233
                %v235 = vld [vmem:[%s197 + $0x110] sm:%s190]
                %236 = vst [vmem:[%s198 + $0x90] sm:%s190] %v235
                %v237 = vld [vmem:[%s197 + $0x118] sm:%s190]
                %238 = vst [vmem:[%s198 + $0x98] sm:%s190] %v237
                %v239 = vld [vmem:[%s197 + $0x120] sm:%s190]
                %240 = vst [vmem:[%s198 + $0xa0] sm:%s190] %v239
                %v241 = vld [vmem:[%s197 + $0x128] sm:%s190]
                %242 = vst [vmem:[%s198 + $0xa8] sm:%s190] %v241
                %v243 = vld [vmem:[%s197 + $0x130] sm:%s190]
                %244 = vst [vmem:[%s198 + $0xb0] sm:%s190] %v243
                %v245 = vld [vmem:[%s197 + $0x138] sm:%s190]
                %246 = vst [vmem:[%s198 + $0xb8] sm:%s190] %v245
                %v247 = vld [vmem:[%s197 + $0x140] sm:%s190]
                %248 = vst [vmem:[%s198 + $0xc0] sm:%s190] %v247
                %v249 = vld [vmem:[%s197 + $0x148] sm:%s190]
                %250 = vst [vmem:[%s198 + $0xc8] sm:%s190] %v249
                %v251 = vld [vmem:[%s197 + $0x150] sm:%s190]
                %252 = vst [vmem:[%s198 + $0xd0] sm:%s190] %v251
                %v253 = vld [vmem:[%s197 + $0x158] sm:%s190]
                %254 = vst [vmem:[%s198 + $0xd8] sm:%s190] %v253
                %v255 = vld [vmem:[%s197 + $0x160] sm:%s190]
                %256 = vst [vmem:[%s198 + $0xe0] sm:%s190] %v255
                %v257 = vld [vmem:[%s197 + $0x168] sm:%s190]
                %258 = vst [vmem:[%s198 + $0xe8] sm:%s190] %v257
                %v259 = vld [vmem:[%s197 + $0x170] sm:%s190]
                %260 = vst [vmem:[%s198 + $0xf0] sm:%s190] %v259
                %v261 = vld [vmem:[%s197 + $0x178] sm:%s190]
                %262 = vst [vmem:[%s198 + $0xf8] sm:%s190] %v261
              $region41: #{multi_resolution_stft_loss.5} parent=35 // loop_footer
                %s196 = sadd.s32 1, %s192
              $region42: #{multi_resolution_stft_loss.5} parent=35 // loop_footer_branch
                %191 = sbr.rel target = $region38
              $region43: #{multi_resolution_stft_loss.5} parent=35 // loop_exit
                _
            $region36: #{multi_resolution_stft_loss.5} parent=27 // pred_fallthru
              _
          $region28: #{multi_resolution_stft_loss.5} parent=23 // pred_fallthru
            _
          %339 = vnop
        $region24: #{multi_resolution_stft_loss.5} parent=19 // pred_fallthru
          _
      $region20: #{multi_resolution_stft_loss.5} parent=5 // pred_fallthru
        _
      %p340 = scmp.le.s32.totalorder 1, %s11
      %p341 = scmp.lt.s32.totalorder %s11, 3
      %p342 = pnand %p340, %p341
      %p343 = pneg %p342
      // Predicated region
      $region59: #{multi_resolution_stft_loss.5} parent=5 // pred_check
        _
      $region60: #{multi_resolution_stft_loss.5} parent=5 // pred_check_branch
        %345 = sbr.rel (%p342) target = $region62
      $region61: #{multi_resolution_stft_loss.5} parent=5 // pred_region
        %s346 = ssub.s32 %s11, 1
        %s347 = sand.u32 %s38, 1
        %s348 = sand.u32 %s38, 1
        %s349 = smul.addr %s348, 256
        %s350 = scalar_lea.vmem [#allocation5], %s349
        // Predicated region
        $region63: #{multi_resolution_stft_loss.5} parent=61 // pred_check
          %p351 = pneg %p51
        $region64: #{multi_resolution_stft_loss.5} parent=61 // pred_check_branch
          %353 = sbr.rel (%p351) target = $region66
        $region65: #{multi_resolution_stft_loss.5} parent=61 // pred_region
          _
        $region66: #{multi_resolution_stft_loss.5} parent=61 // pred_fallthru
          _
        %s354 = sand.u32 %s38, 1
        %s355 = sand.u32 %s38, 1
        %s356 = smul.addr %s355, 256
        %s357 = scalar_lea.vmem [#allocation5], %s356
        %p358 = pneg %p51
        %p359 = pneg %p48
        %p360 = pneg %p72
        %p361 = pneg %p69
        %p362 = pneg %p98
        %p363 = pneg %p95
        %p364 = scmp.lt.s32.totalorder %s20, 1
        %s365 = scalar_select %p364, %s20, 1
        %s366 = smul.addr %s365, 16
        %s367 = smul.addr %s366, 8
        %s368 = scalar_lea.vmem %s2, %s367
        %p369 = pneg %p124
        %p370 = pneg %p121
        %p371 = scmp.lt.s32.totalorder %s20, 1
        %s372 = scalar_select %p371, %s20, 1
        %s373 = smul.addr %s372, 16
        %s374 = smul.addr %s373, 8
        %s375 = scalar_lea.vmem %s3, %s374
        %p376 = pneg %p150
        %p377 = pneg %p147
        %p378 = scmp.lt.s32.totalorder %s20, 1
        %s379 = scalar_select %p378, %s20, 1
        %s380 = smul.addr %s379, 16
        %s381 = smul.addr %s380, 8
        %s382 = scalar_lea.vmem %s4, %s381
        %s383 = sadd.s32 %s20, %s21
        %s384 = smul.u32 16, %s383
        %p385 = scmp.lt.s32.totalorder %s20, 1
        %s386 = scalar_select %p385, %s20, 1
        %s387 = smul.addr %s386, 16
        %s388 = smul.addr %s387, 8
        %s389 = scalar_lea.vmem %s2, %s388
        %p390 = scmp.lt.s32.totalorder %s20, 1
        %s391 = scalar_select %p390, %s20, 1
        %s392 = smul.addr %s391, 16
        %s393 = smul.addr %s392, 8
        %s394 = scalar_lea.vmem %s3, %s393
        %p395 = scmp.lt.s32.totalorder %s20, 1
        %s396 = scalar_select %p395, %s20, 1
        %s397 = smul.addr %s396, 16
        %s398 = smul.addr %s397, 8
        %s399 = scalar_lea.vmem %s4, %s398
        %p400 = scmp.eq.s32.totalorder %s21, 0
        // Predicated region
        $region67: #{multi_resolution_stft_loss.5} parent=61 // pred_check
          %p401 = pneg %p400
        $region68: #{multi_resolution_stft_loss.5} parent=61 // pred_check_branch
          %403 = sbr.rel (%p401) target = $region70
        $region69: #{multi_resolution_stft_loss.5} parent=61 // pred_region
          %404 = vst [vmem:[#allocation2] sm:$0xff] 0.0
          %405 = vst [vmem:[#allocation2 + $0x8] sm:$0xff] 0.0
          %406 = vst [vmem:[#allocation2 + $0x10] sm:$0xff] 0.0
          %407 = vst [vmem:[#allocation2 + $0x18] sm:$0xff] 0.0
          %408 = vst [vmem:[#allocation2 + $0x20] sm:$0xff] 0.0
          %409 = vst [vmem:[#allocation2 + $0x28] sm:$0xff] 0.0
          %410 = vst [vmem:[#allocation2 + $0x30] sm:$0xff] 0.0
          %411 = vst [vmem:[#allocation2 + $0x38] sm:$0xff] 0.0
          %412 = vst [vmem:[#allocation2 + $0x40] sm:$0xff] 0.0
          %413 = vst [vmem:[#allocation2 + $0x48] sm:$0xff] 0.0
          %414 = vst [vmem:[#allocation2 + $0x50] sm:$0xff] 0.0
          %415 = vst [vmem:[#allocation2 + $0x58] sm:$0xff] 0.0
          %416 = vst [vmem:[#allocation2 + $0x60] sm:$0xff] 0.0
          %417 = vst [vmem:[#allocation2 + $0x68] sm:$0xff] 0.0
          %418 = vst [vmem:[#allocation2 + $0x70] sm:$0xff] 0.0
          %419 = vst [vmem:[#allocation2 + $0x78] sm:$0xff] 0.0
          %420 = vst [vmem:[#allocation3] sm:$0xff] 0.0
          %421 = vst [vmem:[#allocation3 + $0x8] sm:$0xff] 0.0
          %422 = vst [vmem:[#allocation3 + $0x10] sm:$0xff] 0.0
          %423 = vst [vmem:[#allocation3 + $0x18] sm:$0xff] 0.0
          %424 = vst [vmem:[#allocation3 + $0x20] sm:$0xff] 0.0
          %425 = vst [vmem:[#allocation3 + $0x28] sm:$0xff] 0.0
          %426 = vst [vmem:[#allocation3 + $0x30] sm:$0xff] 0.0
          %427 = vst [vmem:[#allocation3 + $0x38] sm:$0xff] 0.0
          %428 = vst [vmem:[#allocation3 + $0x40] sm:$0xff] 0.0
          %429 = vst [vmem:[#allocation3 + $0x48] sm:$0xff] 0.0
          %430 = vst [vmem:[#allocation3 + $0x50] sm:$0xff] 0.0
          %431 = vst [vmem:[#allocation3 + $0x58] sm:$0xff] 0.0
          %432 = vst [vmem:[#allocation3 + $0x60] sm:$0xff] 0.0
          %433 = vst [vmem:[#allocation3 + $0x68] sm:$0xff] 0.0
          %434 = vst [vmem:[#allocation3 + $0x70] sm:$0xff] 0.0
          %435 = vst [vmem:[#allocation3 + $0x78] sm:$0xff] 0.0
          %436 = vst [vmem:[#allocation4] sm:$0xff] 0.0
          %437 = vst [vmem:[#allocation4 + $0x8] sm:$0xff] 0.0
          %438 = vst [vmem:[#allocation4 + $0x10] sm:$0xff] 0.0
          %439 = vst [vmem:[#allocation4 + $0x18] sm:$0xff] 0.0
          %440 = vst [vmem:[#allocation4 + $0x20] sm:$0xff] 0.0
          %441 = vst [vmem:[#allocation4 + $0x28] sm:$0xff] 0.0
          %442 = vst [vmem:[#allocation4 + $0x30] sm:$0xff] 0.0
          %443 = vst [vmem:[#allocation4 + $0x38] sm:$0xff] 0.0
          %444 = vst [vmem:[#allocation4 + $0x40] sm:$0xff] 0.0
          %445 = vst [vmem:[#allocation4 + $0x48] sm:$0xff] 0.0
          %446 = vst [vmem:[#allocation4 + $0x50] sm:$0xff] 0.0
          %447 = vst [vmem:[#allocation4 + $0x58] sm:$0xff] 0.0
          %448 = vst [vmem:[#allocation4 + $0x60] sm:$0xff] 0.0
          %449 = vst [vmem:[#allocation4 + $0x68] sm:$0xff] 0.0
          %450 = vst [vmem:[#allocation4 + $0x70] sm:$0xff] 0.0
          %451 = vst [vmem:[#allocation4 + $0x78] sm:$0xff] 0.0
        $region70: #{multi_resolution_stft_loss.5} parent=61 // pred_fallthru
          _
        %v452 = vld [vmem:[%s350] sm:$0xff]
        %v453 = vld [vmem:[%s350 + $0x8] sm:$0xff]
        %v454 = vld [vmem:[%s350 + $0x10] sm:$0xff]
        %v455 = vld [vmem:[%s350 + $0x18] sm:$0xff]
        %v456 = vld [vmem:[%s350 + $0x20] sm:$0xff]
        %v457 = vld [vmem:[%s350 + $0x28] sm:$0xff]
        %v458 = vld [vmem:[%s350 + $0x30] sm:$0xff]
        %v459 = vld [vmem:[%s350 + $0x38] sm:$0xff]
        %v460 = vld [vmem:[%s350 + $0x40] sm:$0xff]
        %v461 = vld [vmem:[%s350 + $0x48] sm:$0xff]
        %v462 = vld [vmem:[%s350 + $0x50] sm:$0xff]
        %v463 = vld [vmem:[%s350 + $0x58] sm:$0xff]
        %v464 = vld [vmem:[%s350 + $0x60] sm:$0xff]
        %v465 = vld [vmem:[%s350 + $0x68] sm:$0xff]
        %v466 = vld [vmem:[%s350 + $0x70] sm:$0xff]
        %v467 = vld [vmem:[%s350 + $0x78] sm:$0xff]
        %v468 = vld [vmem:[%s350 + $0x80] sm:$0xff]
        %v469 = vld [vmem:[%s350 + $0x88] sm:$0xff]
        %v470 = vld [vmem:[%s350 + $0x90] sm:$0xff]
        %v471 = vld [vmem:[%s350 + $0x98] sm:$0xff]
        %v472 = vld [vmem:[%s350 + $0xa0] sm:$0xff]
        %v473 = vld [vmem:[%s350 + $0xa8] sm:$0xff]
        %v474 = vld [vmem:[%s350 + $0xb0] sm:$0xff]
        %v475 = vld [vmem:[%s350 + $0xb8] sm:$0xff]
        %v476 = vld [vmem:[%s350 + $0xc0] sm:$0xff]
        %v477 = vld [vmem:[%s350 + $0xc8] sm:$0xff]
        %v478 = vld [vmem:[%s350 + $0xd0] sm:$0xff]
        %v479 = vld [vmem:[%s350 + $0xd8] sm:$0xff]
        %v480 = vld [vmem:[%s350 + $0xe0] sm:$0xff]
        %v481 = vld [vmem:[%s350 + $0xe8] sm:$0xff]
        %v482 = vld [vmem:[%s350 + $0xf0] sm:$0xff]
        %v483 = vld [vmem:[%s350 + $0xf8] sm:$0xff]
        %v484 = vld [vmem:[%s1] sm:$0xff]
        %v485 = vld [vmem:[%s1 + $0x8] sm:$0xff]
        %v486 = vld [vmem:[%s1 + $0x10] sm:$0xff]
        %v487 = vld [vmem:[%s1 + $0x18] sm:$0xff]
        %v488 = vld [vmem:[%s1 + $0x20] sm:$0xff]
        %v489 = vld [vmem:[%s1 + $0x28] sm:$0xff]
        %v490 = vld [vmem:[%s1 + $0x30] sm:$0xff]
        %v491 = vld [vmem:[%s1 + $0x38] sm:$0xff]
        %v492 = vld [vmem:[%s1 + $0x40] sm:$0xff]
        %v493 = vld [vmem:[%s1 + $0x48] sm:$0xff]
        %v494 = vld [vmem:[%s1 + $0x50] sm:$0xff]
        %v495 = vld [vmem:[%s1 + $0x58] sm:$0xff]
        %v496 = vld [vmem:[%s1 + $0x60] sm:$0xff]
        %v497 = vld [vmem:[%s1 + $0x68] sm:$0xff]
        %v498 = vld [vmem:[%s1 + $0x70] sm:$0xff]
        %v499 = vld [vmem:[%s1 + $0x78] sm:$0xff]
        %v500 = vld [vmem:[%s1 + $0x80] sm:$0xff]
        %v501 = vld [vmem:[%s1 + $0x88] sm:$0xff]
        %v502 = vld [vmem:[%s1 + $0x90] sm:$0xff]
        %v503 = vld [vmem:[%s1 + $0x98] sm:$0xff]
        %v504 = vld [vmem:[%s1 + $0xa0] sm:$0xff]
        %v505 = vld [vmem:[%s1 + $0xa8] sm:$0xff]
        %v506 = vld [vmem:[%s1 + $0xb0] sm:$0xff]
        %v507 = vld [vmem:[%s1 + $0xb8] sm:$0xff]
        %v508 = vld [vmem:[%s1 + $0xc0] sm:$0xff]
        %v509 = vld [vmem:[%s1 + $0xc8] sm:$0xff]
        %v510 = vld [vmem:[%s1 + $0xd0] sm:$0xff]
        %v511 = vld [vmem:[%s1 + $0xd8] sm:$0xff]
        %v512 = vld [vmem:[%s1 + $0xe0] sm:$0xff]
        %v513 = vld [vmem:[%s1 + $0xe8] sm:$0xff]
        %v514 = vld [vmem:[%s1 + $0xf0] sm:$0xff]
        %v515 = vld [vmem:[%s1 + $0xf8] sm:$0xff]
        %516 = vmatpush.msra.mxu0 %v514
        %517 = vmatpush.msra.mxu0 %v512
        %518 = vmatpush.msra.mxu0 %v510
        %519 = vmatpush.msra.mxu0 %v508
        %520 = vmatpush.msra.mxu0 %v506
        %521 = vmatpush.msra.mxu0 %v504
        %522 = vmatpush.msra.mxu0 %v502
        %523 = vmatpush.msra.mxu0 %v500
        %524 = vmatpush.msra.mxu0 %v498
        %525 = vmatpush.msra.mxu0 %v496
        %526 = vmatpush.msra.mxu0 %v494
        %527 = vmatpush.msra.mxu0 %v492
        %528 = vmatpush.msra.mxu0 %v490
        %529 = vmatpush.msra.mxu0 %v488
        %530 = vmatpush.msra.mxu0 %v486
        %531 = vmatpush.msra.mxu0 %v484
        %532 = vmatmul.f32.gmra.mxu0 %v452
        %v533 = vpop.f32.mrf.mxu0
        %v534 = vadd.f32 0.0, %v533
        %535 = vmatmul.f32.gmra.mxu0 %v453
        %v536 = vpop.f32.mrf.mxu0
        %v537 = vadd.f32 0.0, %v536
        %538 = vmatmul.f32.gmra.mxu0 %v454
        %v539 = vpop.f32.mrf.mxu0
        %v540 = vadd.f32 0.0, %v539
        %541 = vmatmul.f32.gmra.mxu0 %v455
        %v542 = vpop.f32.mrf.mxu0
        %v543 = vadd.f32 0.0, %v542
        %544 = vmatmul.f32.gmra.mxu0 %v456
        %v545 = vpop.f32.mrf.mxu0
        %v546 = vadd.f32 0.0, %v545
        %547 = vmatmul.f32.gmra.mxu0 %v457
        %v548 = vpop.f32.mrf.mxu0
        %v549 = vadd.f32 0.0, %v548
        %550 = vmatmul.f32.gmra.mxu0 %v458
        %v551 = vpop.f32.mrf.mxu0
        %v552 = vadd.f32 0.0, %v551
        %553 = vmatmul.f32.gmra.mxu0 %v459
        %v554 = vpop.f32.mrf.mxu0
        %v555 = vadd.f32 0.0, %v554
        %556 = vmatmul.f32.gmra.mxu0 %v460
        %v557 = vpop.f32.mrf.mxu0
        %v558 = vadd.f32 0.0, %v557
        %559 = vmatmul.f32.gmra.mxu0 %v461
        %v560 = vpop.f32.mrf.mxu0
        %v561 = vadd.f32 0.0, %v560
        %562 = vmatmul.f32.gmra.mxu0 %v462
        %v563 = vpop.f32.mrf.mxu0
        %v564 = vadd.f32 0.0, %v563
        %565 = vmatmul.f32.gmra.mxu0 %v463
        %v566 = vpop.f32.mrf.mxu0
        %v567 = vadd.f32 0.0, %v566
        %568 = vmatmul.f32.gmra.mxu0 %v464
        %v569 = vpop.f32.mrf.mxu0
        %v570 = vadd.f32 0.0, %v569
        %571 = vmatmul.f32.gmra.mxu0 %v465
        %v572 = vpop.f32.mrf.mxu0
        %v573 = vadd.f32 0.0, %v572
        %574 = vmatmul.f32.gmra.mxu0 %v466
        %v575 = vpop.f32.mrf.mxu0
        %v576 = vadd.f32 0.0, %v575
        %577 = vmatmul.f32.gmra.mxu0 %v467
        %v578 = vpop.f32.mrf.mxu0
        %v579 = vadd.f32 0.0, %v578
        %580 = vmatmul.f32.gmra.mxu0 %v468
        %v581 = vpop.f32.mrf.mxu0
        %v582 = vadd.f32 0.0, %v581
        %583 = vmatmul.f32.gmra.mxu0 %v469
        %v584 = vpop.f32.mrf.mxu0
        %v585 = vadd.f32 0.0, %v584
        %586 = vmatmul.f32.gmra.mxu0 %v470
        %v587 = vpop.f32.mrf.mxu0
        %v588 = vadd.f32 0.0, %v587
        %589 = vmatmul.f32.gmra.mxu0 %v471
        %v590 = vpop.f32.mrf.mxu0
        %v591 = vadd.f32 0.0, %v590
        %592 = vmatmul.f32.gmra.mxu0 %v472
        %v593 = vpop.f32.mrf.mxu0
        %v594 = vadd.f32 0.0, %v593
        %595 = vmatmul.f32.gmra.mxu0 %v473
        %v596 = vpop.f32.mrf.mxu0
        %v597 = vadd.f32 0.0, %v596
        %598 = vmatmul.f32.gmra.mxu0 %v474
        %v599 = vpop.f32.mrf.mxu0
        %v600 = vadd.f32 0.0, %v599
        %601 = vmatmul.f32.gmra.mxu0 %v475
        %v602 = vpop.f32.mrf.mxu0
        %v603 = vadd.f32 0.0, %v602
        %604 = vmatmul.f32.gmra.mxu0 %v476
        %v605 = vpop.f32.mrf.mxu0
        %v606 = vadd.f32 0.0, %v605
        %607 = vmatmul.f32.gmra.mxu0 %v477
        %v608 = vpop.f32.mrf.mxu0
        %v609 = vadd.f32 0.0, %v608
        %610 = vmatmul.f32.gmra.mxu0 %v478
        %v611 = vpop.f32.mrf.mxu0
        %v612 = vadd.f32 0.0, %v611
        %613 = vmatmul.f32.gmra.mxu0 %v479
        %v614 = vpop.f32.mrf.mxu0
        %v615 = vadd.f32 0.0, %v614
        %616 = vmatmul.f32.gmra.mxu0 %v480
        %v617 = vpop.f32.mrf.mxu0
        %v618 = vadd.f32 0.0, %v617
        %619 = vmatmul.f32.gmra.mxu0 %v481
        %v620 = vpop.f32.mrf.mxu0
        %v621 = vadd.f32 0.0, %v620
        %622 = vmatmul.f32.gmra.mxu0 %v482
        %v623 = vpop.f32.mrf.mxu0
        %v624 = vadd.f32 0.0, %v623
        %625 = vmatmul.f32.gmra.mxu0 %v483
        %v626 = vpop.f32.mrf.mxu0
        %v627 = vadd.f32 0.0, %v626
        %628 = vdwg.mxu0
        %629 = vmatpush.msra.mxu0 %v515
        %630 = vmatpush.msra.mxu0 %v513
        %631 = vmatpush.msra.mxu0 %v511
        %632 = vmatpush.msra.mxu0 %v509
        %633 = vmatpush.msra.mxu0 %v507
        %634 = vmatpush.msra.mxu0 %v505
        %635 = vmatpush.msra.mxu0 %v503
        %636 = vmatpush.msra.mxu0 %v501
        %637 = vmatpush.msra.mxu0 %v499
        %638 = vmatpush.msra.mxu0 %v497
        %639 = vmatpush.msra.mxu0 %v495
        %640 = vmatpush.msra.mxu0 %v493
        %641 = vmatpush.msra.mxu0 %v491
        %642 = vmatpush.msra.mxu0 %v489
        %643 = vmatpush.msra.mxu0 %v487
        %644 = vmatpush.msra.mxu0 %v485
        %645 = vmatmul.f32.gmra.mxu0 %v452
        %v646 = vpop.f32.mrf.mxu0
        %v647 = vadd.f32 0.0, %v646
        %648 = vmatmul.f32.gmra.mxu0 %v453
        %v649 = vpop.f32.mrf.mxu0
        %v650 = vadd.f32 0.0, %v649
        %651 = vmatmul.f32.gmra.mxu0 %v454
        %v652 = vpop.f32.mrf.mxu0
        %v653 = vadd.f32 0.0, %v652
        %654 = vmatmul.f32.gmra.mxu0 %v455
        %v655 = vpop.f32.mrf.mxu0
        %v656 = vadd.f32 0.0, %v655
        %657 = vmatmul.f32.gmra.mxu0 %v456
        %v658 = vpop.f32.mrf.mxu0
        %v659 = vadd.f32 0.0, %v658
        %660 = vmatmul.f32.gmra.mxu0 %v457
        %v661 = vpop.f32.mrf.mxu0
        %v662 = vadd.f32 0.0, %v661
        %663 = vmatmul.f32.gmra.mxu0 %v458
        %v664 = vpop.f32.mrf.mxu0
        %v665 = vadd.f32 0.0, %v664
        %666 = vmatmul.f32.gmra.mxu0 %v459
        %v667 = vpop.f32.mrf.mxu0
        %v668 = vadd.f32 0.0, %v667
        %669 = vmatmul.f32.gmra.mxu0 %v460
        %v670 = vpop.f32.mrf.mxu0
        %v671 = vadd.f32 0.0, %v670
        %672 = vmatmul.f32.gmra.mxu0 %v461
        %v673 = vpop.f32.mrf.mxu0
        %v674 = vadd.f32 0.0, %v673
        %675 = vmatmul.f32.gmra.mxu0 %v462
        %v676 = vpop.f32.mrf.mxu0
        %v677 = vadd.f32 0.0, %v676
        %678 = vmatmul.f32.gmra.mxu0 %v463
        %v679 = vpop.f32.mrf.mxu0
        %v680 = vadd.f32 0.0, %v679
        %681 = vmatmul.f32.gmra.mxu0 %v464
        %v682 = vpop.f32.mrf.mxu0
        %v683 = vadd.f32 0.0, %v682
        %684 = vmatmul.f32.gmra.mxu0 %v465
        %v685 = vpop.f32.mrf.mxu0
        %v686 = vadd.f32 0.0, %v685
        %687 = vmatmul.f32.gmra.mxu0 %v466
        %v688 = vpop.f32.mrf.mxu0
        %v689 = vadd.f32 0.0, %v688
        %690 = vmatmul.f32.gmra.mxu0 %v467
        %v691 = vpop.f32.mrf.mxu0
        %v692 = vadd.f32 0.0, %v691
        %693 = vmatmul.f32.gmra.mxu0 %v468
        %v694 = vpop.f32.mrf.mxu0
        %v695 = vadd.f32 0.0, %v694
        %696 = vmatmul.f32.gmra.mxu0 %v469
        %v697 = vpop.f32.mrf.mxu0
        %v698 = vadd.f32 0.0, %v697
        %699 = vmatmul.f32.gmra.mxu0 %v470
        %v700 = vpop.f32.mrf.mxu0
        %v701 = vadd.f32 0.0, %v700
        %702 = vmatmul.f32.gmra.mxu0 %v471
        %v703 = vpop.f32.mrf.mxu0
        %v704 = vadd.f32 0.0, %v703
        %705 = vmatmul.f32.gmra.mxu0 %v472
        %v706 = vpop.f32.mrf.mxu0
        %v707 = vadd.f32 0.0, %v706
        %708 = vmatmul.f32.gmra.mxu0 %v473
        %v709 = vpop.f32.mrf.mxu0
        %v710 = vadd.f32 0.0, %v709
        %711 = vmatmul.f32.gmra.mxu0 %v474
        %v712 = vpop.f32.mrf.mxu0
        %v713 = vadd.f32 0.0, %v712
        %714 = vmatmul.f32.gmra.mxu0 %v475
        %v715 = vpop.f32.mrf.mxu0
        %v716 = vadd.f32 0.0, %v715
        %717 = vmatmul.f32.gmra.mxu0 %v476
        %v718 = vpop.f32.mrf.mxu0
        %v719 = vadd.f32 0.0, %v718
        %720 = vmatmul.f32.gmra.mxu0 %v477
        %v721 = vpop.f32.mrf.mxu0
        %v722 = vadd.f32 0.0, %v721
        %723 = vmatmul.f32.gmra.mxu0 %v478
        %v724 = vpop.f32.mrf.mxu0
        %v725 = vadd.f32 0.0, %v724
        %726 = vmatmul.f32.gmra.mxu0 %v479
        %v727 = vpop.f32.mrf.mxu0
        %v728 = vadd.f32 0.0, %v727
        %729 = vmatmul.f32.gmra.mxu0 %v480
        %v730 = vpop.f32.mrf.mxu0
        %v731 = vadd.f32 0.0, %v730
        %732 = vmatmul.f32.gmra.mxu0 %v481
        %v733 = vpop.f32.mrf.mxu0
        %v734 = vadd.f32 0.0, %v733
        %735 = vmatmul.f32.gmra.mxu0 %v482
        %v736 = vpop.f32.mrf.mxu0
        %v737 = vadd.f32 0.0, %v736
        %738 = vmatmul.f32.gmra.mxu0 %v483
        %v739 = vpop.f32.mrf.mxu0
        %v740 = vadd.f32 0.0, %v739
        %741 = vdwg.mxu0
        %v742 = vmul.f32 %v534, %v534
        %v743 = vmul.f32 %v537, %v537
        %v744 = vmul.f32 %v540, %v540
        %v745 = vmul.f32 %v543, %v543
        %v746 = vmul.f32 %v546, %v546
        %v747 = vmul.f32 %v549, %v549
        %v748 = vmul.f32 %v552, %v552
        %v749 = vmul.f32 %v555, %v555
        %v750 = vmul.f32 %v558, %v558
        %v751 = vmul.f32 %v561, %v561
        %v752 = vmul.f32 %v564, %v564
        %v753 = vmul.f32 %v567, %v567
        %v754 = vmul.f32 %v570, %v570
        %v755 = vmul.f32 %v573, %v573
        %v756 = vmul.f32 %v576, %v576
        %v757 = vmul.f32 %v579, %v579
        %v758 = vmul.f32 %v647, %v647
        %v759 = vmul.f32 %v650, %v650
        %v760 = vmul.f32 %v653, %v653
        %v761 = vmul.f32 %v656, %v656
        %v762 = vmul.f32 %v659, %v659
        %v763 = vmul.f32 %v662, %v662
        %v764 = vmul.f32 %v665, %v665
        %v765 = vmul.f32 %v668, %v668
        %v766 = vmul.f32 %v671, %v671
        %v767 = vmul.f32 %v674, %v674
        %v768 = vmul.f32 %v677, %v677
        %v769 = vmul.f32 %v680, %v680
        %v770 = vmul.f32 %v683, %v683
        %v771 = vmul.f32 %v686, %v686
        %v772 = vmul.f32 %v689, %v689
        %v773 = vmul.f32 %v692, %v692
        %v774 = vadd.f32 %v742, %v758
        %v775 = vadd.f32 %v743, %v759
        %v776 = vadd.f32 %v744, %v760
        %v777 = vadd.f32 %v745, %v761
        %v778 = vadd.f32 %v746, %v762
        %v779 = vadd.f32 %v747, %v763
        %v780 = vadd.f32 %v748, %v764
        %v781 = vadd.f32 %v749, %v765
        %v782 = vadd.f32 %v750, %v766
        %v783 = vadd.f32 %v751, %v767
        %v784 = vadd.f32 %v752, %v768
        %v785 = vadd.f32 %v753, %v769
        %v786 = vadd.f32 %v754, %v770
        %v787 = vadd.f32 %v755, %v771
        %v788 = vadd.f32 %v756, %v772
        %v789 = vadd.f32 %v757, %v773
        %v790 = vmul.f32 %v582, %v582
        %v791 = vmul.f32 %v585, %v585
        %v792 = vmul.f32 %v588, %v588
        %v793 = vmul.f32 %v591, %v591
        %v794 = vmul.f32 %v594, %v594
        %v795 = vmul.f32 %v597, %v597
        %v796 = vmul.f32 %v600, %v600
        %v797 = vmul.f32 %v603, %v603
        %v798 = vmul.f32 %v606, %v606
        %v799 = vmul.f32 %v609, %v609
        %v800 = vmul.f32 %v612, %v612
        %v801 = vmul.f32 %v615, %v615
        %v802 = vmul.f32 %v618, %v618
        %v803 = vmul.f32 %v621, %v621
        %v804 = vmul.f32 %v624, %v624
        %v805 = vmul.f32 %v627, %v627
        %v806 = vmul.f32 %v695, %v695
        %v807 = vmul.f32 %v698, %v698
        %v808 = vmul.f32 %v701, %v701
        %v809 = vmul.f32 %v704, %v704
        %v810 = vmul.f32 %v707, %v707
        %v811 = vmul.f32 %v710, %v710
        %v812 = vmul.f32 %v713, %v713
        %v813 = vmul.f32 %v716, %v716
        %v814 = vmul.f32 %v719, %v719
        %v815 = vmul.f32 %v722, %v722
        %v816 = vmul.f32 %v725, %v725
        %v817 = vmul.f32 %v728, %v728
        %v818 = vmul.f32 %v731, %v731
        %v819 = vmul.f32 %v734, %v734
        %v820 = vmul.f32 %v737, %v737
        %v821 = vmul.f32 %v740, %v740
        %v822 = vadd.f32 %v790, %v806
        %v823 = vadd.f32 %v791, %v807
        %v824 = vadd.f32 %v792, %v808
        %v825 = vadd.f32 %v793, %v809
        %v826 = vadd.f32 %v794, %v810
        %v827 = vadd.f32 %v795, %v811
        %v828 = vadd.f32 %v796, %v812
        %v829 = vadd.f32 %v797, %v813
        %v830 = vadd.f32 %v798, %v814
        %v831 = vadd.f32 %v799, %v815
        %v832 = vadd.f32 %v800, %v816
        %v833 = vadd.f32 %v801, %v817
        %v834 = vadd.f32 %v802, %v818
        %v835 = vadd.f32 %v803, %v819
        %v836 = vadd.f32 %v804, %v820
        %v837 = vadd.f32 %v805, %v821
        %v838 = vmul.f32 %v774, %v822
        %v839 = vmul.f32 %v775, %v823
        %v840 = vmul.f32 %v776, %v824
        %v841 = vmul.f32 %v777, %v825
        %v842 = vmul.f32 %v778, %v826
        %v843 = vmul.f32 %v779, %v827
        %v844 = vmul.f32 %v780, %v828
        %v845 = vmul.f32 %v781, %v829
        %v846 = vmul.f32 %v782, %v830
        %v847 = vmul.f32 %v783, %v831
        %v848 = vmul.f32 %v784, %v832
        %v849 = vmul.f32 %v785, %v833
        %v850 = vmul.f32 %v786, %v834
        %v851 = vmul.f32 %v787, %v835
        %v852 = vmul.f32 %v788, %v836
        %v853 = vmul.f32 %v789, %v837
        %v854 = vrsqrt.pop %v838
        %v855 = vmul.f32 %v854, %v838
        %v856 = vmul.f32 %v855, %v854
        %v857 = vmul.f32 0.5, %v856
        %v858 = vsub.f32 1.5, %v857
        %v859 = vmul.f32 %v854, %v858
        %v860 = vmul.f32 %v838, %v859
        %vm861 = vcmp.eq.f32.partialorder %v838, inf
        %v862 = vsel %vm861, %v838, %v860
        %vm863 = vcmp.eq.f32.partialorder %v838, 0.0
        %v864 = vand.u32 %v838, 2147483648
        %v865 = vsel %vm863, %v864, %v862
        %v866 = vrsqrt.pop %v839
        %v867 = vmul.f32 %v866, %v839
        %v868 = vmul.f32 %v867, %v866
        %v869 = vmul.f32 0.5, %v868
        %v870 = vsub.f32 1.5, %v869
        %v871 = vmul.f32 %v866, %v870
        %v872 = vmul.f32 %v839, %v871
        %vm873 = vcmp.eq.f32.partialorder %v839, inf
        %v874 = vsel %vm873, %v839, %v872
        %vm875 = vcmp.eq.f32.partialorder %v839, 0.0
        %v876 = vand.u32 %v839, 2147483648
        %v877 = vsel %vm875, %v876, %v874
        %v878 = vrsqrt.pop %v840
        %v879 = vmul.f32 %v878, %v840
        %v880 = vmul.f32 %v879, %v878
        %v881 = vmul.f32 0.5, %v880
        %v882 = vsub.f32 1.5, %v881
        %v883 = vmul.f32 %v878, %v882
        %v884 = vmul.f32 %v840, %v883
        %vm885 = vcmp.eq.f32.partialorder %v840, inf
        %v886 = vsel %vm885, %v840, %v884
        %vm887 = vcmp.eq.f32.partialorder %v840, 0.0
        %v888 = vand.u32 %v840, 2147483648
        %v889 = vsel %vm887, %v888, %v886
        %v890 = vrsqrt.pop %v841
        %v891 = vmul.f32 %v890, %v841
        %v892 = vmul.f32 %v891, %v890
        %v893 = vmul.f32 0.5, %v892
        %v894 = vsub.f32 1.5, %v893
        %v895 = vmul.f32 %v890, %v894
        %v896 = vmul.f32 %v841, %v895
        %vm897 = vcmp.eq.f32.partialorder %v841, inf
        %v898 = vsel %vm897, %v841, %v896
        %vm899 = vcmp.eq.f32.partialorder %v841, 0.0
        %v900 = vand.u32 %v841, 2147483648
        %v901 = vsel %vm899, %v900, %v898
        %v902 = vrsqrt.pop %v842
        %v903 = vmul.f32 %v902, %v842
        %v904 = vmul.f32 %v903, %v902
        %v905 = vmul.f32 0.5, %v904
        %v906 = vsub.f32 1.5, %v905
        %v907 = vmul.f32 %v902, %v906
        %v908 = vmul.f32 %v842, %v907
        %vm909 = vcmp.eq.f32.partialorder %v842, inf
        %v910 = vsel %vm909, %v842, %v908
        %vm911 = vcmp.eq.f32.partialorder %v842, 0.0
        %v912 = vand.u32 %v842, 2147483648
        %v913 = vsel %vm911, %v912, %v910
        %v914 = vrsqrt.pop %v843
        %v915 = vmul.f32 %v914, %v843
        %v916 = vmul.f32 %v915, %v914
        %v917 = vmul.f32 0.5, %v916
        %v918 = vsub.f32 1.5, %v917
        %v919 = vmul.f32 %v914, %v918
        %v920 = vmul.f32 %v843, %v919
        %vm921 = vcmp.eq.f32.partialorder %v843, inf
        %v922 = vsel %vm921, %v843, %v920
        %vm923 = vcmp.eq.f32.partialorder %v843, 0.0
        %v924 = vand.u32 %v843, 2147483648
        %v925 = vsel %vm923, %v924, %v922
        %v926 = vrsqrt.pop %v844
        %v927 = vmul.f32 %v926, %v844
        %v928 = vmul.f32 %v927, %v926
        %v929 = vmul.f32 0.5, %v928
        %v930 = vsub.f32 1.5, %v929
        %v931 = vmul.f32 %v926, %v930
        %v932 = vmul.f32 %v844, %v931
        %vm933 = vcmp.eq.f32.partialorder %v844, inf
        %v934 = vsel %vm933, %v844, %v932
        %vm935 = vcmp.eq.f32.partialorder %v844, 0.0
        %v936 = vand.u32 %v844, 2147483648
        %v937 = vsel %vm935, %v936, %v934
        %v938 = vrsqrt.pop %v845
        %v939 = vmul.f32 %v938, %v845
        %v940 = vmul.f32 %v939, %v938
        %v941 = vmul.f32 0.5, %v940
        %v942 = vsub.f32 1.5, %v941
        %v943 = vmul.f32 %v938, %v942
        %v944 = vmul.f32 %v845, %v943
        %vm945 = vcmp.eq.f32.partialorder %v845, inf
        %v946 = vsel %vm945, %v845, %v944
        %vm947 = vcmp.eq.f32.partialorder %v845, 0.0
        %v948 = vand.u32 %v845, 2147483648
        %v949 = vsel %vm947, %v948, %v946
        %v950 = vrsqrt.pop %v846
        %v951 = vmul.f32 %v950, %v846
        %v952 = vmul.f32 %v951, %v950
        %v953 = vmul.f32 0.5, %v952
        %v954 = vsub.f32 1.5, %v953
        %v955 = vmul.f32 %v950, %v954
        %v956 = vmul.f32 %v846, %v955
        %vm957 = vcmp.eq.f32.partialorder %v846, inf
        %v958 = vsel %vm957, %v846, %v956
        %vm959 = vcmp.eq.f32.partialorder %v846, 0.0
        %v960 = vand.u32 %v846, 2147483648
        %v961 = vsel %vm959, %v960, %v958
        %v962 = vrsqrt.pop %v847
        %v963 = vmul.f32 %v962, %v847
        %v964 = vmul.f32 %v963, %v962
        %v965 = vmul.f32 0.5, %v964
        %v966 = vsub.f32 1.5, %v965
        %v967 = vmul.f32 %v962, %v966
        %v968 = vmul.f32 %v847, %v967
        %vm969 = vcmp.eq.f32.partialorder %v847, inf
        %v970 = vsel %vm969, %v847, %v968
        %vm971 = vcmp.eq.f32.partialorder %v847, 0.0
        %v972 = vand.u32 %v847, 2147483648
        %v973 = vsel %vm971, %v972, %v970
        %v974 = vrsqrt.pop %v848
        %v975 = vmul.f32 %v974, %v848
        %v976 = vmul.f32 %v975, %v974
        %v977 = vmul.f32 0.5, %v976
        %v978 = vsub.f32 1.5, %v977
        %v979 = vmul.f32 %v974, %v978
        %v980 = vmul.f32 %v848, %v979
        %vm981 = vcmp.eq.f32.partialorder %v848, inf
        %v982 = vsel %vm981, %v848, %v980
        %vm983 = vcmp.eq.f32.partialorder %v848, 0.0
        %v984 = vand.u32 %v848, 2147483648
        %v985 = vsel %vm983, %v984, %v982
        %v986 = vrsqrt.pop %v849
        %v987 = vmul.f32 %v986, %v849
        %v988 = vmul.f32 %v987, %v986
        %v989 = vmul.f32 0.5, %v988
        %v990 = vsub.f32 1.5, %v989
        %v991 = vmul.f32 %v986, %v990
        %v992 = vmul.f32 %v849, %v991
        %vm993 = vcmp.eq.f32.partialorder %v849, inf
        %v994 = vsel %vm993, %v849, %v992
        %vm995 = vcmp.eq.f32.partialorder %v849, 0.0
        %v996 = vand.u32 %v849, 2147483648
        %v997 = vsel %vm995, %v996, %v994
        %v998 = vrsqrt.pop %v850
        %v999 = vmul.f32 %v998, %v850
        %v1000 = vmul.f32 %v999, %v998
        %v1001 = vmul.f32 0.5, %v1000
        %v1002 = vsub.f32 1.5, %v1001
        %v1003 = vmul.f32 %v998, %v1002
        %v1004 = vmul.f32 %v850, %v1003
        %vm1005 = vcmp.eq.f32.partialorder %v850, inf
        %v1006 = vsel %vm1005, %v850, %v1004
        %vm1007 = vcmp.eq.f32.partialorder %v850, 0.0
        %v1008 = vand.u32 %v850, 2147483648
        %v1009 = vsel %vm1007, %v1008, %v1006
        %v1010 = vrsqrt.pop %v851
        %v1011 = vmul.f32 %v1010, %v851
        %v1012 = vmul.f32 %v1011, %v1010
        %v1013 = vmul.f32 0.5, %v1012
        %v1014 = vsub.f32 1.5, %v1013
        %v1015 = vmul.f32 %v1010, %v1014
        %v1016 = vmul.f32 %v851, %v1015
        %vm1017 = vcmp.eq.f32.partialorder %v851, inf
        %v1018 = vsel %vm1017, %v851, %v1016
        %vm1019 = vcmp.eq.f32.partialorder %v851, 0.0
        %v1020 = vand.u32 %v851, 2147483648
        %v1021 = vsel %vm1019, %v1020, %v1018
        %v1022 = vrsqrt.pop %v852
        %v1023 = vmul.f32 %v1022, %v852
        %v1024 = vmul.f32 %v1023, %v1022
        %v1025 = vmul.f32 0.5, %v1024
        %v1026 = vsub.f32 1.5, %v1025
        %v1027 = vmul.f32 %v1022, %v1026
        %v1028 = vmul.f32 %v852, %v1027
        %vm1029 = vcmp.eq.f32.partialorder %v852, inf
        %v1030 = vsel %vm1029, %v852, %v1028
        %vm1031 = vcmp.eq.f32.partialorder %v852, 0.0
        %v1032 = vand.u32 %v852, 2147483648
        %v1033 = vsel %vm1031, %v1032, %v1030
        %v1034 = vrsqrt.pop %v853
        %v1035 = vmul.f32 %v1034, %v853
        %v1036 = vmul.f32 %v1035, %v1034
        %v1037 = vmul.f32 0.5, %v1036
        %v1038 = vsub.f32 1.5, %v1037
        %v1039 = vmul.f32 %v1034, %v1038
        %v1040 = vmul.f32 %v853, %v1039
        %vm1041 = vcmp.eq.f32.partialorder %v853, inf
        %v1042 = vsel %vm1041, %v853, %v1040
        %vm1043 = vcmp.eq.f32.partialorder %v853, 0.0
        %v1044 = vand.u32 %v853, 2147483648
        %v1045 = vsel %vm1043, %v1044, %v1042
        %v1046 = vld [vmem:[#allocation2] sm:$0xff]
        %v1047 = vld [vmem:[#allocation2 + $0x8] sm:$0xff]
        %v1048 = vld [vmem:[#allocation2 + $0x10] sm:$0xff]
        %v1049 = vld [vmem:[#allocation2 + $0x18] sm:$0xff]
        %v1050 = vld [vmem:[#allocation2 + $0x20] sm:$0xff]
        %v1051 = vld [vmem:[#allocation2 + $0x28] sm:$0xff]
        %v1052 = vld [vmem:[#allocation2 + $0x30] sm:$0xff]
        %v1053 = vld [vmem:[#allocation2 + $0x38] sm:$0xff]
        %v1054 = vld [vmem:[#allocation2 + $0x40] sm:$0xff]
        %v1055 = vld [vmem:[#allocation2 + $0x48] sm:$0xff]
        %v1056 = vld [vmem:[#allocation2 + $0x50] sm:$0xff]
        %v1057 = vld [vmem:[#allocation2 + $0x58] sm:$0xff]
        %v1058 = vld [vmem:[#allocation2 + $0x60] sm:$0xff]
        %v1059 = vld [vmem:[#allocation2 + $0x68] sm:$0xff]
        %v1060 = vld [vmem:[#allocation2 + $0x70] sm:$0xff]
        %v1061 = vld [vmem:[#allocation2 + $0x78] sm:$0xff]
        %v1062 = vadd.f32 %v822, %v774
        %v1063 = vadd.f32 %v823, %v775
        %v1064 = vadd.f32 %v824, %v776
        %v1065 = vadd.f32 %v825, %v777
        %v1066 = vadd.f32 %v826, %v778
        %v1067 = vadd.f32 %v827, %v779
        %v1068 = vadd.f32 %v828, %v780
        %v1069 = vadd.f32 %v829, %v781
        %v1070 = vadd.f32 %v830, %v782
        %v1071 = vadd.f32 %v831, %v783
        %v1072 = vadd.f32 %v832, %v784
        %v1073 = vadd.f32 %v833, %v785
        %v1074 = vadd.f32 %v834, %v786
        %v1075 = vadd.f32 %v835, %v787
        %v1076 = vadd.f32 %v836, %v788
        %v1077 = vadd.f32 %v837, %v789
        %v1078 = vmul.f32 %v865, 2.0
        %v1079 = vmul.f32 %v877, 2.0
        %v1080 = vmul.f32 %v889, 2.0
        %v1081 = vmul.f32 %v901, 2.0
        %v1082 = vmul.f32 %v913, 2.0
        %v1083 = vmul.f32 %v925, 2.0
        %v1084 = vmul.f32 %v937, 2.0
        %v1085 = vmul.f32 %v949, 2.0
        %v1086 = vmul.f32 %v961, 2.0
        %v1087 = vmul.f32 %v973, 2.0
        %v1088 = vmul.f32 %v985, 2.0
        %v1089 = vmul.f32 %v997, 2.0
        %v1090 = vmul.f32 %v1009, 2.0
        %v1091 = vmul.f32 %v1021, 2.0
        %v1092 = vmul.f32 %v1033, 2.0
        %v1093 = vmul.f32 %v1045, 2.0
        %v1094 = vsub.f32 %v1062, %v1078
        %v1095 = vsub.f32 %v1063, %v1079
        %v1096 = vsub.f32 %v1064, %v1080
        %v1097 = vsub.f32 %v1065, %v1081
        %v1098 = vsub.f32 %v1066, %v1082
        %v1099 = vsub.f32 %v1067, %v1083
        %v1100 = vsub.f32 %v1068, %v1084
        %v1101 = vsub.f32 %v1069, %v1085
        %v1102 = vsub.f32 %v1070, %v1086
        %v1103 = vsub.f32 %v1071, %v1087
        %v1104 = vsub.f32 %v1072, %v1088
        %v1105 = vsub.f32 %v1073, %v1089
        %v1106 = vsub.f32 %v1074, %v1090
        %v1107 = vsub.f32 %v1075, %v1091
        %v1108 = vsub.f32 %v1076, %v1092
        %v1109 = vsub.f32 %v1077, %v1093
        %v1110 = vmax.f32 %v1094, 0.0
        %v1111 = vmax.f32 %v1095, 0.0
        %v1112 = vmax.f32 %v1096, 0.0
        %v1113 = vmax.f32 %v1097, 0.0
        %v1114 = vmax.f32 %v1098, 0.0
        %v1115 = vmax.f32 %v1099, 0.0
        %v1116 = vmax.f32 %v1100, 0.0
        %v1117 = vmax.f32 %v1101, 0.0
        %v1118 = vmax.f32 %v1102, 0.0
        %v1119 = vmax.f32 %v1103, 0.0
        %v1120 = vmax.f32 %v1104, 0.0
        %v1121 = vmax.f32 %v1105, 0.0
        %v1122 = vmax.f32 %v1106, 0.0
        %v1123 = vmax.f32 %v1107, 0.0
        %v1124 = vmax.f32 %v1108, 0.0
        %v1125 = vmax.f32 %v1109, 0.0
        %v1126 = vadd.f32 %v1046, %v1110
        %v1127 = vadd.f32 %v1047, %v1111
        %v1128 = vadd.f32 %v1048, %v1112
        %v1129 = vadd.f32 %v1049, %v1113
        %v1130 = vadd.f32 %v1050, %v1114
        %v1131 = vadd.f32 %v1051, %v1115
        %v1132 = vadd.f32 %v1052, %v1116
        %v1133 = vadd.f32 %v1053, %v1117
        %v1134 = vadd.f32 %v1054, %v1118
        %v1135 = vadd.f32 %v1055, %v1119
        %v1136 = vadd.f32 %v1056, %v1120
        %v1137 = vadd.f32 %v1057, %v1121
        %v1138 = vadd.f32 %v1058, %v1122
        %v1139 = vadd.f32 %v1059, %v1123
        %v1140 = vadd.f32 %v1060, %v1124
        %v1141 = vadd.f32 %v1061, %v1125
        %1142 = vst [vmem:[#allocation2] sm:$0xff] %v1126
        %1143 = vst [vmem:[#allocation2 + $0x8] sm:$0xff] %v1127
        %1144 = vst [vmem:[#allocation2 + $0x10] sm:$0xff] %v1128
        %1145 = vst [vmem:[#allocation2 + $0x18] sm:$0xff] %v1129
        %1146 = vst [vmem:[#allocation2 + $0x20] sm:$0xff] %v1130
        %1147 = vst [vmem:[#allocation2 + $0x28] sm:$0xff] %v1131
        %1148 = vst [vmem:[#allocation2 + $0x30] sm:$0xff] %v1132
        %1149 = vst [vmem:[#allocation2 + $0x38] sm:$0xff] %v1133
        %1150 = vst [vmem:[#allocation2 + $0x40] sm:$0xff] %v1134
        %1151 = vst [vmem:[#allocation2 + $0x48] sm:$0xff] %v1135
        %1152 = vst [vmem:[#allocation2 + $0x50] sm:$0xff] %v1136
        %1153 = vst [vmem:[#allocation2 + $0x58] sm:$0xff] %v1137
        %1154 = vst [vmem:[#allocation2 + $0x60] sm:$0xff] %v1138
        %1155 = vst [vmem:[#allocation2 + $0x68] sm:$0xff] %v1139
        %1156 = vst [vmem:[#allocation2 + $0x70] sm:$0xff] %v1140
        %1157 = vst [vmem:[#allocation2 + $0x78] sm:$0xff] %v1141
        %v1158 = vld [vmem:[#allocation3] sm:$0xff]
        %v1159 = vld [vmem:[#allocation3 + $0x8] sm:$0xff]
        %v1160 = vld [vmem:[#allocation3 + $0x10] sm:$0xff]
        %v1161 = vld [vmem:[#allocation3 + $0x18] sm:$0xff]
        %v1162 = vld [vmem:[#allocation3 + $0x20] sm:$0xff]
        %v1163 = vld [vmem:[#allocation3 + $0x28] sm:$0xff]
        %v1164 = vld [vmem:[#allocation3 + $0x30] sm:$0xff]
        %v1165 = vld [vmem:[#allocation3 + $0x38] sm:$0xff]
        %v1166 = vld [vmem:[#allocation3 + $0x40] sm:$0xff]
        %v1167 = vld [vmem:[#allocation3 + $0x48] sm:$0xff]
        %v1168 = vld [vmem:[#allocation3 + $0x50] sm:$0xff]
        %v1169 = vld [vmem:[#allocation3 + $0x58] sm:$0xff]
        %v1170 = vld [vmem:[#allocation3 + $0x60] sm:$0xff]
        %v1171 = vld [vmem:[#allocation3 + $0x68] sm:$0xff]
        %v1172 = vld [vmem:[#allocation3 + $0x70] sm:$0xff]
        %v1173 = vld [vmem:[#allocation3 + $0x78] sm:$0xff]
        %v1174 = vadd.f32 %v1158, %v822
        %v1175 = vadd.f32 %v1159, %v823
        %v1176 = vadd.f32 %v1160, %v824
        %v1177 = vadd.f32 %v1161, %v825
        %v1178 = vadd.f32 %v1162, %v826
        %v1179 = vadd.f32 %v1163, %v827
        %v1180 = vadd.f32 %v1164, %v828
        %v1181 = vadd.f32 %v1165, %v829
        %v1182 = vadd.f32 %v1166, %v830
        %v1183 = vadd.f32 %v1167, %v831
        %v1184 = vadd.f32 %v1168, %v832
        %v1185 = vadd.f32 %v1169, %v833
        %v1186 = vadd.f32 %v1170, %v834
        %v1187 = vadd.f32 %v1171, %v835
        %v1188 = vadd.f32 %v1172, %v836
        %v1189 = vadd.f32 %v1173, %v837
        %1190 = vst [vmem:[#allocation3] sm:$0xff] %v1174
        %1191 = vst [vmem:[#allocation3 + $0x8] sm:$0xff] %v1175
        %1192 = vst [vmem:[#allocation3 + $0x10] sm:$0xff] %v1176
        %1193 = vst [vmem:[#allocation3 + $0x18] sm:$0xff] %v1177
        %1194 = vst [vmem:[#allocation3 + $0x20] sm:$0xff] %v1178
        %1195 = vst [vmem:[#allocation3 + $0x28] sm:$0xff] %v1179
        %1196 = vst [vmem:[#allocation3 + $0x30] sm:$0xff] %v1180
        %1197 = vst [vmem:[#allocation3 + $0x38] sm:$0xff] %v1181
        %1198 = vst [vmem:[#allocation3 + $0x40] sm:$0xff] %v1182
        %1199 = vst [vmem:[#allocation3 + $0x48] sm:$0xff] %v1183
        %1200 = vst [vmem:[#allocation3 + $0x50] sm:$0xff] %v1184
        %1201 = vst [vmem:[#allocation3 + $0x58] sm:$0xff] %v1185
        %1202 = vst [vmem:[#allocation3 + $0x60] sm:$0xff] %v1186
        %1203 = vst [vmem:[#allocation3 + $0x68] sm:$0xff] %v1187
        %1204 = vst [vmem:[#allocation3 + $0x70] sm:$0xff] %v1188
        %1205 = vst [vmem:[#allocation3 + $0x78] sm:$0xff] %v1189
        %v1206 = vmax.f32 %v774, 1e-24
        %v1207 = vmax.f32 %v775, 1e-24
        %v1208 = vmax.f32 %v776, 1e-24
        %v1209 = vmax.f32 %v777, 1e-24
        %v1210 = vmax.f32 %v778, 1e-24
        %v1211 = vmax.f32 %v779, 1e-24
        %v1212 = vmax.f32 %v780, 1e-24
        %v1213 = vmax.f32 %v781, 1e-24
        %v1214 = vmax.f32 %v782, 1e-24
        %v1215 = vmax.f32 %v783, 1e-24
        %v1216 = vmax.f32 %v784, 1e-24
        %v1217 = vmax.f32 %v785, 1e-24
        %v1218 = vmax.f32 %v786, 1e-24
        %v1219 = vmax.f32 %v787, 1e-24
        %v1220 = vmax.f32 %v788, 1e-24
        %v1221 = vmax.f32 %v789, 1e-24
        %v1222 = vmax.f32 %v822, 1e-24
        %v1223 = vmax.f32 %v823, 1e-24
        %v1224 = vmax.f32 %v824, 1e-24
        %v1225 = vmax.f32 %v825, 1e-24
        %v1226 = vmax.f32 %v826, 1e-24
        %v1227 = vmax.f32 %v827, 1e-24
        %v1228 = vmax.f32 %v828, 1e-24
        %v1229 = vmax.f32 %v829, 1e-24
        %v1230 = vmax.f32 %v830, 1e-24
        %v1231 = vmax.f32 %v831, 1e-24
        %v1232 = vmax.f32 %v832, 1e-24
        %v1233 = vmax.f32 %v833, 1e-24
        %v1234 = vmax.f32 %v834, 1e-24
        %v1235 = vmax.f32 %v835, 1e-24
        %v1236 = vmax.f32 %v836, 1e-24
        %v1237 = vmax.f32 %v837, 1e-24
        %v1238 = vld [vmem:[#allocation4] sm:$0xff]
        %v1239 = vld [vmem:[#allocation4 + $0x8] sm:$0xff]
        %v1240 = vld [vmem:[#allocation4 + $0x10] sm:$0xff]
        %v1241 = vld [vmem:[#allocation4 + $0x18] sm:$0xff]
        %v1242 = vld [vmem:[#allocation4 + $0x20] sm:$0xff]
        %v1243 = vld [vmem:[#allocation4 + $0x28] sm:$0xff]
        %v1244 = vld [vmem:[#allocation4 + $0x30] sm:$0xff]
        %v1245 = vld [vmem:[#allocation4 + $0x38] sm:$0xff]
        %v1246 = vld [vmem:[#allocation4 + $0x40] sm:$0xff]
        %v1247 = vld [vmem:[#allocation4 + $0x48] sm:$0xff]
        %v1248 = vld [vmem:[#allocation4 + $0x50] sm:$0xff]
        %v1249 = vld [vmem:[#allocation4 + $0x58] sm:$0xff]
        %v1250 = vld [vmem:[#allocation4 + $0x60] sm:$0xff]
        %v1251 = vld [vmem:[#allocation4 + $0x68] sm:$0xff]
        %v1252 = vld [vmem:[#allocation4 + $0x70] sm:$0xff]
        %v1253 = vld [vmem:[#allocation4 + $0x78] sm:$0xff]
        %v1254 = vrcp.pop %v1222
        %v1255 = vmul.f32 %v1222, %v1254
        %v1256 = vsub.f32 1.0, %v1255
        %v1257 = vmul.f32 %v1254, %v1256
        %v1258 = vadd.f32 %v1254, %v1257
        %vm1259 = vweird.f32 %v1222
        %vm1260 = vweird.f32 %v1254
        %vm1261 = vmor %vm1259, %vm1260
        %v1262 = vsel %vm1261, %v1254, %v1258
        %v1263 = vand.u32 2147483647, %v1222
        %vm1264 = vcmp.eq.f32.partialorder %v1263, 8.507059e+37
        %v1265 = vand.u32 %v1222, 2147483648
        %v1266 = vor.u32 1.1754944e-38, %v1265
        %v1267 = vsel %vm1264, %v1266, %v1262
        %v1268 = vmul.f32 %v1206, %v1267
        %v1269 = vrcp.pop %v1223
        %v1270 = vmul.f32 %v1223, %v1269
        %v1271 = vsub.f32 1.0, %v1270
        %v1272 = vmul.f32 %v1269, %v1271
        %v1273 = vadd.f32 %v1269, %v1272
        %vm1274 = vweird.f32 %v1223
        %vm1275 = vweird.f32 %v1269
        %vm1276 = vmor %vm1274, %vm1275
        %v1277 = vsel %vm1276, %v1269, %v1273
        %v1278 = vand.u32 2147483647, %v1223
        %vm1279 = vcmp.eq.f32.partialorder %v1278, 8.507059e+37
        %v1280 = vand.u32 %v1223, 2147483648
        %v1281 = vor.u32 1.1754944e-38, %v1280
        %v1282 = vsel %vm1279, %v1281, %v1277
        %v1283 = vmul.f32 %v1207, %v1282
        %v1284 = vrcp.pop %v1224
        %v1285 = vmul.f32 %v1224, %v1284
        %v1286 = vsub.f32 1.0, %v1285
        %v1287 = vmul.f32 %v1284, %v1286
        %v1288 = vadd.f32 %v1284, %v1287
        %vm1289 = vweird.f32 %v1224
        %vm1290 = vweird.f32 %v1284
        %vm1291 = vmor %vm1289, %vm1290
        %v1292 = vsel %vm1291, %v1284, %v1288
        %v1293 = vand.u32 2147483647, %v1224
        %vm1294 = vcmp.eq.f32.partialorder %v1293, 8.507059e+37
        %v1295 = vand.u32 %v1224, 2147483648
        %v1296 = vor.u32 1.1754944e-38, %v1295
        %v1297 = vsel %vm1294, %v1296, %v1292
        %v1298 = vmul.f32 %v1208, %v1297
        %v1299 = vrcp.pop %v1225
        %v1300 = vmul.f32 %v1225, %v1299
        %v1301 = vsub.f32 1.0, %v1300
        %v1302 = vmul.f32 %v1299, %v1301
        %v1303 = vadd.f32 %v1299, %v1302
        %vm1304 = vweird.f32 %v1225
        %vm1305 = vweird.f32 %v1299
        %vm1306 = vmor %vm1304, %vm1305
        %v1307 = vsel %vm1306, %v1299, %v1303
        %v1308 = vand.u32 2147483647, %v1225
        %vm1309 = vcmp.eq.f32.partialorder %v1308, 8.507059e+37
        %v1310 = vand.u32 %v1225, 2147483648
        %v1311 = vor.u32 1.1754944e-38, %v1310
        %v1312 = vsel %vm1309, %v1311, %v1307
        %v1313 = vmul.f32 %v1209, %v1312
        %v1314 = vrcp.pop %v1226
        %v1315 = vmul.f32 %v1226, %v1314
        %v1316 = vsub.f32 1.0, %v1315
        %v1317 = vmul.f32 %v1314, %v1316
        %v1318 = vadd.f32 %v1314, %v1317
        %vm1319 = vweird.f32 %v1226
        %vm1320 = vweird.f32 %v1314
        %vm1321 = vmor %vm1319, %vm1320
        %v1322 = vsel %vm1321, %v1314, %v1318
        %v1323 = vand.u32 2147483647, %v1226
        %vm1324 = vcmp.eq.f32.partialorder %v1323, 8.507059e+37
        %v1325 = vand.u32 %v1226, 2147483648
        %v1326 = vor.u32 1.1754944e-38, %v1325
        %v1327 = vsel %vm1324, %v1326, %v1322
        %v1328 = vmul.f32 %v1210, %v1327
        %v1329 = vrcp.pop %v1227
        %v1330 = vmul.f32 %v1227, %v1329
        %v1331 = vsub.f32 1.0, %v1330
        %v1332 = vmul.f32 %v1329, %v1331
        %v1333 = vadd.f32 %v1329, %v1332
        %vm1334 = vweird.f32 %v1227
        %vm1335 = vweird.f32 %v1329
        %vm1336 = vmor %vm1334, %vm1335
        %v1337 = vsel %vm1336, %v1329, %v1333
        %v1338 = vand.u32 2147483647, %v1227
        %vm1339 = vcmp.eq.f32.partialorder %v1338, 8.507059e+37
        %v1340 = vand.u32 %v1227, 2147483648
        %v1341 = vor.u32 1.1754944e-38, %v1340
        %v1342 = vsel %vm1339, %v1341, %v1337
        %v1343 = vmul.f32 %v1211, %v1342
        %v1344 = vrcp.pop %v1228
        %v1345 = vmul.f32 %v1228, %v1344
        %v1346 = vsub.f32 1.0, %v1345
        %v1347 = vmul.f32 %v1344, %v1346
        %v1348 = vadd.f32 %v1344, %v1347
        %vm1349 = vweird.f32 %v1228
        %vm1350 = vweird.f32 %v1344
        %vm1351 = vmor %vm1349, %vm1350
        %v1352 = vsel %vm1351, %v1344, %v1348
        %v1353 = vand.u32 2147483647, %v1228
        %vm1354 = vcmp.eq.f32.partialorder %v1353, 8.507059e+37
        %v1355 = vand.u32 %v1228, 2147483648
        %v1356 = vor.u32 1.1754944e-38, %v1355
        %v1357 = vsel %vm1354, %v1356, %v1352
        %v1358 = vmul.f32 %v1212, %v1357
        %v1359 = vrcp.pop %v1229
        %v1360 = vmul.f32 %v1229, %v1359
        %v1361 = vsub.f32 1.0, %v1360
        %v1362 = vmul.f32 %v1359, %v1361
        %v1363 = vadd.f32 %v1359, %v1362
        %vm1364 = vweird.f32 %v1229
        %vm1365 = vweird.f32 %v1359
        %vm1366 = vmor %vm1364, %vm1365
        %v1367 = vsel %vm1366, %v1359, %v1363
        %v1368 = vand.u32 2147483647, %v1229
        %vm1369 = vcmp.eq.f32.partialorder %v1368, 8.507059e+37
        %v1370 = vand.u32 %v1229, 2147483648
        %v1371 = vor.u32 1.1754944e-38, %v1370
        %v1372 = vsel %vm1369, %v1371, %v1367
        %v1373 = vmul.f32 %v1213, %v1372
        %v1374 = vrcp.pop %v1230
        %v1375 = vmul.f32 %v1230, %v1374
        %v1376 = vsub.f32 1.0, %v1375
        %v1377 = vmul.f32 %v1374, %v1376
        %v1378 = vadd.f32 %v1374, %v1377
        %vm1379 = vweird.f32 %v1230
        %vm1380 = vweird.f32 %v1374
        %vm1381 = vmor %vm1379, %vm1380
        %v1382 = vsel %vm1381, %v1374, %v1378
        %v1383 = vand.u32 2147483647, %v1230
        %vm1384 = vcmp.eq.f32.partialorder %v1383, 8.507059e+37
        %v1385 = vand.u32 %v1230, 2147483648
        %v1386 = vor.u32 1.1754944e-38, %v1385
        %v1387 = vsel %vm1384, %v1386, %v1382
        %v1388 = vmul.f32 %v1214, %v1387
        %v1389 = vrcp.pop %v1231
        %v1390 = vmul.f32 %v1231, %v1389
        %v1391 = vsub.f32 1.0, %v1390
        %v1392 = vmul.f32 %v1389, %v1391
        %v1393 = vadd.f32 %v1389, %v1392
        %vm1394 = vweird.f32 %v1231
        %vm1395 = vweird.f32 %v1389
        %vm1396 = vmor %vm1394, %vm1395
        %v1397 = vsel %vm1396, %v1389, %v1393
        %v1398 = vand.u32 2147483647, %v1231
        %vm1399 = vcmp.eq.f32.partialorder %v1398, 8.507059e+37
        %v1400 = vand.u32 %v1231, 2147483648
        %v1401 = vor.u32 1.1754944e-38, %v1400
        %v1402 = vsel %vm1399, %v1401, %v1397
        %v1403 = vmul.f32 %v1215, %v1402
        %v1404 = vrcp.pop %v1232
        %v1405 = vmul.f32 %v1232, %v1404
        %v1406 = vsub.f32 1.0, %v1405
        %v1407 = vmul.f32 %v1404, %v1406
        %v1408 = vadd.f32 %v1404, %v1407
        %vm1409 = vweird.f32 %v1232
        %vm1410 = vweird.f32 %v1404
        %vm1411 = vmor %vm1409, %vm1410
        %v1412 = vsel %vm1411, %v1404, %v1408
        %v1413 = vand.u32 2147483647, %v1232
        %vm1414 = vcmp.eq.f32.partialorder %v1413, 8.507059e+37
        %v1415 = vand.u32 %v1232, 2147483648
        %v1416 = vor.u32 1.1754944e-38, %v1415
        %v1417 = vsel %vm1414, %v1416, %v1412
        %v1418 = vmul.f32 %v1216, %v1417
        %v1419 = vrcp.pop %v1233
        %v1420 = vmul.f32 %v1233, %v1419
        %v1421 = vsub.f32 1.0, %v1420
        %v1422 = vmul.f32 %v1419, %v1421
        %v1423 = vadd.f32 %v1419, %v1422
        %vm1424 = vweird.f32 %v1233
        %vm1425 = vweird.f32 %v1419
        %vm1426 = vmor %vm1424, %vm1425
        %v1427 = vsel %vm1426, %v1419, %v1423
        %v1428 = vand.u32 2147483647, %v1233
        %vm1429 = vcmp.eq.f32.partialorder %v1428, 8.507059e+37
        %v1430 = vand.u32 %v1233, 2147483648
        %v1431 = vor.u32 1.1754944e-38, %v1430
        %v1432 = vsel %vm1429, %v1431, %v1427
        %v1433 = vmul.f32 %v1217, %v1432
        %v1434 = vrcp.pop %v1234
        %v1435 = vmul.f32 %v1234, %v1434
        %v1436 = vsub.f32 1.0, %v1435
        %v1437 = vmul.f32 %v1434, %v1436
        %v1438 = vadd.f32 %v1434, %v1437
        %vm1439 = vweird.f32 %v1234
        %vm1440 = vweird.f32 %v1434
        %vm1441 = vmor %vm1439, %vm1440
        %v1442 = vsel %vm1441, %v1434, %v1438
        %v1443 = vand.u32 2147483647, %v1234
        %vm1444 = vcmp.eq.f32.partialorder %v1443, 8.507059e+37
        %v1445 = vand.u32 %v1234, 2147483648
        %v1446 = vor.u32 1.1754944e-38, %v1445
        %v1447 = vsel %vm1444, %v1446, %v1442
        %v1448 = vmul.f32 %v1218, %v1447
        %v1449 = vrcp.pop %v1235
        %v1450 = vmul.f32 %v1235, %v1449
        %v1451 = vsub.f32 1.0, %v1450
        %v1452 = vmul.f32 %v1449, %v1451
        %v1453 = vadd.f32 %v1449, %v1452
        %vm1454 = vweird.f32 %v1235
        %vm1455 = vweird.f32 %v1449
        %vm1456 = vmor %vm1454, %vm1455
        %v1457 = vsel %vm1456, %v1449, %v1453
        %v1458 = vand.u32 2147483647, %v1235
        %vm1459 = vcmp.eq.f32.partialorder %v1458, 8.507059e+37
        %v1460 = vand.u32 %v1235, 2147483648
        %v1461 = vor.u32 1.1754944e-38, %v1460
        %v1462 = vsel %vm1459, %v1461, %v1457
        %v1463 = vmul.f32 %v1219, %v1462
        %v1464 = vrcp.pop %v1236
        %v1465 = vmul.f32 %v1236, %v1464
        %v1466 = vsub.f32 1.0, %v1465
        %v1467 = vmul.f32 %v1464, %v1466
        %v1468 = vadd.f32 %v1464, %v1467
        %vm1469 = vweird.f32 %v1236
        %vm1470 = vweird.f32 %v1464
        %vm1471 = vmor %vm1469, %vm1470
        %v1472 = vsel %vm1471, %v1464, %v1468
        %v1473 = vand.u32 2147483647, %v1236
        %vm1474 = vcmp.eq.f32.partialorder %v1473, 8.507059e+37
        %v1475 = vand.u32 %v1236, 2147483648
        %v1476 = vor.u32 1.1754944e-38, %v1475
        %v1477 = vsel %vm1474, %v1476, %v1472
        %v1478 = vmul.f32 %v1220, %v1477
        %v1479 = vrcp.pop %v1237
        %v1480 = vmul.f32 %v1237, %v1479
        %v1481 = vsub.f32 1.0, %v1480
        %v1482 = vmul.f32 %v1479, %v1481
        %v1483 = vadd.f32 %v1479, %v1482
        %vm1484 = vweird.f32 %v1237
        %vm1485 = vweird.f32 %v1479
        %vm1486 = vmor %vm1484, %vm1485
        %v1487 = vsel %vm1486, %v1479, %v1483
        %v1488 = vand.u32 2147483647, %v1237
        %vm1489 = vcmp.eq.f32.partialorder %v1488, 8.507059e+37
        %v1490 = vand.u32 %v1237, 2147483648
        %v1491 = vor.u32 1.1754944e-38, %v1490
        %v1492 = vsel %vm1489, %v1491, %v1487
        %v1493 = vmul.f32 %v1221, %v1492
        %v1494 = vlog2.pop %v1268
        %v1495 = vmul.f32 %v1494, 0.6931472
        %v1496 = vlog2.pop %v1283
        %v1497 = vmul.f32 %v1496, 0.6931472
        %v1498 = vlog2.pop %v1298
        %v1499 = vmul.f32 %v1498, 0.6931472
        %v1500 = vlog2.pop %v1313
        %v1501 = vmul.f32 %v1500, 0.6931472
        %v1502 = vlog2.pop %v1328
        %v1503 = vmul.f32 %v1502, 0.6931472
        %v1504 = vlog2.pop %v1343
        %v1505 = vmul.f32 %v1504, 0.6931472
        %v1506 = vlog2.pop %v1358
        %v1507 = vmul.f32 %v1506, 0.6931472
        %v1508 = vlog2.pop %v1373
        %v1509 = vmul.f32 %v1508, 0.6931472
        %v1510 = vlog2.pop %v1388
        %v1511 = vmul.f32 %v1510, 0.6931472
        %v1512 = vlog2.pop %v1403
        %v1513 = vmul.f32 %v1512, 0.6931472
        %v1514 = vlog2.pop %v1418
        %v1515 = vmul.f32 %v1514, 0.6931472
        %v1516 = vlog2.pop %v1433
        %v1517 = vmul.f32 %v1516, 0.6931472
        %v1518 = vlog2.pop %v1448
        %v1519 = vmul.f32 %v1518, 0.6931472
        %v1520 = vlog2.pop %v1463
        %v1521 = vmul.f32 %v1520, 0.6931472
        %v1522 = vlog2.pop %v1478
        %v1523 = vmul.f32 %v1522, 0.6931472
        %v1524 = vlog2.pop %v1493
        %v1525 = vmul.f32 %v1524, 0.6931472
        %v1526 = vand.u32 2147483647, %v1495
        %v1527 = vand.u32 2147483647, %v1497
        %v1528 = vand.u32 2147483647, %v1499
        %v1529 = vand.u32 2147483647, %v1501
        %v1530 = vand.u32 2147483647, %v1503
        %v1531 = vand.u32 2147483647, %v1505
        %v1532 = vand.u32 2147483647, %v1507
        %v1533 = vand.u32 2147483647, %v1509
        %v1534 = vand.u32 2147483647, %v1511
        %v1535 = vand.u32 2147483647, %v1513
        %v1536 = vand.u32 2147483647, %v1515
        %v1537 = vand.u32 2147483647, %v1517
        %v1538 = vand.u32 2147483647, %v1519
        %v1539 = vand.u32 2147483647, %v1521
        %v1540 = vand.u32 2147483647, %v1523
        %v1541 = vand.u32 2147483647, %v1525
        %v1542 = vmul.f32 %v1526, 0.5
        %v1543 = vmul.f32 %v1527, 0.5
        %v1544 = vmul.f32 %v1528, 0.5
        %v1545 = vmul.f32 %v1529, 0.5
        %v1546 = vmul.f32 %v1530, 0.5
        %v1547 = vmul.f32 %v1531, 0.5
        %v1548 = vmul.f32 %v1532, 0.5
        %v1549 = vmul.f32 %v1533, 0.5
        %v1550 = vmul.f32 %v1534, 0.5
        %v1551 = vmul.f32 %v1535, 0.5
        %v1552 = vmul.f32 %v1536, 0.5
        %v1553 = vmul.f32 %v1537, 0.5
        %v1554 = vmul.f32 %v1538, 0.5
        %v1555 = vmul.f32 %v1539, 0.5
        %v1556 = vmul.f32 %v1540, 0.5
        %v1557 = vmul.f32 %v1541, 0.5
        %v1558 = vadd.f32 %v1238, %v1542
        %v1559 = vadd.f32 %v1239, %v1543
        %v1560 = vadd.f32 %v1240, %v1544
        %v1561 = vadd.f32 %v1241, %v1545
        %v1562 = vadd.f32 %v1242, %v1546
        %v1563 = vadd.f32 %v1243, %v1547
        %v1564 = vadd.f32 %v1244, %v1548
        %v1565 = vadd.f32 %v1245, %v1549
        %v1566 = vadd.f32 %v1246, %v1550
        %v1567 = vadd.f32 %v1247, %v1551
        %v1568 = vadd.f32 %v1248, %v1552
        %v1569 = vadd.f32 %v1249, %v1553
        %v1570 = vadd.f32 %v1250, %v1554
        %v1571 = vadd.f32 %v1251, %v1555
        %v1572 = vadd.f32 %v1252, %v1556
        %v1573 = vadd.f32 %v1253, %v1557
        %1574 = vst [vmem:[#allocation4] sm:$0xff] %v1558
        %1575 = vst [vmem:[#allocation4 + $0x8] sm:$0xff] %v1559
        %1576 = vst [vmem:[#allocation4 + $0x10] sm:$0xff] %v1560
        %1577 = vst [vmem:[#allocation4 + $0x18] sm:$0xff] %v1561
        %1578 = vst [vmem:[#allocation4 + $0x20] sm:$0xff] %v1562
        %1579 = vst [vmem:[#allocation4 + $0x28] sm:$0xff] %v1563
        %1580 = vst [vmem:[#allocation4 + $0x30] sm:$0xff] %v1564
        %1581 = vst [vmem:[#allocation4 + $0x38] sm:$0xff] %v1565
        %1582 = vst [vmem:[#allocation4 + $0x40] sm:$0xff] %v1566
        %1583 = vst [vmem:[#allocation4 + $0x48] sm:$0xff] %v1567
        %1584 = vst [vmem:[#allocation4 + $0x50] sm:$0xff] %v1568
        %1585 = vst [vmem:[#allocation4 + $0x58] sm:$0xff] %v1569
        %1586 = vst [vmem:[#allocation4 + $0x60] sm:$0xff] %v1570
        %1587 = vst [vmem:[#allocation4 + $0x68] sm:$0xff] %v1571
        %1588 = vst [vmem:[#allocation4 + $0x70] sm:$0xff] %v1572
        %1589 = vst [vmem:[#allocation4 + $0x78] sm:$0xff] %v1573
        // Predicated region
        $region71: #{multi_resolution_stft_loss.5} parent=61 // pred_check
          %p1590 = pneg %p400
        $region72: #{multi_resolution_stft_loss.5} parent=61 // pred_check_branch
          %1592 = sbr.rel (%p1590) target = $region74
        $region73: #{multi_resolution_stft_loss.5} parent=61 // pred_region
          %v1593 = vld [vmem:[#allocation2] sm:$0xff]
          %v1594 = vld [vmem:[#allocation2 + $0x8] sm:$0xff]
          %v1595 = vld [vmem:[#allocation2 + $0x10] sm:$0xff]
          %v1596 = vld [vmem:[#allocation2 + $0x18] sm:$0xff]
          %v1597 = vld [vmem:[#allocation2 + $0x20] sm:$0xff]
          %v1598 = vld [vmem:[#allocation2 + $0x28] sm:$0xff]
          %v1599 = vld [vmem:[#allocation2 + $0x30] sm:$0xff]
          %v1600 = vld [vmem:[#allocation2 + $0x38] sm:$0xff]
          %v1601 = vld [vmem:[#allocation2 + $0x40] sm:$0xff]
          %v1602 = vld [vmem:[#allocation2 + $0x48] sm:$0xff]
          %v1603 = vld [vmem:[#allocation2 + $0x50] sm:$0xff]
          %v1604 = vld [vmem:[#allocation2 + $0x58] sm:$0xff]
          %v1605 = vld [vmem:[#allocation2 + $0x60] sm:$0xff]
          %v1606 = vld [vmem:[#allocation2 + $0x68] sm:$0xff]
          %v1607 = vld [vmem:[#allocation2 + $0x70] sm:$0xff]
          %v1608 = vld [vmem:[#allocation2 + $0x78] sm:$0xff]
          %1609 = vst [vmem:[%s389] sm:$0xff] %v1593
          %1610 = vst [vmem:[%s389 + $0x8] sm:$0xff] %v1594
          %1611 = vst [vmem:[%s389 + $0x10] sm:$0xff] %v1595
          %1612 = vst [vmem:[%s389 + $0x18] sm:$0xff] %v1596
          %1613 = vst [vmem:[%s389 + $0x20] sm:$0xff] %v1597
          %1614 = vst [vmem:[%s389 + $0x28] sm:$0xff] %v1598
          %1615 = vst [vmem:[%s389 + $0x30] sm:$0xff] %v1599
          %1616 = vst [vmem:[%s389 + $0x38] sm:$0xff] %v1600
          %1617 = vst [vmem:[%s389 + $0x40] sm:$0xff] %v1601
          %1618 = vst [vmem:[%s389 + $0x48] sm:$0xff] %v1602
          %1619 = vst [vmem:[%s389 + $0x50] sm:$0xff] %v1603
          %1620 = vst [vmem:[%s389 + $0x58] sm:$0xff] %v1604
          %1621 = vst [vmem:[%s389 + $0x60] sm:$0xff] %v1605
          %1622 = vst [vmem:[%s389 + $0x68] sm:$0xff] %v1606
          %1623 = vst [vmem:[%s389 + $0x70] sm:$0xff] %v1607
          %1624 = vst [vmem:[%s389 + $0x78] sm:$0xff] %v1608
          %v1625 = vld [vmem:[#allocation3] sm:$0xff]
          %v1626 = vld [vmem:[#allocation3 + $0x8] sm:$0xff]
          %v1627 = vld [vmem:[#allocation3 + $0x10] sm:$0xff]
          %v1628 = vld [vmem:[#allocation3 + $0x18] sm:$0xff]
          %v1629 = vld [vmem:[#allocation3 + $0x20] sm:$0xff]
          %v1630 = vld [vmem:[#allocation3 + $0x28] sm:$0xff]
          %v1631 = vld [vmem:[#allocation3 + $0x30] sm:$0xff]
          %v1632 = vld [vmem:[#allocation3 + $0x38] sm:$0xff]
          %v1633 = vld [vmem:[#allocation3 + $0x40] sm:$0xff]
          %v1634 = vld [vmem:[#allocation3 + $0x48] sm:$0xff]
          %v1635 = vld [vmem:[#allocation3 + $0x50] sm:$0xff]
          %v1636 = vld [vmem:[#allocation3 + $0x58] sm:$0xff]
          %v1637 = vld [vmem:[#allocation3 + $0x60] sm:$0xff]
          %v1638 = vld [vmem:[#allocation3 + $0x68] sm:$0xff]
          %v1639 = vld [vmem:[#allocation3 + $0x70] sm:$0xff]
          %v1640 = vld [vmem:[#allocation3 + $0x78] sm:$0xff]
          %1641 = vst [vmem:[%s394] sm:$0xff] %v1625
          %1642 = vst [vmem:[%s394 + $0x8] sm:$0xff] %v1626
          %1643 = vst [vmem:[%s394 + $0x10] sm:$0xff] %v1627
          %1644 = vst [vmem:[%s394 + $0x18] sm:$0xff] %v1628
          %1645 = vst [vmem:[%s394 + $0x20] sm:$0xff] %v1629
          %1646 = vst [vmem:[%s394 + $0x28] sm:$0xff] %v1630
          %1647 = vst [vmem:[%s394 + $0x30] sm:$0xff] %v1631
          %1648 = vst [vmem:[%s394 + $0x38] sm:$0xff] %v1632
          %1649 = vst [vmem:[%s394 + $0x40] sm:$0xff] %v1633
          %1650 = vst [vmem:[%s394 + $0x48] sm:$0xff] %v1634
          %1651 = vst [vmem:[%s394 + $0x50] sm:$0xff] %v1635
          %1652 = vst [vmem:[%s394 + $0x58] sm:$0xff] %v1636
          %1653 = vst [vmem:[%s394 + $0x60] sm:$0xff] %v1637
          %1654 = vst [vmem:[%s394 + $0x68] sm:$0xff] %v1638
          %1655 = vst [vmem:[%s394 + $0x70] sm:$0xff] %v1639
          %1656 = vst [vmem:[%s394 + $0x78] sm:$0xff] %v1640
          %v1657 = vld [vmem:[#allocation4] sm:$0xff]
          %v1658 = vld [vmem:[#allocation4 + $0x8] sm:$0xff]
          %v1659 = vld [vmem:[#allocation4 + $0x10] sm:$0xff]
          %v1660 = vld [vmem:[#allocation4 + $0x18] sm:$0xff]
          %v1661 = vld [vmem:[#allocation4 + $0x20] sm:$0xff]
          %v1662 = vld [vmem:[#allocation4 + $0x28] sm:$0xff]
          %v1663 = vld [vmem:[#allocation4 + $0x30] sm:$0xff]
          %v1664 = vld [vmem:[#allocation4 + $0x38] sm:$0xff]
          %v1665 = vld [vmem:[#allocation4 + $0x40] sm:$0xff]
          %v1666 = vld [vmem:[#allocation4 + $0x48] sm:$0xff]
          %v1667 = vld [vmem:[#allocation4 + $0x50] sm:$0xff]
          %v1668 = vld [vmem:[#allocation4 + $0x58] sm:$0xff]
          %v1669 = vld [vmem:[#allocation4 + $0x60] sm:$0xff]
          %v1670 = vld [vmem:[#allocation4 + $0x68] sm:$0xff]
          %v1671 = vld [vmem:[#allocation4 + $0x70] sm:$0xff]
          %v1672 = vld [vmem:[#allocation4 + $0x78] sm:$0xff]
          %1673 = vst [vmem:[%s399] sm:$0xff] %v1657
          %1674 = vst [vmem:[%s399 + $0x8] sm:$0xff] %v1658
          %1675 = vst [vmem:[%s399 + $0x10] sm:$0xff] %v1659
          %1676 = vst [vmem:[%s399 + $0x18] sm:$0xff] %v1660
          %1677 = vst [vmem:[%s399 + $0x20] sm:$0xff] %v1661
          %1678 = vst [vmem:[%s399 + $0x28] sm:$0xff] %v1662
          %1679 = vst [vmem:[%s399 + $0x30] sm:$0xff] %v1663
          %1680 = vst [vmem:[%s399 + $0x38] sm:$0xff] %v1664
          %1681 = vst [vmem:[%s399 + $0x40] sm:$0xff] %v1665
          %1682 = vst [vmem:[%s399 + $0x48] sm:$0xff] %v1666
          %1683 = vst [vmem:[%s399 + $0x50] sm:$0xff] %v1667
          %1684 = vst [vmem:[%s399 + $0x58] sm:$0xff] %v1668
          %1685 = vst [vmem:[%s399 + $0x60] sm:$0xff] %v1669
          %1686 = vst [vmem:[%s399 + $0x68] sm:$0xff] %v1670
          %1687 = vst [vmem:[%s399 + $0x70] sm:$0xff] %v1671
          %1688 = vst [vmem:[%s399 + $0x78] sm:$0xff] %v1672
        $region74: #{multi_resolution_stft_loss.5} parent=61 // pred_fallthru
          _
        %p1689 = scmp.lt.s32.totalorder %s20, 1
        %s1690 = scalar_select %p1689, %s20, 1
        %s1691 = smul.addr %s1690, 16
        %s1692 = smul.addr %s1691, 8
        %s1693 = scalar_lea.vmem %s2, %s1692
        %p1694 = scmp.lt.s32.totalorder %s20, 1
        %s1695 = scalar_select %p1694, %s20, 1
        %s1696 = smul.addr %s1695, 16
        %s1697 = smul.addr %s1696, 8
        %s1698 = scalar_lea.vmem %s3, %s1697
        %p1699 = scmp.lt.s32.totalorder %s20, 1
        %s1700 = scalar_select %p1699, %s20, 1
        %s1701 = smul.addr %s1700, 16
        %s1702 = smul.addr %s1701, 8
        %s1703 = scalar_lea.vmem %s4, %s1702
        // Predicated region
        $region75: #{multi_resolution_stft_loss.5} parent=61 // pred_check
          %p1704 = pneg %p95
        $region76: #{multi_resolution_stft_loss.5} parent=61 // pred_check_branch
          %1706 = sbr.rel (%p1704) target = $region78
        $region77: #{multi_resolution_stft_loss.5} parent=61 // pred_region
          _
        $region78: #{multi_resolution_stft_loss.5} parent=61 // pred_fallthru
          _
        // Predicated region
        $region79: #{multi_resolution_stft_loss.5} parent=61 // pred_check
          %p1707 = pneg %p121
        $region80: #{multi_resolution_stft_loss.5} parent=61 // pred_check_branch
          %1709 = sbr.rel (%p1707) target = $region82
        $region81: #{multi_resolution_stft_loss.5} parent=61 // pred_region
          _
        $region82: #{multi_resolution_stft_loss.5} parent=61 // pred_fallthru
          _
        // Predicated region
        $region83: #{multi_resolution_stft_loss.5} parent=61 // pred_check
          %p1710 = pneg %p147
        $region84: #{multi_resolution_stft_loss.5} parent=61 // pred_check_branch
          %1712 = sbr.rel (%p1710) target = $region86
        $region85: #{multi_resolution_stft_loss.5} parent=61 // pred_region
          _
        $region86: #{multi_resolution_stft_loss.5} parent=61 // pred_fallthru
          _
      $region62: #{multi_resolution_stft_loss.5} parent=5 // pred_fallthru
        _
      %p1713 = scmp.le.s32.totalorder 2, %s11
      // Predicated region
      $region87: #{multi_resolution_stft_loss.5} parent=5 // pred_check
        %p1714 = pneg %p1713
      $region88: #{multi_resolution_stft_loss.5} parent=5 // pred_check_branch
        %1716 = sbr.rel (%p1714) target = $region90
      $region89: #{multi_resolution_stft_loss.5} parent=5 // pred_region
        %s1717 = ssub.s32 %s11, 2
        // Predicated region
        $region91: #{multi_resolution_stft_loss.5} parent=89 // pred_check
          %p1718 = pneg %p101
        $region92: #{multi_resolution_stft_loss.5} parent=89 // pred_check_branch
          %1720 = sbr.rel (%p1718) target = $region94
        $region93: #{multi_resolution_stft_loss.5} parent=89 // pred_region
          %p1721 = scmp.lt.s32.totalorder %s22, 1
          %s1722 = scalar_select %p1721, %s22, 1
          %s1723 = smul.addr %s1722, 16
          %s1724 = smul.addr %s1723, 8
          %s1725 = scalar_lea.vmem %s2, %s1724
        $region94: #{multi_resolution_stft_loss.5} parent=89 // pred_fallthru
          _
        // Predicated region
        $region95: #{multi_resolution_stft_loss.5} parent=89 // pred_check
          %p1726 = pneg %p127
        $region96: #{multi_resolution_stft_loss.5} parent=89 // pred_check_branch
          %1728 = sbr.rel (%p1726) target = $region98
        $region97: #{multi_resolution_stft_loss.5} parent=89 // pred_region
          %p1729 = scmp.lt.s32.totalorder %s22, 1
          %s1730 = scalar_select %p1729, %s22, 1
          %s1731 = smul.addr %s1730, 16
          %s1732 = smul.addr %s1731, 8
          %s1733 = scalar_lea.vmem %s3, %s1732
        $region98: #{multi_resolution_stft_loss.5} parent=89 // pred_fallthru
          _
        // Predicated region
        $region99: #{multi_resolution_stft_loss.5} parent=89 // pred_check
          %p1734 = pneg %p153
        $region100: #{multi_resolution_stft_loss.5} parent=89 // pred_check_branch
          %1736 = sbr.rel (%p1734) target = $region102
        $region101: #{multi_resolution_stft_loss.5} parent=89 // pred_region
          %p1737 = scmp.lt.s32.totalorder %s22, 1
          %s1738 = scalar_select %p1737, %s22, 1
          %s1739 = smul.addr %s1738, 16
          %s1740 = smul.addr %s1739, 8
          %s1741 = scalar_lea.vmem %s4, %s1740
        $region102: #{multi_resolution_stft_loss.5} parent=89 // pred_fallthru
          _
      $region90: #{multi_resolution_stft_loss.5} parent=5 // pred_fallthru
        _
    $region6: #{multi_resolution_stft_loss.5} parent=1 // loop_footer
      %s15 = sadd.s32 1, %s11
    $region7: #{multi_resolution_stft_loss.5} parent=1 // loop_footer_branch
      %10 = sbr.rel target = $region3
    $region8: #{multi_resolution_stft_loss.5} parent=1 // loop_exit
      _

</llo_original>
